<compile_context>
chip_gen: v7x
topology: tpu7x:2x2x1
jax: 0.10.0
libtpu: 0.0.40
codegen_flags: <defaults>
</compile_context>

<pallas_src>
import jax
import jax.numpy as jnp
from jax.experimental import pallas as pl
from jax.experimental.pallas import tpu as pltpu

# ----------------------------- small ViT config -----------------------------
BATCH = 2
IN_CH = 3
IMG = 16
PATCH = 8
GRID = IMG // PATCH              # 2
NUM_PATCHES = GRID * GRID        # 4
SEQ = NUM_PATCHES + 1            # 5 (CLS + patches)
WIDTH = 32
HEADS = 4
HEAD_DIM = WIDTH // HEADS        # 8
LAYERS = 2
OUT_DIM = 16
LN_EPS = 1e-5
PATCH_DIM = IN_CH * PATCH * PATCH            # 192
SEQ_PAD = ((SEQ + 7) // 8) * 8               # 8  (sublane-tile aligned per-batch stride)
TOKENS_PAD = BATCH * SEQ_PAD                 # 16


# ------------------------------ the fused kernel ------------------------------
def _clip_fused_kernel(
    patches_ref, w_patch_ref, tok_add_ref, mask_ref,
    lnpre_g_ref, lnpre_b_ref,
    ln1_g_ref, ln1_b_ref, wqkv_ref, bqkv_ref, wo_ref, bo_ref,
    ln2_g_ref, ln2_b_ref, wfc_ref, bfc_ref, wpr_ref, bpr_ref,
    lnpost_g_ref, lnpost_b_ref, proj_ref,
    out_ref,
):
    f32 = jnp.float32

    def ln(v, g, b):
        mu = jnp.mean(v, axis=-1, keepdims=True)
        var = jnp.mean((v - mu) ** 2, axis=-1, keepdims=True)
        return (v - mu) * jax.lax.rsqrt(var + LN_EPS) * g + b

    # ---- patch embedding (one full-batch aligned matmul) + CLS/positional add ----
    # patches_ref is already laid out in the padded token layout (CLS/pad rows = 0),
    # and tok_add_ref carries class_emb + positional embedding in the same layout.
    x = jnp.dot(patches_ref[...], w_patch_ref[...], preferred_element_type=f32)
    x = x + tok_add_ref[...]                                    # (TOKENS_PAD, W)

    # ---- ln_pre over all tokens (batch folded into the matmul M dimension) ----
    # NOTE: pad rows are all-zero here; they accumulate LN-bias/MLP garbage through
    # the layers but are never attended to (key mask) and never read for the output.
    x = ln(x, lnpre_g_ref[...], lnpre_b_ref[...])

    # Block-diagonal + pad-key additive mask (precomputed host-side, tiny constant).
    mask = mask_ref[...]                                        # (TOKENS_PAD, TOKENS_PAD)

    # ---- transformer blocks (statically unrolled; weights indexed on leading axis) ----
    for l in range(LAYERS):
        # --- multi-head self attention: ONE fused QKV matmul for all heads ---
        xn = ln(x, ln1_g_ref[l], ln1_b_ref[l])
        qkv = jnp.dot(xn, wqkv_ref[l], preferred_element_type=f32) + bqkv_ref[l]   # (T, 3W)
        head_outs = []
        for h in range(HEADS):
            d0 = h * HEAD_DIM
            q = qkv[:, d0:d0 + HEAD_DIM]                        # q-scale folded host-side
            k = qkv[:, WIDTH + d0:WIDTH + d0 + HEAD_DIM]
            v = qkv[:, 2 * WIDTH + d0:2 * WIDTH + d0 + HEAD_DIM]
            s = jnp.dot(q, k.T, preferred_element_type=f32) + mask       # (T, T)
            s = s - jnp.max(s, axis=-1, keepdims=True)
            p = jnp.exp(s)
            p = p * pl.reciprocal(jnp.sum(p, axis=-1, keepdims=True), approx=True)
            head_outs.append(jnp.dot(p, v, preferred_element_type=f32))  # (T, D)
        attn = jnp.concatenate(head_outs, axis=-1)              # (T, W), lane concat
        # ONE full output projection instead of 4 per-head ones.
        x = x + jnp.dot(attn, wo_ref[l], preferred_element_type=f32) + bo_ref[l]

        # --- MLP with QuickGELU ---
        xn = ln(x, ln2_g_ref[l], ln2_b_ref[l])
        hdn = jnp.dot(xn, wfc_ref[l], preferred_element_type=f32) + bfc_ref[l]
        hdn = hdn * jax.nn.sigmoid(1.702 * hdn)                 # QuickGELU
        x = x + jnp.dot(hdn, wpr_ref[l], preferred_element_type=f32) + bpr_ref[l]

    # ---- ln_post + projection on CLS tokens (static slices of the register value) ----
    cls_tok = jnp.concatenate(
        [x[b * SEQ_PAD:b * SEQ_PAD + 1, :] for b in range(BATCH)], axis=0)   # (B, W)
    cls_tok = ln(cls_tok, lnpost_g_ref[...], lnpost_b_ref[...])
    out_ref[...] = jnp.dot(cls_tok, proj_ref[...], preferred_element_type=f32)


# ------------------------------ pallas wrapper --------------------------------
def clip_featurizer_forward(x, p):
    """x: (B, C, H, W) float32 NCHW  ->  (B, OUT_DIM) float32"""
    assert x.shape == (BATCH, IN_CH, IMG, IMG)
    # Patch extraction == conv1 with stride=kernel=PATCH, no bias (layout glue only).
    xp = x.reshape(BATCH, IN_CH, GRID, PATCH, GRID, PATCH)
    patches = xp.transpose(0, 2, 4, 1, 3, 5).reshape(BATCH, NUM_PATCHES, PATCH_DIM)
    # Lay patches out in the padded token layout: per batch, row 0 = CLS slot (zero),
    # rows 1..NUM_PATCHES = patches, remaining rows = pad (zero).
    patches_padded = jnp.zeros((BATCH, SEQ_PAD, PATCH_DIM), jnp.float32)
    patches_padded = patches_padded.at[:, 1:1 + NUM_PATCHES, :].set(patches)
    patches_padded = patches_padded.reshape(TOKENS_PAD, PATCH_DIM)

    w_patch = p['conv1_w'].reshape(WIDTH, PATCH_DIM).T           # (K, W)

    # Additive token term: class embedding + positional embedding in padded layout.
    tok_add = jnp.zeros((BATCH, SEQ_PAD, WIDTH), jnp.float32)
    tok_add = tok_add.at[:, 0, :].set(
        jnp.broadcast_to(p['class_emb'].reshape(1, WIDTH) + p['pos_emb'][0:1], (BATCH, WIDTH)))
    tok_add = tok_add.at[:, 1:SEQ, :].set(
        jnp.broadcast_to(p['pos_emb'][1:SEQ][None], (BATCH, NUM_PATCHES, WIDTH)))
    tok_add = tok_add.reshape(TOKENS_PAD, WIDTH)

    # Block-diagonal (per batch element) + pad-key additive attention mask.
    row = jnp.arange(TOKENS_PAD)[:, None]
    col = jnp.arange(TOKENS_PAD)[None, :]
    attn_mask = jnp.where(
        (row // SEQ_PAD == col // SEQ_PAD) & (col % SEQ_PAD < SEQ), 0.0, -1e9
    ).astype(jnp.float32)

    # Host-side weight prep: transpose to (in, out), fold 1/sqrt(D) into the Q third
    # of the fused QKV weight/bias, and stack along a leading layer axis.
    scale = HEAD_DIM ** -0.5
    ln1g, ln1b, ln2g, ln2b = [], [], [], []
    wqkv, bqkv, wo, bo, wfc, bfc, wpr, bpr = [], [], [], [], [], [], [], []
    for blk in p['blocks']:
        wqkv_t = blk['wqkv'].T                                   # (W, 3W); [Q | K | V]
        bq = blk['bqkv'].reshape(1, 3 * WIDTH)
        wqkv.append(jnp.concatenate([wqkv_t[:, :WIDTH] * scale, wqkv_t[:, WIDTH:]], axis=1))
        bqkv.append(jnp.concatenate([bq[:, :WIDTH] * scale, bq[:, WIDTH:]], axis=1))
        wo.append(blk['wo'].T)                                   # (W, W)
        bo.append(blk['bo'])
        ln1g.append(blk['ln1_g']); ln1b.append(blk['ln1_b'])
        ln2g.append(blk['ln2_g']); ln2b.append(blk['ln2_b'])
        wfc.append(blk['wfc'].T); bfc.append(blk['bfc'])
        wpr.append(blk['wpr'].T); bpr.append(blk['bpr'])

    args = (
        patches_padded, w_patch, tok_add, attn_mask,
        p['ln_pre_g'], p['ln_pre_b'],
        jnp.stack(ln1g), jnp.stack(ln1b),
        jnp.stack(wqkv), jnp.stack(bqkv),
        jnp.stack(wo), jnp.stack(bo),
        jnp.stack(ln2g), jnp.stack(ln2b),
        jnp.stack(wfc), jnp.stack(bfc),
        jnp.stack(wpr), jnp.stack(bpr),
        p['ln_post_g'], p['ln_post_b'], p['proj'],
    )

    return pl.pallas_call(
        _clip_fused_kernel,
        out_shape=jax.ShapeDtypeStruct((BATCH, OUT_DIM), jnp.float32),
        compiler_params=pltpu.CompilerParams(vmem_limit_bytes=32 * 1024 * 1024),
    )(*args)


# ------------------------------ params / glue --------------------------------
def init_params(key):
    scale = WIDTH ** -0.5
    keys = jax.random.split(key, 4 + LAYERS)
    p = {
        'conv1_w': 0.02 * jax.random.normal(keys[0], (WIDTH, IN_CH, PATCH, PATCH), jnp.float32),
        'class_emb': scale * jax.random.normal(keys[1], (WIDTH,), jnp.float32),
        'pos_emb': scale * jax.random.normal(keys[2], (SEQ, WIDTH), jnp.float32),
        'ln_pre_g': jnp.ones((1, WIDTH), jnp.float32),
        'ln_pre_b': jnp.zeros((1, WIDTH), jnp.float32),
        'ln_post_g': jnp.ones((1, WIDTH), jnp.float32),
        'ln_post_b': jnp.zeros((1, WIDTH), jnp.float32),
        'proj': scale * jax.random.normal(keys[3], (WIDTH, OUT_DIM), jnp.float32),
        'blocks': [],
    }
    for l in range(LAYERS):
        k = jax.random.split(keys[4 + l], 4)
        p['blocks'].append(dict(
            ln1_g=jnp.ones((1, WIDTH), jnp.float32),
            ln1_b=jnp.zeros((1, WIDTH), jnp.float32),
            # PyTorch convention: (out_features, in_features)
            wqkv=0.5 * scale * jax.random.normal(k[0], (3 * WIDTH, WIDTH), jnp.float32),
            bqkv=jnp.zeros((1, 3 * WIDTH), jnp.float32),
            wo=0.5 * scale * jax.random.normal(k[1], (WIDTH, WIDTH), jnp.float32),
            bo=jnp.zeros((1, WIDTH), jnp.float32),
            ln2_g=jnp.ones((1, WIDTH), jnp.float32),
            ln2_b=jnp.zeros((1, WIDTH), jnp.float32),
            wfc=0.5 * scale * jax.random.normal(k[2], (4 * WIDTH, WIDTH), jnp.float32),
            bfc=jnp.zeros((1, 4 * WIDTH), jnp.float32),
            wpr=0.5 * ((2 * WIDTH) ** -0.5) * jax.random.normal(k[3], (WIDTH, 4 * WIDTH), jnp.float32),
            bpr=jnp.zeros((1, WIDTH), jnp.float32),
        ))
    return p


# ---------------------------- pure-JAX reference -----------------------------
def reference_forward(x, p):
    B = x.shape[0]
    xp = x.reshape(B, IN_CH, GRID, PATCH, GRID, PATCH)
    xp = xp.transpose(0, 2, 4, 1, 3, 5).reshape(B, NUM_PATCHES, -1)
    emb = jnp.einsum('bpk,wk->bpw', xp, p['conv1_w'].reshape(WIDTH, -1))
    cls = jnp.broadcast_to(p['class_emb'][None, None, :], (B, 1, WIDTH))
    t = jnp.concatenate([cls, emb], axis=1) + p['pos_emb'][None]

    def ln(v, g, b):
        mu = v.mean(-1, keepdims=True)
        var = ((v - mu) ** 2).mean(-1, keepdims=True)
        return (v - mu) / jnp.sqrt(var + LN_EPS) * g.reshape(-1) + b.reshape(-1)

    t = ln(t, p['ln_pre_g'], p['ln_pre_b'])
    for blk in p['blocks']:
        xn = ln(t, blk['ln1_g'], blk['ln1_b'])
        qkv = xn @ blk['wqkv'].T + blk['bqkv'].reshape(-1)
        q, k, v = jnp.split(qkv, 3, axis=-1)
        q = q.reshape(B, SEQ, HEADS, HEAD_DIM)
        k = k.reshape(B, SEQ, HEADS, HEAD_DIM)
        v = v.reshape(B, SEQ, HEADS, HEAD_DIM)
        s = jnp.einsum('bqhd,bkhd->bhqk', q, k) / (HEAD_DIM ** 0.5)
        a = jax.nn.softmax(s, axis=-1)
        o = jnp.einsum('bhqk,bkhd->bqhd', a, v).reshape(B, SEQ, WIDTH)
        t = t + o @ blk['wo'].T + blk['bo'].reshape(-1)
        xn = ln(t, blk['ln2_g'], blk['ln2_b'])
        hdn = xn @ blk['wfc'].T + blk['bfc'].reshape(-1)
        hdn = hdn * jax.nn.sigmoid(1.702 * hdn)
        t = t + hdn @ blk['wpr'].T + blk['bpr'].reshape(-1)
    cls_tok = ln(t[:, 0, :], p['ln_post_g'], p['ln_post_b'])
    return cls_tok @ p['proj']


# ----------------------------------- main ------------------------------------
if __name__ == "__main__":
    key = jax.random.PRNGKey(0)
    kx, kp = jax.random.split(key)
    x = jax.random.normal(kx, (BATCH, IN_CH, IMG, IMG), jnp.float32)
    params = init_params(kp)

    fwd = jax.jit(clip_featurizer_forward)
    y = jax.block_until_ready(fwd(x, params))

    y_ref = reference_forward(x, params)
    assert y.shape == (BATCH, OUT_DIM)
    max_err = float(jnp.max(jnp.abs(y - y_ref)))
    assert jnp.allclose(y, y_ref, atol=2e-3, rtol=2e-3), max_err
    print("KERNEL_OK")
</pallas_src>

<mosaic_0001>
module attributes {stable_mosaic.version = 11 : i64} {
  func.func @_clip_fused_kernel(%arg0: memref<16x192xf32, #tpu.memory_space<vmem>>, %arg1: memref<192x32xf32, #tpu.memory_space<vmem>>, %arg2: memref<16x32xf32, #tpu.memory_space<vmem>>, %arg3: memref<16x16xf32, #tpu.memory_space<vmem>>, %arg4: memref<1x32xf32, #tpu.memory_space<vmem>>, %arg5: memref<1x32xf32, #tpu.memory_space<vmem>>, %arg6: memref<2x1x32xf32, #tpu.memory_space<vmem>>, %arg7: memref<2x1x32xf32, #tpu.memory_space<vmem>>, %arg8: memref<2x32x96xf32, #tpu.memory_space<vmem>>, %arg9: memref<2x1x96xf32, #tpu.memory_space<vmem>>, %arg10: memref<2x32x32xf32, #tpu.memory_space<vmem>>, %arg11: memref<2x1x32xf32, #tpu.memory_space<vmem>>, %arg12: memref<2x1x32xf32, #tpu.memory_space<vmem>>, %arg13: memref<2x1x32xf32, #tpu.memory_space<vmem>>, %arg14: memref<2x32x128xf32, #tpu.memory_space<vmem>>, %arg15: memref<2x1x128xf32, #tpu.memory_space<vmem>>, %arg16: memref<2x128x32xf32, #tpu.memory_space<vmem>>, %arg17: memref<2x1x32xf32, #tpu.memory_space<vmem>>, %arg18: memref<1x32xf32, #tpu.memory_space<vmem>>, %arg19: memref<1x32xf32, #tpu.memory_space<vmem>>, %arg20: memref<32x16xf32, #tpu.memory_space<vmem>>, %arg21: memref<2x16xf32, #tpu.memory_space<vmem>>) attributes {dimension_semantics = [], scalar_prefetch = 0 : i64, scratch_operands = 0 : i64, tpu.core_type = #tpu.core_type<tc>} {
    %c0 = arith.constant 0 : index
    %c0_0 = arith.constant 0 : index
    %0 = vector.load %arg0[%c0, %c0_0] : memref<16x192xf32, #tpu.memory_space<vmem>>, vector<16x192xf32>
    %c0_1 = arith.constant 0 : index
    %c0_2 = arith.constant 0 : index
    %1 = vector.load %arg1[%c0_1, %c0_2] : memref<192x32xf32, #tpu.memory_space<vmem>>, vector<192x32xf32>
    %cst = arith.constant dense<0.000000e+00> : vector<16x32xf32>
    %2 = tpu.matmul %0, %1, %cst {dimension_numbers = #tpu.dot_dimension_numbers<[1], [0], [0], [1], [0, 0, 1, 1], [], []>} : vector<16x192xf32>, vector<192x32xf32>, vector<16x32xf32> -> vector<16x32xf32>
    %c0_3 = arith.constant 0 : index
    %c0_4 = arith.constant 0 : index
    %3 = vector.load %arg2[%c0_3, %c0_4] : memref<16x32xf32, #tpu.memory_space<vmem>>, vector<16x32xf32>
    %4 = arith.addf %2, %3 : vector<16x32xf32>
    %c0_5 = arith.constant 0 : index
    %c0_6 = arith.constant 0 : index
    %5 = vector.load %arg4[%c0_5, %c0_6] : memref<1x32xf32, #tpu.memory_space<vmem>>, vector<1x32xf32>
    %c0_7 = arith.constant 0 : index
    %c0_8 = arith.constant 0 : index
    %6 = vector.load %arg5[%c0_7, %c0_8] : memref<1x32xf32, #tpu.memory_space<vmem>>, vector<1x32xf32>
    %cst_9 = arith.constant dense<0.000000e+00> : vector<16xf32>
    %7 = vector.multi_reduction <add>, %4, %cst_9 [1] : vector<16x32xf32> to vector<16xf32>
    %8 = vector.shape_cast %7 : vector<16xf32> to vector<16x1xf32>
    %cst_10 = arith.constant 3.200000e+01 : f32
    %9 = vector.broadcast %cst_10 : f32 to vector<16x1xf32>
    %10 = arith.divf %8, %9 : vector<16x1xf32>
    %11 = vector.broadcast %10 : vector<16x1xf32> to vector<16x32xf32>
    %12 = arith.subf %4, %11 : vector<16x32xf32>
    %13 = arith.mulf %12, %12 : vector<16x32xf32>
    %cst_11 = arith.constant dense<0.000000e+00> : vector<16xf32>
    %14 = vector.multi_reduction <add>, %13, %cst_11 [1] : vector<16x32xf32> to vector<16xf32>
    %15 = vector.shape_cast %14 : vector<16xf32> to vector<16x1xf32>
    %cst_12 = arith.constant 3.200000e+01 : f32
    %16 = vector.broadcast %cst_12 : f32 to vector<16x1xf32>
    %17 = arith.divf %15, %16 : vector<16x1xf32>
    %18 = vector.broadcast %10 : vector<16x1xf32> to vector<16x32xf32>
    %19 = arith.subf %4, %18 : vector<16x32xf32>
    %cst_13 = arith.constant 9.99999974E-6 : f32
    %20 = vector.broadcast %cst_13 : f32 to vector<16x1xf32>
    %21 = arith.addf %17, %20 : vector<16x1xf32>
    %22 = math.rsqrt %21 : vector<16x1xf32>
    %23 = vector.broadcast %22 : vector<16x1xf32> to vector<16x32xf32>
    %24 = arith.mulf %19, %23 : vector<16x32xf32>
    %25 = vector.broadcast %5 : vector<1x32xf32> to vector<16x32xf32>
    %26 = arith.mulf %24, %25 : vector<16x32xf32>
    %27 = vector.broadcast %6 : vector<1x32xf32> to vector<16x32xf32>
    %28 = arith.addf %26, %27 : vector<16x32xf32>
    %c0_14 = arith.constant 0 : index
    %c0_15 = arith.constant 0 : index
    %29 = vector.load %arg3[%c0_14, %c0_15] : memref<16x16xf32, #tpu.memory_space<vmem>>, vector<16x16xf32>
    %c0_16 = arith.constant 0 : index
    %c0_17 = arith.constant 0 : index
    %c0_18 = arith.constant 0 : index
    %30 = vector.load %arg6[%c0_16, %c0_17, %c0_18] : memref<2x1x32xf32, #tpu.memory_space<vmem>>, vector<1x1x32xf32>
    %31 = vector.shape_cast %30 : vector<1x1x32xf32> to vector<1x32xf32>
    %c0_19 = arith.constant 0 : index
    %c0_20 = arith.constant 0 : index
    %c0_21 = arith.constant 0 : index
    %32 = vector.load %arg7[%c0_19, %c0_20, %c0_21] : memref<2x1x32xf32, #tpu.memory_space<vmem>>, vector<1x1x32xf32>
    %33 = vector.shape_cast %32 : vector<1x1x32xf32> to vector<1x32xf32>
    %cst_22 = arith.constant dense<0.000000e+00> : vector<16xf32>
    %34 = vector.multi_reduction <add>, %28, %cst_22 [1] : vector<16x32xf32> to vector<16xf32>
    %35 = vector.shape_cast %34 : vector<16xf32> to vector<16x1xf32>
    %cst_23 = arith.constant 3.200000e+01 : f32
    %36 = vector.broadcast %cst_23 : f32 to vector<16x1xf32>
    %37 = arith.divf %35, %36 : vector<16x1xf32>
    %38 = vector.broadcast %37 : vector<16x1xf32> to vector<16x32xf32>
    %39 = arith.subf %28, %38 : vector<16x32xf32>
    %40 = arith.mulf %39, %39 : vector<16x32xf32>
    %cst_24 = arith.constant dense<0.000000e+00> : vector<16xf32>
    %41 = vector.multi_reduction <add>, %40, %cst_24 [1] : vector<16x32xf32> to vector<16xf32>
    %42 = vector.shape_cast %41 : vector<16xf32> to vector<16x1xf32>
    %cst_25 = arith.constant 3.200000e+01 : f32
    %43 = vector.broadcast %cst_25 : f32 to vector<16x1xf32>
    %44 = arith.divf %42, %43 : vector<16x1xf32>
    %45 = vector.broadcast %37 : vector<16x1xf32> to vector<16x32xf32>
    %46 = arith.subf %28, %45 : vector<16x32xf32>
    %cst_26 = arith.constant 9.99999974E-6 : f32
    %47 = vector.broadcast %cst_26 : f32 to vector<16x1xf32>
    %48 = arith.addf %44, %47 : vector<16x1xf32>
    %49 = math.rsqrt %48 : vector<16x1xf32>
    %50 = vector.broadcast %49 : vector<16x1xf32> to vector<16x32xf32>
    %51 = arith.mulf %46, %50 : vector<16x32xf32>
    %52 = vector.broadcast %31 : vector<1x32xf32> to vector<16x32xf32>
    %53 = arith.mulf %51, %52 : vector<16x32xf32>
    %54 = vector.broadcast %33 : vector<1x32xf32> to vector<16x32xf32>
    %55 = arith.addf %53, %54 : vector<16x32xf32>
    %c0_27 = arith.constant 0 : index
    %c0_28 = arith.constant 0 : index
    %c0_29 = arith.constant 0 : index
    %56 = vector.load %arg8[%c0_27, %c0_28, %c0_29] : memref<2x32x96xf32, #tpu.memory_space<vmem>>, vector<1x32x96xf32>
    %57 = vector.shape_cast %56 : vector<1x32x96xf32> to vector<32x96xf32>
    %cst_30 = arith.constant dense<0.000000e+00> : vector<16x96xf32>
    %58 = tpu.matmul %55, %57, %cst_30 {dimension_numbers = #tpu.dot_dimension_numbers<[1], [0], [0], [1], [0, 0, 1, 1], [], []>} : vector<16x32xf32>, vector<32x96xf32>, vector<16x96xf32> -> vector<16x96xf32>
    %c0_31 = arith.constant 0 : index
    %c0_32 = arith.constant 0 : index
    %c0_33 = arith.constant 0 : index
    %59 = vector.load %arg9[%c0_31, %c0_32, %c0_33] : memref<2x1x96xf32, #tpu.memory_space<vmem>>, vector<1x1x96xf32>
    %60 = vector.shape_cast %59 : vector<1x1x96xf32> to vector<1x96xf32>
    %61 = vector.broadcast %60 : vector<1x96xf32> to vector<16x96xf32>
    %62 = arith.addf %58, %61 : vector<16x96xf32>
    %63 = vector.extract_strided_slice %62 {offsets = [0, 0], sizes = [16, 8], strides = [1, 1]} : vector<16x96xf32> to vector<16x8xf32>
    %64 = vector.extract_strided_slice %62 {offsets = [0, 32], sizes = [16, 8], strides = [1, 1]} : vector<16x96xf32> to vector<16x8xf32>
    %65 = vector.extract_strided_slice %62 {offsets = [0, 64], sizes = [16, 8], strides = [1, 1]} : vector<16x96xf32> to vector<16x8xf32>
    %66 = tpu.transpose %64, [1, 0] : vector<16x8xf32> -> vector<8x16xf32>
    %cst_34 = arith.constant dense<0.000000e+00> : vector<16x16xf32>
    %67 = tpu.matmul %63, %66, %cst_34 {dimension_numbers = #tpu.dot_dimension_numbers<[1], [0], [0], [1], [0, 0, 1, 1], [], []>} : vector<16x8xf32>, vector<8x16xf32>, vector<16x16xf32> -> vector<16x16xf32>
    %68 = arith.addf %67, %29 : vector<16x16xf32>
    %cst_35 = arith.constant dense<0xFF800000> : vector<16xf32>
    %69 = vector.multi_reduction <maximumf>, %68, %cst_35 [1] : vector<16x16xf32> to vector<16xf32>
    %70 = vector.shape_cast %69 : vector<16xf32> to vector<16x1xf32>
    %71 = vector.broadcast %70 : vector<16x1xf32> to vector<16x16xf32>
    %72 = arith.subf %68, %71 : vector<16x16xf32>
    %73 = math.exp %72 : vector<16x16xf32>
    %cst_36 = arith.constant dense<0.000000e+00> : vector<16xf32>
    %74 = vector.multi_reduction <add>, %73, %cst_36 [1] : vector<16x16xf32> to vector<16xf32>
    %75 = vector.shape_cast %74 : vector<16xf32> to vector<16x1xf32>
    %76 = tpu.reciprocal %75 {approx = true} : vector<16x1xf32> -> vector<16x1xf32>
    %77 = vector.broadcast %76 : vector<16x1xf32> to vector<16x16xf32>
    %78 = arith.mulf %73, %77 : vector<16x16xf32>
    %cst_37 = arith.constant dense<0.000000e+00> : vector<16x8xf32>
    %79 = tpu.matmul %78, %65, %cst_37 {dimension_numbers = #tpu.dot_dimension_numbers<[1], [0], [0], [1], [0, 0, 1, 1], [], []>} : vector<16x16xf32>, vector<16x8xf32>, vector<16x8xf32> -> vector<16x8xf32>
    %80 = vector.extract_strided_slice %62 {offsets = [0, 8], sizes = [16, 8], strides = [1, 1]} : vector<16x96xf32> to vector<16x8xf32>
    %81 = vector.extract_strided_slice %62 {offsets = [0, 40], sizes = [16, 8], strides = [1, 1]} : vector<16x96xf32> to vector<16x8xf32>
    %82 = vector.extract_strided_slice %62 {offsets = [0, 72], sizes = [16, 8], strides = [1, 1]} : vector<16x96xf32> to vector<16x8xf32>
    %83 = tpu.transpose %81, [1, 0] : vector<16x8xf32> -> vector<8x16xf32>
    %cst_38 = arith.constant dense<0.000000e+00> : vector<16x16xf32>
    %84 = tpu.matmul %80, %83, %cst_38 {dimension_numbers = #tpu.dot_dimension_numbers<[1], [0], [0], [1], [0, 0, 1, 1], [], []>} : vector<16x8xf32>, vector<8x16xf32>, vector<16x16xf32> -> vector<16x16xf32>
    %85 = arith.addf %84, %29 : vector<16x16xf32>
    %cst_39 = arith.constant dense<0xFF800000> : vector<16xf32>
    %86 = vector.multi_reduction <maximumf>, %85, %cst_39 [1] : vector<16x16xf32> to vector<16xf32>
    %87 = vector.shape_cast %86 : vector<16xf32> to vector<16x1xf32>
    %88 = vector.broadcast %87 : vector<16x1xf32> to vector<16x16xf32>
    %89 = arith.subf %85, %88 : vector<16x16xf32>
    %90 = math.exp %89 : vector<16x16xf32>
    %cst_40 = arith.constant dense<0.000000e+00> : vector<16xf32>
    %91 = vector.multi_reduction <add>, %90, %cst_40 [1] : vector<16x16xf32> to vector<16xf32>
    %92 = vector.shape_cast %91 : vector<16xf32> to vector<16x1xf32>
    %93 = tpu.reciprocal %92 {approx = true} : vector<16x1xf32> -> vector<16x1xf32>
    %94 = vector.broadcast %93 : vector<16x1xf32> to vector<16x16xf32>
    %95 = arith.mulf %90, %94 : vector<16x16xf32>
    %cst_41 = arith.constant dense<0.000000e+00> : vector<16x8xf32>
    %96 = tpu.matmul %95, %82, %cst_41 {dimension_numbers = #tpu.dot_dimension_numbers<[1], [0], [0], [1], [0, 0, 1, 1], [], []>} : vector<16x16xf32>, vector<16x8xf32>, vector<16x8xf32> -> vector<16x8xf32>
    %97 = vector.extract_strided_slice %62 {offsets = [0, 16], sizes = [16, 8], strides = [1, 1]} : vector<16x96xf32> to vector<16x8xf32>
    %98 = vector.extract_strided_slice %62 {offsets = [0, 48], sizes = [16, 8], strides = [1, 1]} : vector<16x96xf32> to vector<16x8xf32>
    %99 = vector.extract_strided_slice %62 {offsets = [0, 80], sizes = [16, 8], strides = [1, 1]} : vector<16x96xf32> to vector<16x8xf32>
    %100 = tpu.transpose %98, [1, 0] : vector<16x8xf32> -> vector<8x16xf32>
    %cst_42 = arith.constant dense<0.000000e+00> : vector<16x16xf32>
    %101 = tpu.matmul %97, %100, %cst_42 {dimension_numbers = #tpu.dot_dimension_numbers<[1], [0], [0], [1], [0, 0, 1, 1], [], []>} : vector<16x8xf32>, vector<8x16xf32>, vector<16x16xf32> -> vector<16x16xf32>
    %102 = arith.addf %101, %29 : vector<16x16xf32>
    %cst_43 = arith.constant dense<0xFF800000> : vector<16xf32>
    %103 = vector.multi_reduction <maximumf>, %102, %cst_43 [1] : vector<16x16xf32> to vector<16xf32>
    %104 = vector.shape_cast %103 : vector<16xf32> to vector<16x1xf32>
    %105 = vector.broadcast %104 : vector<16x1xf32> to vector<16x16xf32>
    %106 = arith.subf %102, %105 : vector<16x16xf32>
    %107 = math.exp %106 : vector<16x16xf32>
    %cst_44 = arith.constant dense<0.000000e+00> : vector<16xf32>
    %108 = vector.multi_reduction <add>, %107, %cst_44 [1] : vector<16x16xf32> to vector<16xf32>
    %109 = vector.shape_cast %108 : vector<16xf32> to vector<16x1xf32>
    %110 = tpu.reciprocal %109 {approx = true} : vector<16x1xf32> -> vector<16x1xf32>
    %111 = vector.broadcast %110 : vector<16x1xf32> to vector<16x16xf32>
    %112 = arith.mulf %107, %111 : vector<16x16xf32>
    %cst_45 = arith.constant dense<0.000000e+00> : vector<16x8xf32>
    %113 = tpu.matmul %112, %99, %cst_45 {dimension_numbers = #tpu.dot_dimension_numbers<[1], [0], [0], [1], [0, 0, 1, 1], [], []>} : vector<16x16xf32>, vector<16x8xf32>, vector<16x8xf32> -> vector<16x8xf32>
    %114 = vector.extract_strided_slice %62 {offsets = [0, 24], sizes = [16, 8], strides = [1, 1]} : vector<16x96xf32> to vector<16x8xf32>
    %115 = vector.extract_strided_slice %62 {offsets = [0, 56], sizes = [16, 8], strides = [1, 1]} : vector<16x96xf32> to vector<16x8xf32>
    %116 = vector.extract_strided_slice %62 {offsets = [0, 88], sizes = [16, 8], strides = [1, 1]} : vector<16x96xf32> to vector<16x8xf32>
    %117 = tpu.transpose %115, [1, 0] : vector<16x8xf32> -> vector<8x16xf32>
    %cst_46 = arith.constant dense<0.000000e+00> : vector<16x16xf32>
    %118 = tpu.matmul %114, %117, %cst_46 {dimension_numbers = #tpu.dot_dimension_numbers<[1], [0], [0], [1], [0, 0, 1, 1], [], []>} : vector<16x8xf32>, vector<8x16xf32>, vector<16x16xf32> -> vector<16x16xf32>
    %119 = arith.addf %118, %29 : vector<16x16xf32>
    %cst_47 = arith.constant dense<0xFF800000> : vector<16xf32>
    %120 = vector.multi_reduction <maximumf>, %119, %cst_47 [1] : vector<16x16xf32> to vector<16xf32>
    %121 = vector.shape_cast %120 : vector<16xf32> to vector<16x1xf32>
    %122 = vector.broadcast %121 : vector<16x1xf32> to vector<16x16xf32>
    %123 = arith.subf %119, %122 : vector<16x16xf32>
    %124 = math.exp %123 : vector<16x16xf32>
    %cst_48 = arith.constant dense<0.000000e+00> : vector<16xf32>
    %125 = vector.multi_reduction <add>, %124, %cst_48 [1] : vector<16x16xf32> to vector<16xf32>
    %126 = vector.shape_cast %125 : vector<16xf32> to vector<16x1xf32>
    %127 = tpu.reciprocal %126 {approx = true} : vector<16x1xf32> -> vector<16x1xf32>
    %128 = vector.broadcast %127 : vector<16x1xf32> to vector<16x16xf32>
    %129 = arith.mulf %124, %128 : vector<16x16xf32>
    %cst_49 = arith.constant dense<0.000000e+00> : vector<16x8xf32>
    %130 = tpu.matmul %129, %116, %cst_49 {dimension_numbers = #tpu.dot_dimension_numbers<[1], [0], [0], [1], [0, 0, 1, 1], [], []>} : vector<16x16xf32>, vector<16x8xf32>, vector<16x8xf32> -> vector<16x8xf32>
    %131 = tpu.concatenate %79, %96, %113, %130 in 1 : vector<16x8xf32>, vector<16x8xf32>, vector<16x8xf32>, vector<16x8xf32> -> vector<16x32xf32>
    %c0_50 = arith.constant 0 : index
    %c0_51 = arith.constant 0 : index
    %c0_52 = arith.constant 0 : index
    %132 = vector.load %arg10[%c0_50, %c0_51, %c0_52] : memref<2x32x32xf32, #tpu.memory_space<vmem>>, vector<1x32x32xf32>
    %133 = vector.shape_cast %132 : vector<1x32x32xf32> to vector<32x32xf32>
    %cst_53 = arith.constant dense<0.000000e+00> : vector<16x32xf32>
    %134 = tpu.matmul %131, %133, %cst_53 {dimension_numbers = #tpu.dot_dimension_numbers<[1], [0], [0], [1], [0, 0, 1, 1], [], []>} : vector<16x32xf32>, vector<32x32xf32>, vector<16x32xf32> -> vector<16x32xf32>
    %135 = arith.addf %28, %134 : vector<16x32xf32>
    %c0_54 = arith.constant 0 : index
    %c0_55 = arith.constant 0 : index
    %c0_56 = arith.constant 0 : index
    %136 = vector.load %arg11[%c0_54, %c0_55, %c0_56] : memref<2x1x32xf32, #tpu.memory_space<vmem>>, vector<1x1x32xf32>
    %137 = vector.shape_cast %136 : vector<1x1x32xf32> to vector<1x32xf32>
    %138 = vector.broadcast %137 : vector<1x32xf32> to vector<16x32xf32>
    %139 = arith.addf %135, %138 : vector<16x32xf32>
    %c0_57 = arith.constant 0 : index
    %c0_58 = arith.constant 0 : index
    %c0_59 = arith.constant 0 : index
    %140 = vector.load %arg12[%c0_57, %c0_58, %c0_59] : memref<2x1x32xf32, #tpu.memory_space<vmem>>, vector<1x1x32xf32>
    %141 = vector.shape_cast %140 : vector<1x1x32xf32> to vector<1x32xf32>
    %c0_60 = arith.constant 0 : index
    %c0_61 = arith.constant 0 : index
    %c0_62 = arith.constant 0 : index
    %142 = vector.load %arg13[%c0_60, %c0_61, %c0_62] : memref<2x1x32xf32, #tpu.memory_space<vmem>>, vector<1x1x32xf32>
    %143 = vector.shape_cast %142 : vector<1x1x32xf32> to vector<1x32xf32>
    %cst_63 = arith.constant dense<0.000000e+00> : vector<16xf32>
    %144 = vector.multi_reduction <add>, %139, %cst_63 [1] : vector<16x32xf32> to vector<16xf32>
    %145 = vector.shape_cast %144 : vector<16xf32> to vector<16x1xf32>
    %cst_64 = arith.constant 3.200000e+01 : f32
    %146 = vector.broadcast %cst_64 : f32 to vector<16x1xf32>
    %147 = arith.divf %145, %146 : vector<16x1xf32>
    %148 = vector.broadcast %147 : vector<16x1xf32> to vector<16x32xf32>
    %149 = arith.subf %139, %148 : vector<16x32xf32>
    %150 = arith.mulf %149, %149 : vector<16x32xf32>
    %cst_65 = arith.constant dense<0.000000e+00> : vector<16xf32>
    %151 = vector.multi_reduction <add>, %150, %cst_65 [1] : vector<16x32xf32> to vector<16xf32>
    %152 = vector.shape_cast %151 : vector<16xf32> to vector<16x1xf32>
    %cst_66 = arith.constant 3.200000e+01 : f32
    %153 = vector.broadcast %cst_66 : f32 to vector<16x1xf32>
    %154 = arith.divf %152, %153 : vector<16x1xf32>
    %155 = vector.broadcast %147 : vector<16x1xf32> to vector<16x32xf32>
    %156 = arith.subf %139, %155 : vector<16x32xf32>
    %cst_67 = arith.constant 9.99999974E-6 : f32
    %157 = vector.broadcast %cst_67 : f32 to vector<16x1xf32>
    %158 = arith.addf %154, %157 : vector<16x1xf32>
    %159 = math.rsqrt %158 : vector<16x1xf32>
    %160 = vector.broadcast %159 : vector<16x1xf32> to vector<16x32xf32>
    %161 = arith.mulf %156, %160 : vector<16x32xf32>
    %162 = vector.broadcast %141 : vector<1x32xf32> to vector<16x32xf32>
    %163 = arith.mulf %161, %162 : vector<16x32xf32>
    %164 = vector.broadcast %143 : vector<1x32xf32> to vector<16x32xf32>
    %165 = arith.addf %163, %164 : vector<16x32xf32>
    %c0_68 = arith.constant 0 : index
    %c0_69 = arith.constant 0 : index
    %c0_70 = arith.constant 0 : index
    %166 = vector.load %arg14[%c0_68, %c0_69, %c0_70] : memref<2x32x128xf32, #tpu.memory_space<vmem>>, vector<1x32x128xf32>
    %167 = vector.shape_cast %166 : vector<1x32x128xf32> to vector<32x128xf32>
    %cst_71 = arith.constant dense<0.000000e+00> : vector<16x128xf32>
    %168 = tpu.matmul %165, %167, %cst_71 {dimension_numbers = #tpu.dot_dimension_numbers<[1], [0], [0], [1], [0, 0, 1, 1], [], []>} : vector<16x32xf32>, vector<32x128xf32>, vector<16x128xf32> -> vector<16x128xf32>
    %c0_72 = arith.constant 0 : index
    %c0_73 = arith.constant 0 : index
    %c0_74 = arith.constant 0 : index
    %169 = vector.load %arg15[%c0_72, %c0_73, %c0_74] : memref<2x1x128xf32, #tpu.memory_space<vmem>>, vector<1x1x128xf32>
    %170 = vector.shape_cast %169 : vector<1x1x128xf32> to vector<1x128xf32>
    %171 = vector.broadcast %170 : vector<1x128xf32> to vector<16x128xf32>
    %172 = arith.addf %168, %171 : vector<16x128xf32>
    %cst_75 = arith.constant 1.702000e+00 : f32
    %173 = vector.broadcast %cst_75 : f32 to vector<16x128xf32>
    %174 = arith.mulf %173, %172 : vector<16x128xf32>
    %175 = arith.negf %174 : vector<16x128xf32>
    %176 = math.exp %175 : vector<16x128xf32>
    %cst_76 = arith.constant 1.000000e+00 : f32
    %177 = vector.broadcast %cst_76 : f32 to vector<16x128xf32>
    %178 = arith.addf %177, %176 : vector<16x128xf32>
    %179 = arith.divf %177, %178 : vector<16x128xf32>
    %180 = arith.mulf %172, %179 : vector<16x128xf32>
    %c0_77 = arith.constant 0 : index
    %c0_78 = arith.constant 0 : index
    %c0_79 = arith.constant 0 : index
    %181 = vector.load %arg16[%c0_77, %c0_78, %c0_79] : memref<2x128x32xf32, #tpu.memory_space<vmem>>, vector<1x128x32xf32>
    %182 = vector.shape_cast %181 : vector<1x128x32xf32> to vector<128x32xf32>
    %cst_80 = arith.constant dense<0.000000e+00> : vector<16x32xf32>
    %183 = tpu.matmul %180, %182, %cst_80 {dimension_numbers = #tpu.dot_dimension_numbers<[1], [0], [0], [1], [0, 0, 1, 1], [], []>} : vector<16x128xf32>, vector<128x32xf32>, vector<16x32xf32> -> vector<16x32xf32>
    %184 = arith.addf %139, %183 : vector<16x32xf32>
    %c0_81 = arith.constant 0 : index
    %c0_82 = arith.constant 0 : index
    %c0_83 = arith.constant 0 : index
    %185 = vector.load %arg17[%c0_81, %c0_82, %c0_83] : memref<2x1x32xf32, #tpu.memory_space<vmem>>, vector<1x1x32xf32>
    %186 = vector.shape_cast %185 : vector<1x1x32xf32> to vector<1x32xf32>
    %187 = vector.broadcast %186 : vector<1x32xf32> to vector<16x32xf32>
    %188 = arith.addf %184, %187 : vector<16x32xf32>
    %c1 = arith.constant 1 : index
    %c0_84 = arith.constant 0 : index
    %c0_85 = arith.constant 0 : index
    %189 = vector.load %arg6[%c1, %c0_84, %c0_85] : memref<2x1x32xf32, #tpu.memory_space<vmem>>, vector<1x1x32xf32>
    %190 = vector.shape_cast %189 : vector<1x1x32xf32> to vector<1x32xf32>
    %c1_86 = arith.constant 1 : index
    %c0_87 = arith.constant 0 : index
    %c0_88 = arith.constant 0 : index
    %191 = vector.load %arg7[%c1_86, %c0_87, %c0_88] : memref<2x1x32xf32, #tpu.memory_space<vmem>>, vector<1x1x32xf32>
    %192 = vector.shape_cast %191 : vector<1x1x32xf32> to vector<1x32xf32>
    %cst_89 = arith.constant dense<0.000000e+00> : vector<16xf32>
    %193 = vector.multi_reduction <add>, %188, %cst_89 [1] : vector<16x32xf32> to vector<16xf32>
    %194 = vector.shape_cast %193 : vector<16xf32> to vector<16x1xf32>
    %cst_90 = arith.constant 3.200000e+01 : f32
    %195 = vector.broadcast %cst_90 : f32 to vector<16x1xf32>
    %196 = arith.divf %194, %195 : vector<16x1xf32>
    %197 = vector.broadcast %196 : vector<16x1xf32> to vector<16x32xf32>
    %198 = arith.subf %188, %197 : vector<16x32xf32>
    %199 = arith.mulf %198, %198 : vector<16x32xf32>
    %cst_91 = arith.constant dense<0.000000e+00> : vector<16xf32>
    %200 = vector.multi_reduction <add>, %199, %cst_91 [1] : vector<16x32xf32> to vector<16xf32>
    %201 = vector.shape_cast %200 : vector<16xf32> to vector<16x1xf32>
    %cst_92 = arith.constant 3.200000e+01 : f32
    %202 = vector.broadcast %cst_92 : f32 to vector<16x1xf32>
    %203 = arith.divf %201, %202 : vector<16x1xf32>
    %204 = vector.broadcast %196 : vector<16x1xf32> to vector<16x32xf32>
    %205 = arith.subf %188, %204 : vector<16x32xf32>
    %cst_93 = arith.constant 9.99999974E-6 : f32
    %206 = vector.broadcast %cst_93 : f32 to vector<16x1xf32>
    %207 = arith.addf %203, %206 : vector<16x1xf32>
    %208 = math.rsqrt %207 : vector<16x1xf32>
    %209 = vector.broadcast %208 : vector<16x1xf32> to vector<16x32xf32>
    %210 = arith.mulf %205, %209 : vector<16x32xf32>
    %211 = vector.broadcast %190 : vector<1x32xf32> to vector<16x32xf32>
    %212 = arith.mulf %210, %211 : vector<16x32xf32>
    %213 = vector.broadcast %192 : vector<1x32xf32> to vector<16x32xf32>
    %214 = arith.addf %212, %213 : vector<16x32xf32>
    %c1_94 = arith.constant 1 : index
    %c0_95 = arith.constant 0 : index
    %c0_96 = arith.constant 0 : index
    %215 = vector.load %arg8[%c1_94, %c0_95, %c0_96] : memref<2x32x96xf32, #tpu.memory_space<vmem>>, vector<1x32x96xf32>
    %216 = vector.shape_cast %215 : vector<1x32x96xf32> to vector<32x96xf32>
    %cst_97 = arith.constant dense<0.000000e+00> : vector<16x96xf32>
    %217 = tpu.matmul %214, %216, %cst_97 {dimension_numbers = #tpu.dot_dimension_numbers<[1], [0], [0], [1], [0, 0, 1, 1], [], []>} : vector<16x32xf32>, vector<32x96xf32>, vector<16x96xf32> -> vector<16x96xf32>
    %c1_98 = arith.constant 1 : index
    %c0_99 = arith.constant 0 : index
    %c0_100 = arith.constant 0 : index
    %218 = vector.load %arg9[%c1_98, %c0_99, %c0_100] : memref<2x1x96xf32, #tpu.memory_space<vmem>>, vector<1x1x96xf32>
    %219 = vector.shape_cast %218 : vector<1x1x96xf32> to vector<1x96xf32>
    %220 = vector.broadcast %219 : vector<1x96xf32> to vector<16x96xf32>
    %221 = arith.addf %217, %220 : vector<16x96xf32>
    %222 = vector.extract_strided_slice %221 {offsets = [0, 0], sizes = [16, 8], strides = [1, 1]} : vector<16x96xf32> to vector<16x8xf32>
    %223 = vector.extract_strided_slice %221 {offsets = [0, 32], sizes = [16, 8], strides = [1, 1]} : vector<16x96xf32> to vector<16x8xf32>
    %224 = vector.extract_strided_slice %221 {offsets = [0, 64], sizes = [16, 8], strides = [1, 1]} : vector<16x96xf32> to vector<16x8xf32>
    %225 = tpu.transpose %223, [1, 0] : vector<16x8xf32> -> vector<8x16xf32>
    %cst_101 = arith.constant dense<0.000000e+00> : vector<16x16xf32>
    %226 = tpu.matmul %222, %225, %cst_101 {dimension_numbers = #tpu.dot_dimension_numbers<[1], [0], [0], [1], [0, 0, 1, 1], [], []>} : vector<16x8xf32>, vector<8x16xf32>, vector<16x16xf32> -> vector<16x16xf32>
    %227 = arith.addf %226, %29 : vector<16x16xf32>
    %cst_102 = arith.constant dense<0xFF800000> : vector<16xf32>
    %228 = vector.multi_reduction <maximumf>, %227, %cst_102 [1] : vector<16x16xf32> to vector<16xf32>
    %229 = vector.shape_cast %228 : vector<16xf32> to vector<16x1xf32>
    %230 = vector.broadcast %229 : vector<16x1xf32> to vector<16x16xf32>
    %231 = arith.subf %227, %230 : vector<16x16xf32>
    %232 = math.exp %231 : vector<16x16xf32>
    %cst_103 = arith.constant dense<0.000000e+00> : vector<16xf32>
    %233 = vector.multi_reduction <add>, %232, %cst_103 [1] : vector<16x16xf32> to vector<16xf32>
    %234 = vector.shape_cast %233 : vector<16xf32> to vector<16x1xf32>
    %235 = tpu.reciprocal %234 {approx = true} : vector<16x1xf32> -> vector<16x1xf32>
    %236 = vector.broadcast %235 : vector<16x1xf32> to vector<16x16xf32>
    %237 = arith.mulf %232, %236 : vector<16x16xf32>
    %cst_104 = arith.constant dense<0.000000e+00> : vector<16x8xf32>
    %238 = tpu.matmul %237, %224, %cst_104 {dimension_numbers = #tpu.dot_dimension_numbers<[1], [0], [0], [1], [0, 0, 1, 1], [], []>} : vector<16x16xf32>, vector<16x8xf32>, vector<16x8xf32> -> vector<16x8xf32>
    %239 = vector.extract_strided_slice %221 {offsets = [0, 8], sizes = [16, 8], strides = [1, 1]} : vector<16x96xf32> to vector<16x8xf32>
    %240 = vector.extract_strided_slice %221 {offsets = [0, 40], sizes = [16, 8], strides = [1, 1]} : vector<16x96xf32> to vector<16x8xf32>
    %241 = vector.extract_strided_slice %221 {offsets = [0, 72], sizes = [16, 8], strides = [1, 1]} : vector<16x96xf32> to vector<16x8xf32>
    %242 = tpu.transpose %240, [1, 0] : vector<16x8xf32> -> vector<8x16xf32>
    %cst_105 = arith.constant dense<0.000000e+00> : vector<16x16xf32>
    %243 = tpu.matmul %239, %242, %cst_105 {dimension_numbers = #tpu.dot_dimension_numbers<[1], [0], [0], [1], [0, 0, 1, 1], [], []>} : vector<16x8xf32>, vector<8x16xf32>, vector<16x16xf32> -> vector<16x16xf32>
    %244 = arith.addf %243, %29 : vector<16x16xf32>
    %cst_106 = arith.constant dense<0xFF800000> : vector<16xf32>
    %245 = vector.multi_reduction <maximumf>, %244, %cst_106 [1] : vector<16x16xf32> to vector<16xf32>
    %246 = vector.shape_cast %245 : vector<16xf32> to vector<16x1xf32>
    %247 = vector.broadcast %246 : vector<16x1xf32> to vector<16x16xf32>
    %248 = arith.subf %244, %247 : vector<16x16xf32>
    %249 = math.exp %248 : vector<16x16xf32>
    %cst_107 = arith.constant dense<0.000000e+00> : vector<16xf32>
    %250 = vector.multi_reduction <add>, %249, %cst_107 [1] : vector<16x16xf32> to vector<16xf32>
    %251 = vector.shape_cast %250 : vector<16xf32> to vector<16x1xf32>
    %252 = tpu.reciprocal %251 {approx = true} : vector<16x1xf32> -> vector<16x1xf32>
    %253 = vector.broadcast %252 : vector<16x1xf32> to vector<16x16xf32>
    %254 = arith.mulf %249, %253 : vector<16x16xf32>
    %cst_108 = arith.constant dense<0.000000e+00> : vector<16x8xf32>
    %255 = tpu.matmul %254, %241, %cst_108 {dimension_numbers = #tpu.dot_dimension_numbers<[1], [0], [0], [1], [0, 0, 1, 1], [], []>} : vector<16x16xf32>, vector<16x8xf32>, vector<16x8xf32> -> vector<16x8xf32>
    %256 = vector.extract_strided_slice %221 {offsets = [0, 16], sizes = [16, 8], strides = [1, 1]} : vector<16x96xf32> to vector<16x8xf32>
    %257 = vector.extract_strided_slice %221 {offsets = [0, 48], sizes = [16, 8], strides = [1, 1]} : vector<16x96xf32> to vector<16x8xf32>
    %258 = vector.extract_strided_slice %221 {offsets = [0, 80], sizes = [16, 8], strides = [1, 1]} : vector<16x96xf32> to vector<16x8xf32>
    %259 = tpu.transpose %257, [1, 0] : vector<16x8xf32> -> vector<8x16xf32>
    %cst_109 = arith.constant dense<0.000000e+00> : vector<16x16xf32>
    %260 = tpu.matmul %256, %259, %cst_109 {dimension_numbers = #tpu.dot_dimension_numbers<[1], [0], [0], [1], [0, 0, 1, 1], [], []>} : vector<16x8xf32>, vector<8x16xf32>, vector<16x16xf32> -> vector<16x16xf32>
    %261 = arith.addf %260, %29 : vector<16x16xf32>
    %cst_110 = arith.constant dense<0xFF800000> : vector<16xf32>
    %262 = vector.multi_reduction <maximumf>, %261, %cst_110 [1] : vector<16x16xf32> to vector<16xf32>
    %263 = vector.shape_cast %262 : vector<16xf32> to vector<16x1xf32>
    %264 = vector.broadcast %263 : vector<16x1xf32> to vector<16x16xf32>
    %265 = arith.subf %261, %264 : vector<16x16xf32>
    %266 = math.exp %265 : vector<16x16xf32>
    %cst_111 = arith.constant dense<0.000000e+00> : vector<16xf32>
    %267 = vector.multi_reduction <add>, %266, %cst_111 [1] : vector<16x16xf32> to vector<16xf32>
    %268 = vector.shape_cast %267 : vector<16xf32> to vector<16x1xf32>
    %269 = tpu.reciprocal %268 {approx = true} : vector<16x1xf32> -> vector<16x1xf32>
    %270 = vector.broadcast %269 : vector<16x1xf32> to vector<16x16xf32>
    %271 = arith.mulf %266, %270 : vector<16x16xf32>
    %cst_112 = arith.constant dense<0.000000e+00> : vector<16x8xf32>
    %272 = tpu.matmul %271, %258, %cst_112 {dimension_numbers = #tpu.dot_dimension_numbers<[1], [0], [0], [1], [0, 0, 1, 1], [], []>} : vector<16x16xf32>, vector<16x8xf32>, vector<16x8xf32> -> vector<16x8xf32>
    %273 = vector.extract_strided_slice %221 {offsets = [0, 24], sizes = [16, 8], strides = [1, 1]} : vector<16x96xf32> to vector<16x8xf32>
    %274 = vector.extract_strided_slice %221 {offsets = [0, 56], sizes = [16, 8], strides = [1, 1]} : vector<16x96xf32> to vector<16x8xf32>
    %275 = vector.extract_strided_slice %221 {offsets = [0, 88], sizes = [16, 8], strides = [1, 1]} : vector<16x96xf32> to vector<16x8xf32>
    %276 = tpu.transpose %274, [1, 0] : vector<16x8xf32> -> vector<8x16xf32>
    %cst_113 = arith.constant dense<0.000000e+00> : vector<16x16xf32>
    %277 = tpu.matmul %273, %276, %cst_113 {dimension_numbers = #tpu.dot_dimension_numbers<[1], [0], [0], [1], [0, 0, 1, 1], [], []>} : vector<16x8xf32>, vector<8x16xf32>, vector<16x16xf32> -> vector<16x16xf32>
    %278 = arith.addf %277, %29 : vector<16x16xf32>
    %cst_114 = arith.constant dense<0xFF800000> : vector<16xf32>
    %279 = vector.multi_reduction <maximumf>, %278, %cst_114 [1] : vector<16x16xf32> to vector<16xf32>
    %280 = vector.shape_cast %279 : vector<16xf32> to vector<16x1xf32>
    %281 = vector.broadcast %280 : vector<16x1xf32> to vector<16x16xf32>
    %282 = arith.subf %278, %281 : vector<16x16xf32>
    %283 = math.exp %282 : vector<16x16xf32>
    %cst_115 = arith.constant dense<0.000000e+00> : vector<16xf32>
    %284 = vector.multi_reduction <add>, %283, %cst_115 [1] : vector<16x16xf32> to vector<16xf32>
    %285 = vector.shape_cast %284 : vector<16xf32> to vector<16x1xf32>
    %286 = tpu.reciprocal %285 {approx = true} : vector<16x1xf32> -> vector<16x1xf32>
    %287 = vector.broadcast %286 : vector<16x1xf32> to vector<16x16xf32>
    %288 = arith.mulf %283, %287 : vector<16x16xf32>
    %cst_116 = arith.constant dense<0.000000e+00> : vector<16x8xf32>
    %289 = tpu.matmul %288, %275, %cst_116 {dimension_numbers = #tpu.dot_dimension_numbers<[1], [0], [0], [1], [0, 0, 1, 1], [], []>} : vector<16x16xf32>, vector<16x8xf32>, vector<16x8xf32> -> vector<16x8xf32>
    %290 = tpu.concatenate %238, %255, %272, %289 in 1 : vector<16x8xf32>, vector<16x8xf32>, vector<16x8xf32>, vector<16x8xf32> -> vector<16x32xf32>
    %c1_117 = arith.constant 1 : index
    %c0_118 = arith.constant 0 : index
    %c0_119 = arith.constant 0 : index
    %291 = vector.load %arg10[%c1_117, %c0_118, %c0_119] : memref<2x32x32xf32, #tpu.memory_space<vmem>>, vector<1x32x32xf32>
    %292 = vector.shape_cast %291 : vector<1x32x32xf32> to vector<32x32xf32>
    %cst_120 = arith.constant dense<0.000000e+00> : vector<16x32xf32>
    %293 = tpu.matmul %290, %292, %cst_120 {dimension_numbers = #tpu.dot_dimension_numbers<[1], [0], [0], [1], [0, 0, 1, 1], [], []>} : vector<16x32xf32>, vector<32x32xf32>, vector<16x32xf32> -> vector<16x32xf32>
    %294 = arith.addf %188, %293 : vector<16x32xf32>
    %c1_121 = arith.constant 1 : index
    %c0_122 = arith.constant 0 : index
    %c0_123 = arith.constant 0 : index
    %295 = vector.load %arg11[%c1_121, %c0_122, %c0_123] : memref<2x1x32xf32, #tpu.memory_space<vmem>>, vector<1x1x32xf32>
    %296 = vector.shape_cast %295 : vector<1x1x32xf32> to vector<1x32xf32>
    %297 = vector.broadcast %296 : vector<1x32xf32> to vector<16x32xf32>
    %298 = arith.addf %294, %297 : vector<16x32xf32>
    %c1_124 = arith.constant 1 : index
    %c0_125 = arith.constant 0 : index
    %c0_126 = arith.constant 0 : index
    %299 = vector.load %arg12[%c1_124, %c0_125, %c0_126] : memref<2x1x32xf32, #tpu.memory_space<vmem>>, vector<1x1x32xf32>
    %300 = vector.shape_cast %299 : vector<1x1x32xf32> to vector<1x32xf32>
    %c1_127 = arith.constant 1 : index
    %c0_128 = arith.constant 0 : index
    %c0_129 = arith.constant 0 : index
    %301 = vector.load %arg13[%c1_127, %c0_128, %c0_129] : memref<2x1x32xf32, #tpu.memory_space<vmem>>, vector<1x1x32xf32>
    %302 = vector.shape_cast %301 : vector<1x1x32xf32> to vector<1x32xf32>
    %cst_130 = arith.constant dense<0.000000e+00> : vector<16xf32>
    %303 = vector.multi_reduction <add>, %298, %cst_130 [1] : vector<16x32xf32> to vector<16xf32>
    %304 = vector.shape_cast %303 : vector<16xf32> to vector<16x1xf32>
    %cst_131 = arith.constant 3.200000e+01 : f32
    %305 = vector.broadcast %cst_131 : f32 to vector<16x1xf32>
    %306 = arith.divf %304, %305 : vector<16x1xf32>
    %307 = vector.broadcast %306 : vector<16x1xf32> to vector<16x32xf32>
    %308 = arith.subf %298, %307 : vector<16x32xf32>
    %309 = arith.mulf %308, %308 : vector<16x32xf32>
    %cst_132 = arith.constant dense<0.000000e+00> : vector<16xf32>
    %310 = vector.multi_reduction <add>, %309, %cst_132 [1] : vector<16x32xf32> to vector<16xf32>
    %311 = vector.shape_cast %310 : vector<16xf32> to vector<16x1xf32>
    %cst_133 = arith.constant 3.200000e+01 : f32
    %312 = vector.broadcast %cst_133 : f32 to vector<16x1xf32>
    %313 = arith.divf %311, %312 : vector<16x1xf32>
    %314 = vector.broadcast %306 : vector<16x1xf32> to vector<16x32xf32>
    %315 = arith.subf %298, %314 : vector<16x32xf32>
    %cst_134 = arith.constant 9.99999974E-6 : f32
    %316 = vector.broadcast %cst_134 : f32 to vector<16x1xf32>
    %317 = arith.addf %313, %316 : vector<16x1xf32>
    %318 = math.rsqrt %317 : vector<16x1xf32>
    %319 = vector.broadcast %318 : vector<16x1xf32> to vector<16x32xf32>
    %320 = arith.mulf %315, %319 : vector<16x32xf32>
    %321 = vector.broadcast %300 : vector<1x32xf32> to vector<16x32xf32>
    %322 = arith.mulf %320, %321 : vector<16x32xf32>
    %323 = vector.broadcast %302 : vector<1x32xf32> to vector<16x32xf32>
    %324 = arith.addf %322, %323 : vector<16x32xf32>
    %c1_135 = arith.constant 1 : index
    %c0_136 = arith.constant 0 : index
    %c0_137 = arith.constant 0 : index
    %325 = vector.load %arg14[%c1_135, %c0_136, %c0_137] : memref<2x32x128xf32, #tpu.memory_space<vmem>>, vector<1x32x128xf32>
    %326 = vector.shape_cast %325 : vector<1x32x128xf32> to vector<32x128xf32>
    %cst_138 = arith.constant dense<0.000000e+00> : vector<16x128xf32>
    %327 = tpu.matmul %324, %326, %cst_138 {dimension_numbers = #tpu.dot_dimension_numbers<[1], [0], [0], [1], [0, 0, 1, 1], [], []>} : vector<16x32xf32>, vector<32x128xf32>, vector<16x128xf32> -> vector<16x128xf32>
    %c1_139 = arith.constant 1 : index
    %c0_140 = arith.constant 0 : index
    %c0_141 = arith.constant 0 : index
    %328 = vector.load %arg15[%c1_139, %c0_140, %c0_141] : memref<2x1x128xf32, #tpu.memory_space<vmem>>, vector<1x1x128xf32>
    %329 = vector.shape_cast %328 : vector<1x1x128xf32> to vector<1x128xf32>
    %330 = vector.broadcast %329 : vector<1x128xf32> to vector<16x128xf32>
    %331 = arith.addf %327, %330 : vector<16x128xf32>
    %cst_142 = arith.constant 1.702000e+00 : f32
    %332 = vector.broadcast %cst_142 : f32 to vector<16x128xf32>
    %333 = arith.mulf %332, %331 : vector<16x128xf32>
    %334 = arith.negf %333 : vector<16x128xf32>
    %335 = math.exp %334 : vector<16x128xf32>
    %cst_143 = arith.constant 1.000000e+00 : f32
    %336 = vector.broadcast %cst_143 : f32 to vector<16x128xf32>
    %337 = arith.addf %336, %335 : vector<16x128xf32>
    %338 = arith.divf %336, %337 : vector<16x128xf32>
    %339 = arith.mulf %331, %338 : vector<16x128xf32>
    %c1_144 = arith.constant 1 : index
    %c0_145 = arith.constant 0 : index
    %c0_146 = arith.constant 0 : index
    %340 = vector.load %arg16[%c1_144, %c0_145, %c0_146] : memref<2x128x32xf32, #tpu.memory_space<vmem>>, vector<1x128x32xf32>
    %341 = vector.shape_cast %340 : vector<1x128x32xf32> to vector<128x32xf32>
    %cst_147 = arith.constant dense<0.000000e+00> : vector<16x32xf32>
    %342 = tpu.matmul %339, %341, %cst_147 {dimension_numbers = #tpu.dot_dimension_numbers<[1], [0], [0], [1], [0, 0, 1, 1], [], []>} : vector<16x128xf32>, vector<128x32xf32>, vector<16x32xf32> -> vector<16x32xf32>
    %343 = arith.addf %298, %342 : vector<16x32xf32>
    %c1_148 = arith.constant 1 : index
    %c0_149 = arith.constant 0 : index
    %c0_150 = arith.constant 0 : index
    %344 = vector.load %arg17[%c1_148, %c0_149, %c0_150] : memref<2x1x32xf32, #tpu.memory_space<vmem>>, vector<1x1x32xf32>
    %345 = vector.shape_cast %344 : vector<1x1x32xf32> to vector<1x32xf32>
    %346 = vector.broadcast %345 : vector<1x32xf32> to vector<16x32xf32>
    %347 = arith.addf %343, %346 : vector<16x32xf32>
    %348 = vector.extract_strided_slice %347 {offsets = [0, 0], sizes = [1, 32], strides = [1, 1]} : vector<16x32xf32> to vector<1x32xf32>
    %349 = vector.extract_strided_slice %347 {offsets = [8, 0], sizes = [1, 32], strides = [1, 1]} : vector<16x32xf32> to vector<1x32xf32>
    %350 = tpu.concatenate %348, %349 in 0 : vector<1x32xf32>, vector<1x32xf32> -> vector<2x32xf32>
    %c0_151 = arith.constant 0 : index
    %c0_152 = arith.constant 0 : index
    %351 = vector.load %arg18[%c0_151, %c0_152] : memref<1x32xf32, #tpu.memory_space<vmem>>, vector<1x32xf32>
    %c0_153 = arith.constant 0 : index
    %c0_154 = arith.constant 0 : index
    %352 = vector.load %arg19[%c0_153, %c0_154] : memref<1x32xf32, #tpu.memory_space<vmem>>, vector<1x32xf32>
    %cst_155 = arith.constant dense<0.000000e+00> : vector<2xf32>
    %353 = vector.multi_reduction <add>, %350, %cst_155 [1] : vector<2x32xf32> to vector<2xf32>
    %354 = vector.shape_cast %353 : vector<2xf32> to vector<2x1xf32>
    %cst_156 = arith.constant 3.200000e+01 : f32
    %355 = vector.broadcast %cst_156 : f32 to vector<2x1xf32>
    %356 = arith.divf %354, %355 : vector<2x1xf32>
    %357 = vector.broadcast %356 : vector<2x1xf32> to vector<2x32xf32>
    %358 = arith.subf %350, %357 : vector<2x32xf32>
    %359 = arith.mulf %358, %358 : vector<2x32xf32>
    %cst_157 = arith.constant dense<0.000000e+00> : vector<2xf32>
    %360 = vector.multi_reduction <add>, %359, %cst_157 [1] : vector<2x32xf32> to vector<2xf32>
    %361 = vector.shape_cast %360 : vector<2xf32> to vector<2x1xf32>
    %cst_158 = arith.constant 3.200000e+01 : f32
    %362 = vector.broadcast %cst_158 : f32 to vector<2x1xf32>
    %363 = arith.divf %361, %362 : vector<2x1xf32>
    %364 = vector.broadcast %356 : vector<2x1xf32> to vector<2x32xf32>
    %365 = arith.subf %350, %364 : vector<2x32xf32>
    %cst_159 = arith.constant 9.99999974E-6 : f32
    %366 = vector.broadcast %cst_159 : f32 to vector<2x1xf32>
    %367 = arith.addf %363, %366 : vector<2x1xf32>
    %368 = math.rsqrt %367 : vector<2x1xf32>
    %369 = vector.broadcast %368 : vector<2x1xf32> to vector<2x32xf32>
    %370 = arith.mulf %365, %369 : vector<2x32xf32>
    %371 = vector.broadcast %351 : vector<1x32xf32> to vector<2x32xf32>
    %372 = arith.mulf %370, %371 : vector<2x32xf32>
    %373 = vector.broadcast %352 : vector<1x32xf32> to vector<2x32xf32>
    %374 = arith.addf %372, %373 : vector<2x32xf32>
    %c0_160 = arith.constant 0 : index
    %c0_161 = arith.constant 0 : index
    %375 = vector.load %arg20[%c0_160, %c0_161] : memref<32x16xf32, #tpu.memory_space<vmem>>, vector<32x16xf32>
    %cst_162 = arith.constant dense<0.000000e+00> : vector<2x16xf32>
    %376 = tpu.matmul %374, %375, %cst_162 {dimension_numbers = #tpu.dot_dimension_numbers<[1], [0], [0], [1], [0, 0, 1, 1], [], []>} : vector<2x32xf32>, vector<32x16xf32>, vector<2x16xf32> -> vector<2x16xf32>
    %c0_163 = arith.constant 0 : index
    %c0_164 = arith.constant 0 : index
    %377 = vector.load %arg21[%c0_163, %c0_164] : memref<2x16xf32, #tpu.memory_space<vmem>>, vector<2x16xf32>
    tpu.vector_store %arg21[%c0_163, %c0_164], %376 {strides = array<i32>} : memref<2x16xf32, #tpu.memory_space<vmem>>, vector<2x16xf32>,
    return
  }
}

</mosaic_0001>

<llo_original>
// kernel: clip_featurizer_forward.1
$region0: #{clip_featurizer_forward.1}
  #allocation0 [shape = 'u32[]', space=smem, size = 0x4, offset = 0x4, fixed_abs, tag = 'smem constant byte address 0x4 - core index']
  #allocation1 [shape = 'u32[144,128]{1,0:T(1,128)}', space=vmem, size = 0x12000, scoped, tag = 'internal scratch']
  %s0 = inlined_call_operand.vmem [shape: f32[16,192], index: 0, kind: input, shape index: {}]
  %s1 = inlined_call_operand.vmem [shape: f32[192,32], index: 1, kind: input, shape index: {}]
  %s2 = inlined_call_operand.vmem [shape: f32[16,32], index: 2, kind: input, shape index: {}]
  %s3 = inlined_call_operand.vmem [shape: f32[16,16], index: 3, kind: input, shape index: {}]
  %s4 = inlined_call_operand.vmem [shape: f32[1,32], index: 4, kind: input, shape index: {}]
  %s5 = inlined_call_operand.vmem [shape: f32[1,32], index: 5, kind: input, shape index: {}]
  %s6 = inlined_call_operand.vmem [shape: f32[2,1,32], index: 6, kind: input, shape index: {}]
  %s7 = inlined_call_operand.vmem [shape: f32[2,1,32], index: 7, kind: input, shape index: {}]
  %s8 = inlined_call_operand.vmem [shape: f32[2,32,96], index: 8, kind: input, shape index: {}]
  %s9 = inlined_call_operand.vmem [shape: f32[2,1,96], index: 9, kind: input, shape index: {}]
  %s10 = inlined_call_operand.vmem [shape: f32[2,32,32], index: 10, kind: input, shape index: {}]
  %s11 = inlined_call_operand.vmem [shape: f32[2,1,32], index: 11, kind: input, shape index: {}]
  %s12 = inlined_call_operand.vmem [shape: f32[2,1,32], index: 12, kind: input, shape index: {}]
  %s13 = inlined_call_operand.vmem [shape: f32[2,1,32], index: 13, kind: input, shape index: {}]
  %s14 = inlined_call_operand.vmem [shape: f32[2,32,128], index: 14, kind: input, shape index: {}]
  %s15 = inlined_call_operand.vmem [shape: f32[2,1,128], index: 15, kind: input, shape index: {}]
  %s16 = inlined_call_operand.vmem [shape: f32[2,128,32], index: 16, kind: input, shape index: {}]
  %s17 = inlined_call_operand.vmem [shape: f32[2,1,32], index: 17, kind: input, shape index: {}]
  %s18 = inlined_call_operand.vmem [shape: f32[1,32], index: 18, kind: input, shape index: {}]
  %s19 = inlined_call_operand.vmem [shape: f32[1,32], index: 19, kind: input, shape index: {}]
  %s20 = inlined_call_operand.vmem [shape: f32[32,16], index: 20, kind: input, shape index: {}]
  %s21 = inlined_call_operand.hbm [shape: f32[2,16], index: 21, kind: output, shape index: {}]
  %s22 = sld [smem:[#allocation0]]
  $region94: #{clip_featurizer_forward.1} parent=0
    _
  %s24 = ssub.s32 1, %s22
  %s25 = scalar_select 0, %s24, %s22
  $region1: #{clip_featurizer_forward.1} parent=0
    #allocation2 [shape = 'u8[1024]{0}', space=vmem, size = 0x400, scoped, tag = 'output window, operand 0, single buffered']
    #allocation3 [shape = 's32[1]{0}', space=sflag, size = 0x4, scoped, tag = 'scoped memory for clip_featurizer_forward.1']
    %26 = vsyncpa [#allocation3], 0
    // Predicated region
    $region2: #{clip_featurizer_forward.1} parent=1 // pred_check
      _
    $region3: #{clip_featurizer_forward.1} parent=1 // pred_check_branch
      %28 = sbr.rel (0) target = $region5
    $region4: #{clip_featurizer_forward.1} parent=1 // pred_region
      _
    $region5: #{clip_featurizer_forward.1} parent=1 // pred_fallthru
      _
    // Predicated region
    $region6: #{clip_featurizer_forward.1} parent=1 // pred_check
      _
    $region7: #{clip_featurizer_forward.1} parent=1 // pred_check_branch
      %30 = sbr.rel (0) target = $region9
    $region8: #{clip_featurizer_forward.1} parent=1 // pred_region
      _
    $region9: #{clip_featurizer_forward.1} parent=1 // pred_fallthru
      _
    // Predicated region
    $region10: #{clip_featurizer_forward.1} parent=1 // pred_check
      _
    $region11: #{clip_featurizer_forward.1} parent=1 // pred_check_branch
      %32 = sbr.rel (0) target = $region13
    $region12: #{clip_featurizer_forward.1} parent=1 // pred_region
      _
    $region13: #{clip_featurizer_forward.1} parent=1 // pred_fallthru
      _
    // Predicated region
    $region14: #{clip_featurizer_forward.1} parent=1 // pred_check
      _
    $region15: #{clip_featurizer_forward.1} parent=1 // pred_check_branch
      %34 = sbr.rel (0) target = $region17
    $region16: #{clip_featurizer_forward.1} parent=1 // pred_region
      _
    $region17: #{clip_featurizer_forward.1} parent=1 // pred_fallthru
      _
    // Predicated region
    $region18: #{clip_featurizer_forward.1} parent=1 // pred_check
      _
    $region19: #{clip_featurizer_forward.1} parent=1 // pred_check_branch
      %36 = sbr.rel (0) target = $region21
    $region20: #{clip_featurizer_forward.1} parent=1 // pred_region
      _
    $region21: #{clip_featurizer_forward.1} parent=1 // pred_fallthru
      _
    // Predicated region
    $region22: #{clip_featurizer_forward.1} parent=1 // pred_check
      _
    $region23: #{clip_featurizer_forward.1} parent=1 // pred_check_branch
      %38 = sbr.rel (0) target = $region25
    $region24: #{clip_featurizer_forward.1} parent=1 // pred_region
      _
    $region25: #{clip_featurizer_forward.1} parent=1 // pred_fallthru
      _
    // Predicated region
    $region26: #{clip_featurizer_forward.1} parent=1 // pred_check
      _
    $region27: #{clip_featurizer_forward.1} parent=1 // pred_check_branch
      %40 = sbr.rel (0) target = $region29
    $region28: #{clip_featurizer_forward.1} parent=1 // pred_region
      _
    $region29: #{clip_featurizer_forward.1} parent=1 // pred_fallthru
      _
    // Predicated region
    $region30: #{clip_featurizer_forward.1} parent=1 // pred_check
      _
    $region31: #{clip_featurizer_forward.1} parent=1 // pred_check_branch
      %42 = sbr.rel (0) target = $region33
    $region32: #{clip_featurizer_forward.1} parent=1 // pred_region
      _
    $region33: #{clip_featurizer_forward.1} parent=1 // pred_fallthru
      _
    // Predicated region
    $region34: #{clip_featurizer_forward.1} parent=1 // pred_check
      _
    $region35: #{clip_featurizer_forward.1} parent=1 // pred_check_branch
      %44 = sbr.rel (0) target = $region37
    $region36: #{clip_featurizer_forward.1} parent=1 // pred_region
      _
    $region37: #{clip_featurizer_forward.1} parent=1 // pred_fallthru
      _
    // Predicated region
    $region38: #{clip_featurizer_forward.1} parent=1 // pred_check
      _
    $region39: #{clip_featurizer_forward.1} parent=1 // pred_check_branch
      %46 = sbr.rel (0) target = $region41
    $region40: #{clip_featurizer_forward.1} parent=1 // pred_region
      _
    $region41: #{clip_featurizer_forward.1} parent=1 // pred_fallthru
      _
    // Predicated region
    $region42: #{clip_featurizer_forward.1} parent=1 // pred_check
      _
    $region43: #{clip_featurizer_forward.1} parent=1 // pred_check_branch
      %48 = sbr.rel (0) target = $region45
    $region44: #{clip_featurizer_forward.1} parent=1 // pred_region
      _
    $region45: #{clip_featurizer_forward.1} parent=1 // pred_fallthru
      _
    // Predicated region
    $region46: #{clip_featurizer_forward.1} parent=1 // pred_check
      _
    $region47: #{clip_featurizer_forward.1} parent=1 // pred_check_branch
      %50 = sbr.rel (0) target = $region49
    $region48: #{clip_featurizer_forward.1} parent=1 // pred_region
      _
    $region49: #{clip_featurizer_forward.1} parent=1 // pred_fallthru
      _
    // Predicated region
    $region50: #{clip_featurizer_forward.1} parent=1 // pred_check
      _
    $region51: #{clip_featurizer_forward.1} parent=1 // pred_check_branch
      %52 = sbr.rel (0) target = $region53
    $region52: #{clip_featurizer_forward.1} parent=1 // pred_region
      _
    $region53: #{clip_featurizer_forward.1} parent=1 // pred_fallthru
      _
    // Predicated region
    $region54: #{clip_featurizer_forward.1} parent=1 // pred_check
      _
    $region55: #{clip_featurizer_forward.1} parent=1 // pred_check_branch
      %54 = sbr.rel (0) target = $region57
    $region56: #{clip_featurizer_forward.1} parent=1 // pred_region
      _
    $region57: #{clip_featurizer_forward.1} parent=1 // pred_fallthru
      _
    // Predicated region
    $region58: #{clip_featurizer_forward.1} parent=1 // pred_check
      _
    $region59: #{clip_featurizer_forward.1} parent=1 // pred_check_branch
      %56 = sbr.rel (0) target = $region61
    $region60: #{clip_featurizer_forward.1} parent=1 // pred_region
      _
    $region61: #{clip_featurizer_forward.1} parent=1 // pred_fallthru
      _
    // Predicated region
    $region62: #{clip_featurizer_forward.1} parent=1 // pred_check
      _
    $region63: #{clip_featurizer_forward.1} parent=1 // pred_check_branch
      %58 = sbr.rel (0) target = $region65
    $region64: #{clip_featurizer_forward.1} parent=1 // pred_region
      _
    $region65: #{clip_featurizer_forward.1} parent=1 // pred_fallthru
      _
    // Predicated region
    $region66: #{clip_featurizer_forward.1} parent=1 // pred_check
      _
    $region67: #{clip_featurizer_forward.1} parent=1 // pred_check_branch
      %60 = sbr.rel (0) target = $region69
    $region68: #{clip_featurizer_forward.1} parent=1 // pred_region
      _
    $region69: #{clip_featurizer_forward.1} parent=1 // pred_fallthru
      _
    // Predicated region
    $region70: #{clip_featurizer_forward.1} parent=1 // pred_check
      _
    $region71: #{clip_featurizer_forward.1} parent=1 // pred_check_branch
      %62 = sbr.rel (0) target = $region73
    $region72: #{clip_featurizer_forward.1} parent=1 // pred_region
      _
    $region73: #{clip_featurizer_forward.1} parent=1 // pred_fallthru
      _
    // Predicated region
    $region74: #{clip_featurizer_forward.1} parent=1 // pred_check
      _
    $region75: #{clip_featurizer_forward.1} parent=1 // pred_check_branch
      %64 = sbr.rel (0) target = $region77
    $region76: #{clip_featurizer_forward.1} parent=1 // pred_region
      _
    $region77: #{clip_featurizer_forward.1} parent=1 // pred_fallthru
      _
    // Predicated region
    $region78: #{clip_featurizer_forward.1} parent=1 // pred_check
      _
    $region79: #{clip_featurizer_forward.1} parent=1 // pred_check_branch
      %66 = sbr.rel (0) target = $region81
    $region80: #{clip_featurizer_forward.1} parent=1 // pred_region
      _
    $region81: #{clip_featurizer_forward.1} parent=1 // pred_fallthru
      _
    // Predicated region
    $region82: #{clip_featurizer_forward.1} parent=1 // pred_check
      _
    $region83: #{clip_featurizer_forward.1} parent=1 // pred_check_branch
      %68 = sbr.rel (0) target = $region85
    $region84: #{clip_featurizer_forward.1} parent=1 // pred_region
      _
    $region85: #{clip_featurizer_forward.1} parent=1 // pred_fallthru
      _
    %v69 = vld [vmem:[%s0] sm:$0xff]
    %v70 = vld [vmem:[%s0 + $0x8] sm:$0xff]
    %v71 = vld [vmem:[%s0 + $0x10] sm:$0xff]
    %v72 = vld [vmem:[%s0 + $0x18] sm:$0xff]
    %v73 = vld [vmem:[%s1] sm:$0xff]
    %v74 = vld [vmem:[%s1 + $0x8] sm:$0xff]
    %v75 = vld [vmem:[%s1 + $0x10] sm:$0xff]
    %v76 = vld [vmem:[%s1 + $0x18] sm:$0xff]
    %v77 = vld [vmem:[%s1 + $0x20] sm:$0xff]
    %v78 = vld [vmem:[%s1 + $0x28] sm:$0xff]
    %v79 = vld [vmem:[%s1 + $0x30] sm:$0xff]
    %v80 = vld [vmem:[%s1 + $0x38] sm:$0xff]
    %v81 = vld [vmem:[%s1 + $0x40] sm:$0xff]
    %v82 = vld [vmem:[%s1 + $0x48] sm:$0xff]
    %v83 = vld [vmem:[%s1 + $0x50] sm:$0xff]
    %v84 = vld [vmem:[%s1 + $0x58] sm:$0xff]
    %v85 = vld [vmem:[%s1 + $0x60] sm:$0xff]
    %v86 = vld [vmem:[%s1 + $0x68] sm:$0xff]
    %v87 = vld [vmem:[%s1 + $0x70] sm:$0xff]
    %v88 = vld [vmem:[%s1 + $0x78] sm:$0xff]
    %v89 = vld [vmem:[%s1 + $0x80] sm:$0xff]
    %v90 = vld [vmem:[%s1 + $0x88] sm:$0xff]
    %v91 = vld [vmem:[%s1 + $0x90] sm:$0xff]
    %v92 = vld [vmem:[%s1 + $0x98] sm:$0xff]
    %v93 = vld [vmem:[%s1 + $0xa0] sm:$0xff]
    %v94 = vld [vmem:[%s1 + $0xa8] sm:$0xff]
    %v95 = vld [vmem:[%s1 + $0xb0] sm:$0xff]
    %v96 = vld [vmem:[%s1 + $0xb8] sm:$0xff]
    %v97 = vld [vmem:[%s2] sm:$0xff]
    %v98 = vld [vmem:[%s2 + $0x8] sm:$0xff]
    %vm99 = vcmask 523264
    %v101 = vsel %vm99, %v70, 0
    %v104 = vsel %vm99, %v72, 0
    %106 = vmatprep.subr.mxu0 0.0
    %107 = vmatpush1.msra.mxu0 %v73
    %108 = vmatprep.subr.mxu0 0.0
    %109 = vmatpush1.msra.mxu0 %v74
    %110 = vmatprep.subr.mxu0 0.0
    %111 = vmatpush1.msra.mxu0 %v75
    %112 = vmatprep.subr.mxu0 0.0
    %113 = vmatpush1.msra.mxu0 %v76
    %114 = vmatprep.subr.mxu0 0.0
    %115 = vmatpush1.msra.mxu0 %v77
    %116 = vmatprep.subr.mxu0 0.0
    %117 = vmatpush1.msra.mxu0 %v78
    %118 = vmatprep.subr.mxu0 0.0
    %119 = vmatpush1.msra.mxu0 %v79
    %120 = vmatprep.subr.mxu0 0.0
    %121 = vmatpush1.msra.mxu0 %v80
    %122 = vmatprep.subr.mxu0 0.0
    %123 = vmatpush1.msra.mxu0 %v81
    %124 = vmatprep.subr.mxu0 0.0
    %125 = vmatpush1.msra.mxu0 %v82
    %126 = vmatprep.subr.mxu0 0.0
    %127 = vmatpush1.msra.mxu0 %v83
    %128 = vmatprep.subr.mxu0 0.0
    %129 = vmatpush1.msra.mxu0 %v84
    %130 = vmatprep.subr.mxu0 0.0
    %131 = vmatpush1.msra.mxu0 %v85
    %132 = vmatprep.subr.mxu0 0.0
    %133 = vmatpush1.msra.mxu0 %v86
    %134 = vmatprep.subr.mxu0 0.0
    %135 = vmatpush1.msra.mxu0 %v87
    %136 = vmatprep.subr.mxu0 0.0
    %137 = vmatpush1.msra.mxu0 %v88
    %138 = vmatprep.subr.mxu0 0.0
    %139 = vmatpush1.msra.mxu0 %v89
    %140 = vmatprep.subr.mxu0 0.0
    %141 = vmatpush1.msra.mxu0 %v90
    %142 = vmatprep.subr.mxu0 0.0
    %143 = vmatpush1.msra.mxu0 %v91
    %144 = vmatprep.subr.mxu0 0.0
    %145 = vmatpush1.msra.mxu0 %v92
    %146 = vmatprep.subr.mxu0 0.0
    %147 = vmatpush1.msra.mxu0 %v93
    %148 = vmatprep.subr.mxu0 0.0
    %149 = vmatpush1.msra.mxu0 %v94
    %150 = vmatprep.subr.mxu0 0.0
    %151 = vmatpush1.msra.mxu0 %v95
    %152 = vmatprep.subr.mxu0 0.0
    %153 = vmatpush1.msra.mxu0 %v96
    %154 = vmatprep.subr.mxu0 0.0
    %155 = vmatpush1.msra.mxu0 0.0
    %156 = vmatprep.subr.mxu0 0.0
    %157 = vmatpush1.msra.mxu0 0.0
    %158 = vmatprep.subr.mxu0 0.0
    %159 = vmatpush1.msra.mxu0 0.0
    %160 = vmatprep.subr.mxu0 0.0
    %161 = vmatpush1.msra.mxu0 0.0
    %162 = vmatprep.subr.mxu0 0.0
    %163 = vmatpush1.msra.mxu0 0.0
    %164 = vmatprep.subr.mxu0 0.0
    %165 = vmatpush1.msra.mxu0 0.0
    %166 = vmatprep.subr.mxu0 0.0
    %167 = vmatpush1.msra.mxu0 0.0
    %168 = vmatprep.subr.mxu0 0.0
    %169 = vmatpush1.msra.mxu0 0.0
    %170 = vmatprep.mubr.f32.mxu0 %v101
    %171 = vmatmul.mubr.f32.gmra.mrb[0].mxu0 %v69
    %v172 = vpop.f32.mrb[0].mxu0
    %v173 = vadd.f32 %v97, %v172
    %v174 = vpop.f32.mrb[0].mxu0
    %175 = vmatprep.mubr.f32.mxu0 %v104
    %176 = vmatmul.mubr.f32.gmra.mrb[0].mxu0 %v71
    %v177 = vpop.f32.mrb[0].mxu0
    %v178 = vadd.f32 %v98, %v177
    %v179 = vpop.f32.mrb[0].mxu0
    %180 = vdwg.mxu0
    %v181 = vld [vmem:[%s4] sm:$0x1]
    %v182 = vld [vmem:[%s5] sm:$0x1]
    %vm183 = vcmask 261120
    %v184 = vsel %vm183, %v173, 0.0
    %185 = vadd.xlane.f32.xlu0 %v184
    %v186 = vpop.xlane.xlu0 %185
    %v187 = vsel %vm183, %v178, 0.0
    %188 = vadd.xlane.f32.xlu0 %v187
    %v189 = vpop.xlane.xlu0 %188
    %v190 = vrcp.pop 32.0
    %v191 = vmul.f32 %v186, %v190
    %v192 = vmul.f32 %v189, %v190
    %v193 = vsub.f32 %v173, %v191
    %v194 = vsub.f32 %v178, %v192
    %v195 = vmul.f32 %v193, %v193
    %v196 = vmul.f32 %v194, %v194
    %v197 = vsel %vm183, %v195, 0.0
    %198 = vadd.xlane.f32.xlu0 %v197
    %v199 = vpop.xlane.xlu0 %198
    %v200 = vsel %vm183, %v196, 0.0
    %201 = vadd.xlane.f32.xlu0 %v200
    %v202 = vpop.xlane.xlu0 %201
    %v203 = vmul.f32 %v199, %v190
    %v204 = vmul.f32 %v202, %v190
    %v205 = vadd.f32 %v203, 1e-05
    %v206 = vadd.f32 %v204, 1e-05
    %v207 = vrsqrt.pop %v205
    %v208 = vrsqrt.pop %v206
    %v209 = vmul.f32 %v193, %v207
    %v210 = vmul.f32 %v194, %v208
    %v212 = vlaneseq
    %v213 = vshrl.u32 %v212, 7
    %v214 = vsub.s32 0, %v213
    %v215 = vrot.slane %v181, %v214
    %v217 = vmul.f32 %v209, %v215
    %v218 = vmul.f32 %v210, %v215
    %v220 = vlaneseq
    %v221 = vshrl.u32 %v220, 7
    %v222 = vsub.s32 0, %v221
    %v223 = vrot.slane %v182, %v222
    %v225 = vadd.f32 %v217, %v223
    %v226 = vadd.f32 %v218, %v223
    %v227 = vld [vmem:[%s3] sm:$0xff]
    %v228 = vld [vmem:[%s3 + $0x8] sm:$0xff]
    %v229 = vld [vmem:[%s6] sm:$0x1]
    %v230 = vld [vmem:[%s7] sm:$0x1]
    %v231 = vsel %vm183, %v225, 0.0
    %232 = vadd.xlane.f32.xlu0 %v231
    %v233 = vpop.xlane.xlu0 %232
    %v234 = vsel %vm183, %v226, 0.0
    %235 = vadd.xlane.f32.xlu0 %v234
    %v236 = vpop.xlane.xlu0 %235
    %v237 = vmul.f32 %v233, %v190
    %v238 = vmul.f32 %v236, %v190
    %v239 = vsub.f32 %v225, %v237
    %v240 = vsub.f32 %v226, %v238
    %v241 = vmul.f32 %v239, %v239
    %v242 = vmul.f32 %v240, %v240
    %v243 = vsel %vm183, %v241, 0.0
    %244 = vadd.xlane.f32.xlu0 %v243
    %v245 = vpop.xlane.xlu0 %244
    %v246 = vsel %vm183, %v242, 0.0
    %247 = vadd.xlane.f32.xlu0 %v246
    %v248 = vpop.xlane.xlu0 %247
    %v249 = vmul.f32 %v245, %v190
    %v250 = vmul.f32 %v248, %v190
    %v251 = vadd.f32 %v249, 1e-05
    %v252 = vadd.f32 %v250, 1e-05
    %v253 = vrsqrt.pop %v251
    %v254 = vrsqrt.pop %v252
    %v255 = vmul.f32 %v239, %v253
    %v256 = vmul.f32 %v240, %v254
    %v258 = vlaneseq
    %v259 = vshrl.u32 %v258, 7
    %v260 = vsub.s32 0, %v259
    %v261 = vrot.slane %v229, %v260
    %v263 = vmul.f32 %v255, %v261
    %v264 = vmul.f32 %v256, %v261
    %v266 = vlaneseq
    %v267 = vshrl.u32 %v266, 7
    %v268 = vsub.s32 0, %v267
    %v269 = vrot.slane %v230, %v268
    %v271 = vadd.f32 %v263, %v269
    %v272 = vadd.f32 %v264, %v269
    %v273 = vld [vmem:[%s8] sm:$0xff]
    %v274 = vld [vmem:[%s8 + $0x8] sm:$0xff]
    %v275 = vld [vmem:[%s8 + $0x10] sm:$0xff]
    %v276 = vld [vmem:[%s8 + $0x18] sm:$0xff]
    %v277 = vld [vmem:[%s9] sm:$0x1]
    %v279 = vlaneseq
    %v280 = vshrl.u32 %v279, 7
    %v281 = vsub.s32 0, %v280
    %v282 = vrot.slane %v277, %v281
    %v285 = vsel %vm183, %v271, 0
    %v288 = vsel %vm183, %v272, 0
    %290 = vmatprep.subr.mxu0 0.0
    %291 = vmatpush1.msra.mxu0 %v273
    %292 = vmatprep.subr.mxu0 0.0
    %293 = vmatpush1.msra.mxu0 %v274
    %294 = vmatprep.subr.mxu0 0.0
    %295 = vmatpush1.msra.mxu0 %v275
    %296 = vmatprep.subr.mxu0 0.0
    %297 = vmatpush1.msra.mxu0 %v276
    %298 = vmatprep.subr.mxu0 0.0
    %299 = vmatpush1.msra.mxu0 0.0
    %300 = vmatprep.subr.mxu0 0.0
    %301 = vmatpush1.msra.mxu0 0.0
    %302 = vmatprep.subr.mxu0 0.0
    %303 = vmatpush1.msra.mxu0 0.0
    %304 = vmatprep.subr.mxu0 0.0
    %305 = vmatpush1.msra.mxu0 0.0
    %306 = vmatprep.subr.mxu0 0.0
    %307 = vmatpush1.msra.mxu0 0.0
    %308 = vmatprep.subr.mxu0 0.0
    %309 = vmatpush1.msra.mxu0 0.0
    %310 = vmatprep.subr.mxu0 0.0
    %311 = vmatpush1.msra.mxu0 0.0
    %312 = vmatprep.subr.mxu0 0.0
    %313 = vmatpush1.msra.mxu0 0.0
    %314 = vmatprep.subr.mxu0 0.0
    %315 = vmatpush1.msra.mxu0 0.0
    %316 = vmatprep.subr.mxu0 0.0
    %317 = vmatpush1.msra.mxu0 0.0
    %318 = vmatprep.subr.mxu0 0.0
    %319 = vmatpush1.msra.mxu0 0.0
    %320 = vmatprep.subr.mxu0 0.0
    %321 = vmatpush1.msra.mxu0 0.0
    %322 = vmatprep.subr.mxu0 0.0
    %323 = vmatpush1.msra.mxu0 0.0
    %324 = vmatprep.subr.mxu0 0.0
    %325 = vmatpush1.msra.mxu0 0.0
    %326 = vmatprep.subr.mxu0 0.0
    %327 = vmatpush1.msra.mxu0 0.0
    %328 = vmatprep.subr.mxu0 0.0
    %329 = vmatpush1.msra.mxu0 0.0
    %330 = vmatprep.subr.mxu0 0.0
    %331 = vmatpush1.msra.mxu0 0.0
    %332 = vmatprep.subr.mxu0 0.0
    %333 = vmatpush1.msra.mxu0 0.0
    %334 = vmatprep.subr.mxu0 0.0
    %335 = vmatpush1.msra.mxu0 0.0
    %336 = vmatprep.subr.mxu0 0.0
    %337 = vmatpush1.msra.mxu0 0.0
    %338 = vmatprep.subr.mxu0 0.0
    %339 = vmatpush1.msra.mxu0 0.0
    %340 = vmatprep.subr.mxu0 0.0
    %341 = vmatpush1.msra.mxu0 0.0
    %342 = vmatprep.subr.mxu0 0.0
    %343 = vmatpush1.msra.mxu0 0.0
    %344 = vmatprep.subr.mxu0 0.0
    %345 = vmatpush1.msra.mxu0 0.0
    %346 = vmatprep.subr.mxu0 0.0
    %347 = vmatpush1.msra.mxu0 0.0
    %348 = vmatprep.subr.mxu0 0.0
    %349 = vmatpush1.msra.mxu0 0.0
    %350 = vmatprep.subr.mxu0 0.0
    %351 = vmatpush1.msra.mxu0 0.0
    %352 = vmatprep.subr.mxu0 0.0
    %353 = vmatpush1.msra.mxu0 0.0
    %354 = vmatprep.mubr.f32.mxu0 0.0
    %355 = vmatmul.mubr.f32.gmra.mrb[0].mxu0 %v285
    %v356 = vpop.f32.mrb[0].mxu0
    %v357 = vadd.f32 %v282, %v356
    %v358 = vpop.f32.mrb[0].mxu0
    %359 = vmatprep.mubr.f32.mxu0 0.0
    %360 = vmatmul.mubr.f32.gmra.mrb[0].mxu0 %v288
    %v361 = vpop.f32.mrb[0].mxu0
    %v362 = vadd.f32 %v282, %v361
    %v363 = vpop.f32.mrb[0].mxu0
    %364 = vdwg.mxu0
    %367 = vrot.lane.b32.xlu0 %v357, 96
    %v368 = vpop.permute.xlu0 %367
    %369 = vrot.lane.b32.xlu0 %v362, 96
    %v370 = vpop.permute.xlu0 %369
    %vm371 = vcmask 64512
    %v372 = vsel %vm371, %v357, 0
    %v374 = vsel %vm371, %v362, 0
    %v376 = vsel %vm371, %v368, 0
    %v378 = vsel %vm371, %v370, 0
    %380 = vmatprep.subr.mxu0 0.0
    %381 = vmatpush1.xpose.msra.mxu0 %v376
    %382 = vmatprep.subr.mxu0 0.0
    %383 = vmatpush1.xpose.msra.mxu0 %v378
    %384 = vmatprep.subr.mxu0 0.0
    %385 = vmatpush1.xpose.msra.mxu0 0.0
    %386 = vmatprep.subr.mxu0 0.0
    %387 = vmatpush1.xpose.msra.mxu0 0.0
    %388 = vmatprep.subr.mxu0 0.0
    %389 = vmatpush1.xpose.msra.mxu0 0.0
    %390 = vmatprep.subr.mxu0 0.0
    %391 = vmatpush1.xpose.msra.mxu0 0.0
    %392 = vmatprep.subr.mxu0 0.0
    %393 = vmatpush1.xpose.msra.mxu0 0.0
    %394 = vmatprep.subr.mxu0 0.0
    %395 = vmatpush1.xpose.msra.mxu0 0.0
    %396 = vmatprep.subr.mxu0 0.0
    %397 = vmatpush1.xpose.msra.mxu0 0.0
    %398 = vmatprep.subr.mxu0 0.0
    %399 = vmatpush1.xpose.msra.mxu0 0.0
    %400 = vmatprep.subr.mxu0 0.0
    %401 = vmatpush1.xpose.msra.mxu0 0.0
    %402 = vmatprep.subr.mxu0 0.0
    %403 = vmatpush1.xpose.msra.mxu0 0.0
    %404 = vmatprep.subr.mxu0 0.0
    %405 = vmatpush1.xpose.msra.mxu0 0.0
    %406 = vmatprep.subr.mxu0 0.0
    %407 = vmatpush1.xpose.msra.mxu0 0.0
    %408 = vmatprep.subr.mxu0 0.0
    %409 = vmatpush1.xpose.msra.mxu0 0.0
    %410 = vmatprep.subr.mxu0 0.0
    %411 = vmatpush1.xpose.msra.mxu0 0.0
    %412 = vmatprep.subr.mxu0 0.0
    %413 = vmatpush1.xpose.msra.mxu0 0.0
    %414 = vmatprep.subr.mxu0 0.0
    %415 = vmatpush1.xpose.msra.mxu0 0.0
    %416 = vmatprep.subr.mxu0 0.0
    %417 = vmatpush1.xpose.msra.mxu0 0.0
    %418 = vmatprep.subr.mxu0 0.0
    %419 = vmatpush1.xpose.msra.mxu0 0.0
    %420 = vmatprep.subr.mxu0 0.0
    %421 = vmatpush1.xpose.msra.mxu0 0.0
    %422 = vmatprep.subr.mxu0 0.0
    %423 = vmatpush1.xpose.msra.mxu0 0.0
    %424 = vmatprep.subr.mxu0 0.0
    %425 = vmatpush1.xpose.msra.mxu0 0.0
    %426 = vmatprep.subr.mxu0 0.0
    %427 = vmatpush1.xpose.msra.mxu0 0.0
    %428 = vmatprep.subr.mxu0 0.0
    %429 = vmatpush1.xpose.msra.mxu0 0.0
    %430 = vmatprep.subr.mxu0 0.0
    %431 = vmatpush1.xpose.msra.mxu0 0.0
    %432 = vmatprep.subr.mxu0 0.0
    %433 = vmatpush1.xpose.msra.mxu0 0.0
    %434 = vmatprep.subr.mxu0 0.0
    %435 = vmatpush1.xpose.msra.mxu0 0.0
    %436 = vmatprep.subr.mxu0 0.0
    %437 = vmatpush1.xpose.msra.mxu0 0.0
    %438 = vmatprep.subr.mxu0 0.0
    %439 = vmatpush1.xpose.msra.mxu0 0.0
    %440 = vmatprep.subr.mxu0 0.0
    %441 = vmatpush1.xpose.msra.mxu0 0.0
    %442 = vmatprep.subr.mxu0 0.0
    %443 = vmatpush1.xpose.msra.mxu0 0.0
    %444 = vmatprep.mubr.f32.mxu0 0.0
    %445 = vmatmul.mubr.f32.gmra.mrb[0].mxu0 %v372
    %v446 = vpop.f32.mrb[0].mxu0
    %v447 = vadd.f32 %v227, %v446
    %v448 = vpop.f32.mrb[0].mxu0
    %449 = vmatprep.mubr.f32.mxu0 0.0
    %450 = vmatmul.mubr.f32.gmra.mrb[0].mxu0 %v374
    %v451 = vpop.f32.mrb[0].mxu0
    %v452 = vadd.f32 %v228, %v451
    %v453 = vpop.f32.mrb[0].mxu0
    %454 = vdwg.mxu0
    %vm455 = vcmask 130048
    %v456 = vsel %vm455, %v447, -inf
    %457 = vmax.xlane.f32.xlu0 %v456
    %v458 = vpop.xlane.xlu0 %457
    %v459 = vsel %vm455, %v452, -inf
    %460 = vmax.xlane.f32.xlu0 %v459
    %v461 = vpop.xlane.xlu0 %460
    %v462 = vsub.f32 %v447, %v458
    %v463 = vsub.f32 %v452, %v461
    %v464 = vmul.f32 %v462, 1.442695
    %v465 = vpow.pop %v464
    %v466 = vmul.f32 %v463, 1.442695
    %v467 = vpow.pop %v466
    %v468 = vsel %vm455, %v465, 0.0
    %469 = vadd.xlane.f32.xlu0 %v468
    %v470 = vpop.xlane.xlu0 %469
    %v471 = vsel %vm455, %v467, 0.0
    %472 = vadd.xlane.f32.xlu0 %v471
    %v473 = vpop.xlane.xlu0 %472
    %v474 = vrcp.pop %v470
    %v475 = vrcp.pop %v473
    %v476 = vmul.f32 %v465, %v474
    %v477 = vmul.f32 %v467, %v475
    %478 = vrot.lane.b32.xlu0 %v357, 64
    %v479 = vpop.permute.xlu0 %478
    %480 = vrot.lane.b32.xlu0 %v362, 64
    %v481 = vpop.permute.xlu0 %480
    %v485 = vsel %vm455, %v476, 0
    %v488 = vsel %vm455, %v477, 0
    %490 = vmatprep.subr.mxu0 0.0
    %491 = vmatpush1.msra.mxu0 %v479
    %492 = vmatprep.subr.mxu0 0.0
    %493 = vmatpush1.msra.mxu0 %v481
    %494 = vmatprep.subr.mxu0 0.0
    %495 = vmatpush1.msra.mxu0 0.0
    %496 = vmatprep.subr.mxu0 0.0
    %497 = vmatpush1.msra.mxu0 0.0
    %498 = vmatprep.subr.mxu0 0.0
    %499 = vmatpush1.msra.mxu0 0.0
    %500 = vmatprep.subr.mxu0 0.0
    %501 = vmatpush1.msra.mxu0 0.0
    %502 = vmatprep.subr.mxu0 0.0
    %503 = vmatpush1.msra.mxu0 0.0
    %504 = vmatprep.subr.mxu0 0.0
    %505 = vmatpush1.msra.mxu0 0.0
    %506 = vmatprep.subr.mxu0 0.0
    %507 = vmatpush1.msra.mxu0 0.0
    %508 = vmatprep.subr.mxu0 0.0
    %509 = vmatpush1.msra.mxu0 0.0
    %510 = vmatprep.subr.mxu0 0.0
    %511 = vmatpush1.msra.mxu0 0.0
    %512 = vmatprep.subr.mxu0 0.0
    %513 = vmatpush1.msra.mxu0 0.0
    %514 = vmatprep.subr.mxu0 0.0
    %515 = vmatpush1.msra.mxu0 0.0
    %516 = vmatprep.subr.mxu0 0.0
    %517 = vmatpush1.msra.mxu0 0.0
    %518 = vmatprep.subr.mxu0 0.0
    %519 = vmatpush1.msra.mxu0 0.0
    %520 = vmatprep.subr.mxu0 0.0
    %521 = vmatpush1.msra.mxu0 0.0
    %522 = vmatprep.subr.mxu0 0.0
    %523 = vmatpush1.msra.mxu0 0.0
    %524 = vmatprep.subr.mxu0 0.0
    %525 = vmatpush1.msra.mxu0 0.0
    %526 = vmatprep.subr.mxu0 0.0
    %527 = vmatpush1.msra.mxu0 0.0
    %528 = vmatprep.subr.mxu0 0.0
    %529 = vmatpush1.msra.mxu0 0.0
    %530 = vmatprep.subr.mxu0 0.0
    %531 = vmatpush1.msra.mxu0 0.0
    %532 = vmatprep.subr.mxu0 0.0
    %533 = vmatpush1.msra.mxu0 0.0
    %534 = vmatprep.subr.mxu0 0.0
    %535 = vmatpush1.msra.mxu0 0.0
    %536 = vmatprep.subr.mxu0 0.0
    %537 = vmatpush1.msra.mxu0 0.0
    %538 = vmatprep.subr.mxu0 0.0
    %539 = vmatpush1.msra.mxu0 0.0
    %540 = vmatprep.subr.mxu0 0.0
    %541 = vmatpush1.msra.mxu0 0.0
    %542 = vmatprep.subr.mxu0 0.0
    %543 = vmatpush1.msra.mxu0 0.0
    %544 = vmatprep.subr.mxu0 0.0
    %545 = vmatpush1.msra.mxu0 0.0
    %546 = vmatprep.subr.mxu0 0.0
    %547 = vmatpush1.msra.mxu0 0.0
    %548 = vmatprep.subr.mxu0 0.0
    %549 = vmatpush1.msra.mxu0 0.0
    %550 = vmatprep.subr.mxu0 0.0
    %551 = vmatpush1.msra.mxu0 0.0
    %552 = vmatprep.subr.mxu0 0.0
    %553 = vmatpush1.msra.mxu0 0.0
    %554 = vmatprep.mubr.f32.mxu0 0.0
    %555 = vmatmul.mubr.f32.gmra.mrb[0].mxu0 %v485
    %v556 = vpop.f32.mrb[0].mxu0
    %v557 = vadd.f32 0.0, %v556
    %v558 = vpop.f32.mrb[0].mxu0
    %559 = vmatprep.mubr.f32.mxu0 0.0
    %560 = vmatmul.mubr.f32.gmra.mrb[0].mxu0 %v488
    %v561 = vpop.f32.mrb[0].mxu0
    %v562 = vadd.f32 0.0, %v561
    %v563 = vpop.f32.mrb[0].mxu0
    %564 = vdwg.mxu0
    %565 = vrot.lane.b32.xlu0 %v357, 120
    %v566 = vpop.permute.xlu0 %565
    %567 = vrot.lane.b32.xlu0 %v362, 120
    %v568 = vpop.permute.xlu0 %567
    %569 = vrot.lane.b32.xlu0 %v357, 88
    %v570 = vpop.permute.xlu0 %569
    %571 = vrot.lane.b32.xlu0 %v362, 88
    %v572 = vpop.permute.xlu0 %571
    %v573 = vsel %vm371, %v566, 0
    %v575 = vsel %vm371, %v568, 0
    %v577 = vsel %vm371, %v570, 0
    %v579 = vsel %vm371, %v572, 0
    %581 = vmatprep.subr.mxu0 0.0
    %582 = vmatpush1.xpose.msra.mxu0 %v577
    %583 = vmatprep.subr.mxu0 0.0
    %584 = vmatpush1.xpose.msra.mxu0 %v579
    %585 = vmatprep.subr.mxu0 0.0
    %586 = vmatpush1.xpose.msra.mxu0 0.0
    %587 = vmatprep.subr.mxu0 0.0
    %588 = vmatpush1.xpose.msra.mxu0 0.0
    %589 = vmatprep.subr.mxu0 0.0
    %590 = vmatpush1.xpose.msra.mxu0 0.0
    %591 = vmatprep.subr.mxu0 0.0
    %592 = vmatpush1.xpose.msra.mxu0 0.0
    %593 = vmatprep.subr.mxu0 0.0
    %594 = vmatpush1.xpose.msra.mxu0 0.0
    %595 = vmatprep.subr.mxu0 0.0
    %596 = vmatpush1.xpose.msra.mxu0 0.0
    %597 = vmatprep.subr.mxu0 0.0
    %598 = vmatpush1.xpose.msra.mxu0 0.0
    %599 = vmatprep.subr.mxu0 0.0
    %600 = vmatpush1.xpose.msra.mxu0 0.0
    %601 = vmatprep.subr.mxu0 0.0
    %602 = vmatpush1.xpose.msra.mxu0 0.0
    %603 = vmatprep.subr.mxu0 0.0
    %604 = vmatpush1.xpose.msra.mxu0 0.0
    %605 = vmatprep.subr.mxu0 0.0
    %606 = vmatpush1.xpose.msra.mxu0 0.0
    %607 = vmatprep.subr.mxu0 0.0
    %608 = vmatpush1.xpose.msra.mxu0 0.0
    %609 = vmatprep.subr.mxu0 0.0
    %610 = vmatpush1.xpose.msra.mxu0 0.0
    %611 = vmatprep.subr.mxu0 0.0
    %612 = vmatpush1.xpose.msra.mxu0 0.0
    %613 = vmatprep.subr.mxu0 0.0
    %614 = vmatpush1.xpose.msra.mxu0 0.0
    %615 = vmatprep.subr.mxu0 0.0
    %616 = vmatpush1.xpose.msra.mxu0 0.0
    %617 = vmatprep.subr.mxu0 0.0
    %618 = vmatpush1.xpose.msra.mxu0 0.0
    %619 = vmatprep.subr.mxu0 0.0
    %620 = vmatpush1.xpose.msra.mxu0 0.0
    %621 = vmatprep.subr.mxu0 0.0
    %622 = vmatpush1.xpose.msra.mxu0 0.0
    %623 = vmatprep.subr.mxu0 0.0
    %624 = vmatpush1.xpose.msra.mxu0 0.0
    %625 = vmatprep.subr.mxu0 0.0
    %626 = vmatpush1.xpose.msra.mxu0 0.0
    %627 = vmatprep.subr.mxu0 0.0
    %628 = vmatpush1.xpose.msra.mxu0 0.0
    %629 = vmatprep.subr.mxu0 0.0
    %630 = vmatpush1.xpose.msra.mxu0 0.0
    %631 = vmatprep.subr.mxu0 0.0
    %632 = vmatpush1.xpose.msra.mxu0 0.0
    %633 = vmatprep.subr.mxu0 0.0
    %634 = vmatpush1.xpose.msra.mxu0 0.0
    %635 = vmatprep.subr.mxu0 0.0
    %636 = vmatpush1.xpose.msra.mxu0 0.0
    %637 = vmatprep.subr.mxu0 0.0
    %638 = vmatpush1.xpose.msra.mxu0 0.0
    %639 = vmatprep.subr.mxu0 0.0
    %640 = vmatpush1.xpose.msra.mxu0 0.0
    %641 = vmatprep.subr.mxu0 0.0
    %642 = vmatpush1.xpose.msra.mxu0 0.0
    %643 = vmatprep.subr.mxu0 0.0
    %644 = vmatpush1.xpose.msra.mxu0 0.0
    %645 = vmatprep.mubr.f32.mxu0 0.0
    %646 = vmatmul.mubr.f32.gmra.mrb[0].mxu0 %v573
    %v647 = vpop.f32.mrb[0].mxu0
    %v648 = vadd.f32 %v227, %v647
    %v649 = vpop.f32.mrb[0].mxu0
    %650 = vmatprep.mubr.f32.mxu0 0.0
    %651 = vmatmul.mubr.f32.gmra.mrb[0].mxu0 %v575
    %v652 = vpop.f32.mrb[0].mxu0
    %v653 = vadd.f32 %v228, %v652
    %v654 = vpop.f32.mrb[0].mxu0
    %655 = vdwg.mxu0
    %v656 = vsel %vm455, %v648, -inf
    %657 = vmax.xlane.f32.xlu0 %v656
    %v658 = vpop.xlane.xlu0 %657
    %v659 = vsel %vm455, %v653, -inf
    %660 = vmax.xlane.f32.xlu0 %v659
    %v661 = vpop.xlane.xlu0 %660
    %v662 = vsub.f32 %v648, %v658
    %v663 = vsub.f32 %v653, %v661
    %v664 = vmul.f32 %v662, 1.442695
    %v665 = vpow.pop %v664
    %v666 = vmul.f32 %v663, 1.442695
    %v667 = vpow.pop %v666
    %v668 = vsel %vm455, %v665, 0.0
    %669 = vadd.xlane.f32.xlu0 %v668
    %v670 = vpop.xlane.xlu0 %669
    %v671 = vsel %vm455, %v667, 0.0
    %672 = vadd.xlane.f32.xlu0 %v671
    %v673 = vpop.xlane.xlu0 %672
    %v674 = vrcp.pop %v670
    %v675 = vrcp.pop %v673
    %v676 = vmul.f32 %v665, %v674
    %v677 = vmul.f32 %v667, %v675
    %678 = vrot.lane.b32.xlu0 %v357, 56
    %v679 = vpop.permute.xlu0 %678
    %680 = vrot.lane.b32.xlu0 %v362, 56
    %v681 = vpop.permute.xlu0 %680
    %v685 = vsel %vm455, %v676, 0
    %v688 = vsel %vm455, %v677, 0
    %690 = vmatprep.subr.mxu0 0.0
    %691 = vmatpush1.msra.mxu0 %v679
    %692 = vmatprep.subr.mxu0 0.0
    %693 = vmatpush1.msra.mxu0 %v681
    %694 = vmatprep.subr.mxu0 0.0
    %695 = vmatpush1.msra.mxu0 0.0
    %696 = vmatprep.subr.mxu0 0.0
    %697 = vmatpush1.msra.mxu0 0.0
    %698 = vmatprep.subr.mxu0 0.0
    %699 = vmatpush1.msra.mxu0 0.0
    %700 = vmatprep.subr.mxu0 0.0
    %701 = vmatpush1.msra.mxu0 0.0
    %702 = vmatprep.subr.mxu0 0.0
    %703 = vmatpush1.msra.mxu0 0.0
    %704 = vmatprep.subr.mxu0 0.0
    %705 = vmatpush1.msra.mxu0 0.0
    %706 = vmatprep.subr.mxu0 0.0
    %707 = vmatpush1.msra.mxu0 0.0
    %708 = vmatprep.subr.mxu0 0.0
    %709 = vmatpush1.msra.mxu0 0.0
    %710 = vmatprep.subr.mxu0 0.0
    %711 = vmatpush1.msra.mxu0 0.0
    %712 = vmatprep.subr.mxu0 0.0
    %713 = vmatpush1.msra.mxu0 0.0
    %714 = vmatprep.subr.mxu0 0.0
    %715 = vmatpush1.msra.mxu0 0.0
    %716 = vmatprep.subr.mxu0 0.0
    %717 = vmatpush1.msra.mxu0 0.0
    %718 = vmatprep.subr.mxu0 0.0
    %719 = vmatpush1.msra.mxu0 0.0
    %720 = vmatprep.subr.mxu0 0.0
    %721 = vmatpush1.msra.mxu0 0.0
    %722 = vmatprep.subr.mxu0 0.0
    %723 = vmatpush1.msra.mxu0 0.0
    %724 = vmatprep.subr.mxu0 0.0
    %725 = vmatpush1.msra.mxu0 0.0
    %726 = vmatprep.subr.mxu0 0.0
    %727 = vmatpush1.msra.mxu0 0.0
    %728 = vmatprep.subr.mxu0 0.0
    %729 = vmatpush1.msra.mxu0 0.0
    %730 = vmatprep.subr.mxu0 0.0
    %731 = vmatpush1.msra.mxu0 0.0
    %732 = vmatprep.subr.mxu0 0.0
    %733 = vmatpush1.msra.mxu0 0.0
    %734 = vmatprep.subr.mxu0 0.0
    %735 = vmatpush1.msra.mxu0 0.0
    %736 = vmatprep.subr.mxu0 0.0
    %737 = vmatpush1.msra.mxu0 0.0
    %738 = vmatprep.subr.mxu0 0.0
    %739 = vmatpush1.msra.mxu0 0.0
    %740 = vmatprep.subr.mxu0 0.0
    %741 = vmatpush1.msra.mxu0 0.0
    %742 = vmatprep.subr.mxu0 0.0
    %743 = vmatpush1.msra.mxu0 0.0
    %744 = vmatprep.subr.mxu0 0.0
    %745 = vmatpush1.msra.mxu0 0.0
    %746 = vmatprep.subr.mxu0 0.0
    %747 = vmatpush1.msra.mxu0 0.0
    %748 = vmatprep.subr.mxu0 0.0
    %749 = vmatpush1.msra.mxu0 0.0
    %750 = vmatprep.subr.mxu0 0.0
    %751 = vmatpush1.msra.mxu0 0.0
    %752 = vmatprep.subr.mxu0 0.0
    %753 = vmatpush1.msra.mxu0 0.0
    %754 = vmatprep.mubr.f32.mxu0 0.0
    %755 = vmatmul.mubr.f32.gmra.mrb[0].mxu0 %v685
    %v756 = vpop.f32.mrb[0].mxu0
    %v757 = vadd.f32 0.0, %v756
    %v758 = vpop.f32.mrb[0].mxu0
    %759 = vmatprep.mubr.f32.mxu0 0.0
    %760 = vmatmul.mubr.f32.gmra.mrb[0].mxu0 %v688
    %v761 = vpop.f32.mrb[0].mxu0
    %v762 = vadd.f32 0.0, %v761
    %v763 = vpop.f32.mrb[0].mxu0
    %764 = vdwg.mxu0
    %765 = vrot.lane.b32.xlu0 %v357, 112
    %v766 = vpop.permute.xlu0 %765
    %767 = vrot.lane.b32.xlu0 %v362, 112
    %v768 = vpop.permute.xlu0 %767
    %769 = vrot.lane.b32.xlu0 %v357, 80
    %v770 = vpop.permute.xlu0 %769
    %771 = vrot.lane.b32.xlu0 %v362, 80
    %v772 = vpop.permute.xlu0 %771
    %v773 = vsel %vm371, %v766, 0
    %v775 = vsel %vm371, %v768, 0
    %v777 = vsel %vm371, %v770, 0
    %v779 = vsel %vm371, %v772, 0
    %781 = vmatprep.subr.mxu0 0.0
    %782 = vmatpush1.xpose.msra.mxu0 %v777
    %783 = vmatprep.subr.mxu0 0.0
    %784 = vmatpush1.xpose.msra.mxu0 %v779
    %785 = vmatprep.subr.mxu0 0.0
    %786 = vmatpush1.xpose.msra.mxu0 0.0
    %787 = vmatprep.subr.mxu0 0.0
    %788 = vmatpush1.xpose.msra.mxu0 0.0
    %789 = vmatprep.subr.mxu0 0.0
    %790 = vmatpush1.xpose.msra.mxu0 0.0
    %791 = vmatprep.subr.mxu0 0.0
    %792 = vmatpush1.xpose.msra.mxu0 0.0
    %793 = vmatprep.subr.mxu0 0.0
    %794 = vmatpush1.xpose.msra.mxu0 0.0
    %795 = vmatprep.subr.mxu0 0.0
    %796 = vmatpush1.xpose.msra.mxu0 0.0
    %797 = vmatprep.subr.mxu0 0.0
    %798 = vmatpush1.xpose.msra.mxu0 0.0
    %799 = vmatprep.subr.mxu0 0.0
    %800 = vmatpush1.xpose.msra.mxu0 0.0
    %801 = vmatprep.subr.mxu0 0.0
    %802 = vmatpush1.xpose.msra.mxu0 0.0
    %803 = vmatprep.subr.mxu0 0.0
    %804 = vmatpush1.xpose.msra.mxu0 0.0
    %805 = vmatprep.subr.mxu0 0.0
    %806 = vmatpush1.xpose.msra.mxu0 0.0
    %807 = vmatprep.subr.mxu0 0.0
    %808 = vmatpush1.xpose.msra.mxu0 0.0
    %809 = vmatprep.subr.mxu0 0.0
    %810 = vmatpush1.xpose.msra.mxu0 0.0
    %811 = vmatprep.subr.mxu0 0.0
    %812 = vmatpush1.xpose.msra.mxu0 0.0
    %813 = vmatprep.subr.mxu0 0.0
    %814 = vmatpush1.xpose.msra.mxu0 0.0
    %815 = vmatprep.subr.mxu0 0.0
    %816 = vmatpush1.xpose.msra.mxu0 0.0
    %817 = vmatprep.subr.mxu0 0.0
    %818 = vmatpush1.xpose.msra.mxu0 0.0
    %819 = vmatprep.subr.mxu0 0.0
    %820 = vmatpush1.xpose.msra.mxu0 0.0
    %821 = vmatprep.subr.mxu0 0.0
    %822 = vmatpush1.xpose.msra.mxu0 0.0
    %823 = vmatprep.subr.mxu0 0.0
    %824 = vmatpush1.xpose.msra.mxu0 0.0
    %825 = vmatprep.subr.mxu0 0.0
    %826 = vmatpush1.xpose.msra.mxu0 0.0
    %827 = vmatprep.subr.mxu0 0.0
    %828 = vmatpush1.xpose.msra.mxu0 0.0
    %829 = vmatprep.subr.mxu0 0.0
    %830 = vmatpush1.xpose.msra.mxu0 0.0
    %831 = vmatprep.subr.mxu0 0.0
    %832 = vmatpush1.xpose.msra.mxu0 0.0
    %833 = vmatprep.subr.mxu0 0.0
    %834 = vmatpush1.xpose.msra.mxu0 0.0
    %835 = vmatprep.subr.mxu0 0.0
    %836 = vmatpush1.xpose.msra.mxu0 0.0
    %837 = vmatprep.subr.mxu0 0.0
    %838 = vmatpush1.xpose.msra.mxu0 0.0
    %839 = vmatprep.subr.mxu0 0.0
    %840 = vmatpush1.xpose.msra.mxu0 0.0
    %841 = vmatprep.subr.mxu0 0.0
    %842 = vmatpush1.xpose.msra.mxu0 0.0
    %843 = vmatprep.subr.mxu0 0.0
    %844 = vmatpush1.xpose.msra.mxu0 0.0
    %845 = vmatprep.mubr.f32.mxu0 0.0
    %846 = vmatmul.mubr.f32.gmra.mrb[0].mxu0 %v773
    %v847 = vpop.f32.mrb[0].mxu0
    %v848 = vadd.f32 %v227, %v847
    %v849 = vpop.f32.mrb[0].mxu0
    %850 = vmatprep.mubr.f32.mxu0 0.0
    %851 = vmatmul.mubr.f32.gmra.mrb[0].mxu0 %v775
    %v852 = vpop.f32.mrb[0].mxu0
    %v853 = vadd.f32 %v228, %v852
    %v854 = vpop.f32.mrb[0].mxu0
    %855 = vdwg.mxu0
    %v856 = vsel %vm455, %v848, -inf
    %857 = vmax.xlane.f32.xlu0 %v856
    %v858 = vpop.xlane.xlu0 %857
    %v859 = vsel %vm455, %v853, -inf
    %860 = vmax.xlane.f32.xlu0 %v859
    %v861 = vpop.xlane.xlu0 %860
    %v862 = vsub.f32 %v848, %v858
    %v863 = vsub.f32 %v853, %v861
    %v864 = vmul.f32 %v862, 1.442695
    %v865 = vpow.pop %v864
    %v866 = vmul.f32 %v863, 1.442695
    %v867 = vpow.pop %v866
    %v868 = vsel %vm455, %v865, 0.0
    %869 = vadd.xlane.f32.xlu0 %v868
    %v870 = vpop.xlane.xlu0 %869
    %v871 = vsel %vm455, %v867, 0.0
    %872 = vadd.xlane.f32.xlu0 %v871
    %v873 = vpop.xlane.xlu0 %872
    %v874 = vrcp.pop %v870
    %v875 = vrcp.pop %v873
    %v876 = vmul.f32 %v865, %v874
    %v877 = vmul.f32 %v867, %v875
    %878 = vrot.lane.b32.xlu0 %v357, 48
    %v879 = vpop.permute.xlu0 %878
    %880 = vrot.lane.b32.xlu0 %v362, 48
    %v881 = vpop.permute.xlu0 %880
    %v885 = vsel %vm455, %v876, 0
    %v888 = vsel %vm455, %v877, 0
    %890 = vmatprep.subr.mxu0 0.0
    %891 = vmatpush1.msra.mxu0 %v879
    %892 = vmatprep.subr.mxu0 0.0
    %893 = vmatpush1.msra.mxu0 %v881
    %894 = vmatprep.subr.mxu0 0.0
    %895 = vmatpush1.msra.mxu0 0.0
    %896 = vmatprep.subr.mxu0 0.0
    %897 = vmatpush1.msra.mxu0 0.0
    %898 = vmatprep.subr.mxu0 0.0
    %899 = vmatpush1.msra.mxu0 0.0
    %900 = vmatprep.subr.mxu0 0.0
    %901 = vmatpush1.msra.mxu0 0.0
    %902 = vmatprep.subr.mxu0 0.0
    %903 = vmatpush1.msra.mxu0 0.0
    %904 = vmatprep.subr.mxu0 0.0
    %905 = vmatpush1.msra.mxu0 0.0
    %906 = vmatprep.subr.mxu0 0.0
    %907 = vmatpush1.msra.mxu0 0.0
    %908 = vmatprep.subr.mxu0 0.0
    %909 = vmatpush1.msra.mxu0 0.0
    %910 = vmatprep.subr.mxu0 0.0
    %911 = vmatpush1.msra.mxu0 0.0
    %912 = vmatprep.subr.mxu0 0.0
    %913 = vmatpush1.msra.mxu0 0.0
    %914 = vmatprep.subr.mxu0 0.0
    %915 = vmatpush1.msra.mxu0 0.0
    %916 = vmatprep.subr.mxu0 0.0
    %917 = vmatpush1.msra.mxu0 0.0
    %918 = vmatprep.subr.mxu0 0.0
    %919 = vmatpush1.msra.mxu0 0.0
    %920 = vmatprep.subr.mxu0 0.0
    %921 = vmatpush1.msra.mxu0 0.0
    %922 = vmatprep.subr.mxu0 0.0
    %923 = vmatpush1.msra.mxu0 0.0
    %924 = vmatprep.subr.mxu0 0.0
    %925 = vmatpush1.msra.mxu0 0.0
    %926 = vmatprep.subr.mxu0 0.0
    %927 = vmatpush1.msra.mxu0 0.0
    %928 = vmatprep.subr.mxu0 0.0
    %929 = vmatpush1.msra.mxu0 0.0
    %930 = vmatprep.subr.mxu0 0.0
    %931 = vmatpush1.msra.mxu0 0.0
    %932 = vmatprep.subr.mxu0 0.0
    %933 = vmatpush1.msra.mxu0 0.0
    %934 = vmatprep.subr.mxu0 0.0
    %935 = vmatpush1.msra.mxu0 0.0
    %936 = vmatprep.subr.mxu0 0.0
    %937 = vmatpush1.msra.mxu0 0.0
    %938 = vmatprep.subr.mxu0 0.0
    %939 = vmatpush1.msra.mxu0 0.0
    %940 = vmatprep.subr.mxu0 0.0
    %941 = vmatpush1.msra.mxu0 0.0
    %942 = vmatprep.subr.mxu0 0.0
    %943 = vmatpush1.msra.mxu0 0.0
    %944 = vmatprep.subr.mxu0 0.0
    %945 = vmatpush1.msra.mxu0 0.0
    %946 = vmatprep.subr.mxu0 0.0
    %947 = vmatpush1.msra.mxu0 0.0
    %948 = vmatprep.subr.mxu0 0.0
    %949 = vmatpush1.msra.mxu0 0.0
    %950 = vmatprep.subr.mxu0 0.0
    %951 = vmatpush1.msra.mxu0 0.0
    %952 = vmatprep.subr.mxu0 0.0
    %953 = vmatpush1.msra.mxu0 0.0
    %954 = vmatprep.mubr.f32.mxu0 0.0
    %955 = vmatmul.mubr.f32.gmra.mrb[0].mxu0 %v885
    %v956 = vpop.f32.mrb[0].mxu0
    %v957 = vadd.f32 0.0, %v956
    %v958 = vpop.f32.mrb[0].mxu0
    %959 = vmatprep.mubr.f32.mxu0 0.0
    %960 = vmatmul.mubr.f32.gmra.mrb[0].mxu0 %v888
    %v961 = vpop.f32.mrb[0].mxu0
    %v962 = vadd.f32 0.0, %v961
    %v963 = vpop.f32.mrb[0].mxu0
    %964 = vdwg.mxu0
    %965 = vrot.lane.b32.xlu0 %v357, 104
    %v966 = vpop.permute.xlu0 %965
    %967 = vrot.lane.b32.xlu0 %v362, 104
    %v968 = vpop.permute.xlu0 %967
    %969 = vrot.lane.b32.xlu0 %v357, 72
    %v970 = vpop.permute.xlu0 %969
    %971 = vrot.lane.b32.xlu0 %v362, 72
    %v972 = vpop.permute.xlu0 %971
    %v973 = vsel %vm371, %v966, 0
    %v975 = vsel %vm371, %v968, 0
    %v977 = vsel %vm371, %v970, 0
    %v979 = vsel %vm371, %v972, 0
    %981 = vmatprep.subr.mxu0 0.0
    %982 = vmatpush1.xpose.msra.mxu0 %v977
    %983 = vmatprep.subr.mxu0 0.0
    %984 = vmatpush1.xpose.msra.mxu0 %v979
    %985 = vmatprep.subr.mxu0 0.0
    %986 = vmatpush1.xpose.msra.mxu0 0.0
    %987 = vmatprep.subr.mxu0 0.0
    %988 = vmatpush1.xpose.msra.mxu0 0.0
    %989 = vmatprep.subr.mxu0 0.0
    %990 = vmatpush1.xpose.msra.mxu0 0.0
    %991 = vmatprep.subr.mxu0 0.0
    %992 = vmatpush1.xpose.msra.mxu0 0.0
    %993 = vmatprep.subr.mxu0 0.0
    %994 = vmatpush1.xpose.msra.mxu0 0.0
    %995 = vmatprep.subr.mxu0 0.0
    %996 = vmatpush1.xpose.msra.mxu0 0.0
    %997 = vmatprep.subr.mxu0 0.0
    %998 = vmatpush1.xpose.msra.mxu0 0.0
    %999 = vmatprep.subr.mxu0 0.0
    %1000 = vmatpush1.xpose.msra.mxu0 0.0
    %1001 = vmatprep.subr.mxu0 0.0
    %1002 = vmatpush1.xpose.msra.mxu0 0.0
    %1003 = vmatprep.subr.mxu0 0.0
    %1004 = vmatpush1.xpose.msra.mxu0 0.0
    %1005 = vmatprep.subr.mxu0 0.0
    %1006 = vmatpush1.xpose.msra.mxu0 0.0
    %1007 = vmatprep.subr.mxu0 0.0
    %1008 = vmatpush1.xpose.msra.mxu0 0.0
    %1009 = vmatprep.subr.mxu0 0.0
    %1010 = vmatpush1.xpose.msra.mxu0 0.0
    %1011 = vmatprep.subr.mxu0 0.0
    %1012 = vmatpush1.xpose.msra.mxu0 0.0
    %1013 = vmatprep.subr.mxu0 0.0
    %1014 = vmatpush1.xpose.msra.mxu0 0.0
    %1015 = vmatprep.subr.mxu0 0.0
    %1016 = vmatpush1.xpose.msra.mxu0 0.0
    %1017 = vmatprep.subr.mxu0 0.0
    %1018 = vmatpush1.xpose.msra.mxu0 0.0
    %1019 = vmatprep.subr.mxu0 0.0
    %1020 = vmatpush1.xpose.msra.mxu0 0.0
    %1021 = vmatprep.subr.mxu0 0.0
    %1022 = vmatpush1.xpose.msra.mxu0 0.0
    %1023 = vmatprep.subr.mxu0 0.0
    %1024 = vmatpush1.xpose.msra.mxu0 0.0
    %1025 = vmatprep.subr.mxu0 0.0
    %1026 = vmatpush1.xpose.msra.mxu0 0.0
    %1027 = vmatprep.subr.mxu0 0.0
    %1028 = vmatpush1.xpose.msra.mxu0 0.0
    %1029 = vmatprep.subr.mxu0 0.0
    %1030 = vmatpush1.xpose.msra.mxu0 0.0
    %1031 = vmatprep.subr.mxu0 0.0
    %1032 = vmatpush1.xpose.msra.mxu0 0.0
    %1033 = vmatprep.subr.mxu0 0.0
    %1034 = vmatpush1.xpose.msra.mxu0 0.0
    %1035 = vmatprep.subr.mxu0 0.0
    %1036 = vmatpush1.xpose.msra.mxu0 0.0
    %1037 = vmatprep.subr.mxu0 0.0
    %1038 = vmatpush1.xpose.msra.mxu0 0.0
    %1039 = vmatprep.subr.mxu0 0.0
    %1040 = vmatpush1.xpose.msra.mxu0 0.0
    %1041 = vmatprep.subr.mxu0 0.0
    %1042 = vmatpush1.xpose.msra.mxu0 0.0
    %1043 = vmatprep.subr.mxu0 0.0
    %1044 = vmatpush1.xpose.msra.mxu0 0.0
    %1045 = vmatprep.mubr.f32.mxu0 0.0
    %1046 = vmatmul.mubr.f32.gmra.mrb[0].mxu0 %v973
    %v1047 = vpop.f32.mrb[0].mxu0
    %v1048 = vadd.f32 %v227, %v1047
    %v1049 = vpop.f32.mrb[0].mxu0
    %1050 = vmatprep.mubr.f32.mxu0 0.0
    %1051 = vmatmul.mubr.f32.gmra.mrb[0].mxu0 %v975
    %v1052 = vpop.f32.mrb[0].mxu0
    %v1053 = vadd.f32 %v228, %v1052
    %v1054 = vpop.f32.mrb[0].mxu0
    %1055 = vdwg.mxu0
    %v1056 = vsel %vm455, %v1048, -inf
    %1057 = vmax.xlane.f32.xlu0 %v1056
    %v1058 = vpop.xlane.xlu0 %1057
    %v1059 = vsel %vm455, %v1053, -inf
    %1060 = vmax.xlane.f32.xlu0 %v1059
    %v1061 = vpop.xlane.xlu0 %1060
    %v1062 = vsub.f32 %v1048, %v1058
    %v1063 = vsub.f32 %v1053, %v1061
    %v1064 = vmul.f32 %v1062, 1.442695
    %v1065 = vpow.pop %v1064
    %v1066 = vmul.f32 %v1063, 1.442695
    %v1067 = vpow.pop %v1066
    %v1068 = vsel %vm455, %v1065, 0.0
    %1069 = vadd.xlane.f32.xlu0 %v1068
    %v1070 = vpop.xlane.xlu0 %1069
    %v1071 = vsel %vm455, %v1067, 0.0
    %1072 = vadd.xlane.f32.xlu0 %v1071
    %v1073 = vpop.xlane.xlu0 %1072
    %v1074 = vrcp.pop %v1070
    %v1075 = vrcp.pop %v1073
    %v1076 = vmul.f32 %v1065, %v1074
    %v1077 = vmul.f32 %v1067, %v1075
    %1078 = vrot.lane.b32.xlu0 %v357, 40
    %v1079 = vpop.permute.xlu0 %1078
    %1080 = vrot.lane.b32.xlu0 %v362, 40
    %v1081 = vpop.permute.xlu0 %1080
    %v1085 = vsel %vm455, %v1076, 0
    %v1088 = vsel %vm455, %v1077, 0
    %1090 = vmatprep.subr.mxu0 0.0
    %1091 = vmatpush1.msra.mxu0 %v1079
    %1092 = vmatprep.subr.mxu0 0.0
    %1093 = vmatpush1.msra.mxu0 %v1081
    %1094 = vmatprep.subr.mxu0 0.0
    %1095 = vmatpush1.msra.mxu0 0.0
    %1096 = vmatprep.subr.mxu0 0.0
    %1097 = vmatpush1.msra.mxu0 0.0
    %1098 = vmatprep.subr.mxu0 0.0
    %1099 = vmatpush1.msra.mxu0 0.0
    %1100 = vmatprep.subr.mxu0 0.0
    %1101 = vmatpush1.msra.mxu0 0.0
    %1102 = vmatprep.subr.mxu0 0.0
    %1103 = vmatpush1.msra.mxu0 0.0
    %1104 = vmatprep.subr.mxu0 0.0
    %1105 = vmatpush1.msra.mxu0 0.0
    %1106 = vmatprep.subr.mxu0 0.0
    %1107 = vmatpush1.msra.mxu0 0.0
    %1108 = vmatprep.subr.mxu0 0.0
    %1109 = vmatpush1.msra.mxu0 0.0
    %1110 = vmatprep.subr.mxu0 0.0
    %1111 = vmatpush1.msra.mxu0 0.0
    %1112 = vmatprep.subr.mxu0 0.0
    %1113 = vmatpush1.msra.mxu0 0.0
    %1114 = vmatprep.subr.mxu0 0.0
    %1115 = vmatpush1.msra.mxu0 0.0
    %1116 = vmatprep.subr.mxu0 0.0
    %1117 = vmatpush1.msra.mxu0 0.0
    %1118 = vmatprep.subr.mxu0 0.0
    %1119 = vmatpush1.msra.mxu0 0.0
    %1120 = vmatprep.subr.mxu0 0.0
    %1121 = vmatpush1.msra.mxu0 0.0
    %1122 = vmatprep.subr.mxu0 0.0
    %1123 = vmatpush1.msra.mxu0 0.0
    %1124 = vmatprep.subr.mxu0 0.0
    %1125 = vmatpush1.msra.mxu0 0.0
    %1126 = vmatprep.subr.mxu0 0.0
    %1127 = vmatpush1.msra.mxu0 0.0
    %1128 = vmatprep.subr.mxu0 0.0
    %1129 = vmatpush1.msra.mxu0 0.0
    %1130 = vmatprep.subr.mxu0 0.0
    %1131 = vmatpush1.msra.mxu0 0.0
    %1132 = vmatprep.subr.mxu0 0.0
    %1133 = vmatpush1.msra.mxu0 0.0
    %1134 = vmatprep.subr.mxu0 0.0
    %1135 = vmatpush1.msra.mxu0 0.0
    %1136 = vmatprep.subr.mxu0 0.0
    %1137 = vmatpush1.msra.mxu0 0.0
    %1138 = vmatprep.subr.mxu0 0.0
    %1139 = vmatpush1.msra.mxu0 0.0
    %1140 = vmatprep.subr.mxu0 0.0
    %1141 = vmatpush1.msra.mxu0 0.0
    %1142 = vmatprep.subr.mxu0 0.0
    %1143 = vmatpush1.msra.mxu0 0.0
    %1144 = vmatprep.subr.mxu0 0.0
    %1145 = vmatpush1.msra.mxu0 0.0
    %1146 = vmatprep.subr.mxu0 0.0
    %1147 = vmatpush1.msra.mxu0 0.0
    %1148 = vmatprep.subr.mxu0 0.0
    %1149 = vmatpush1.msra.mxu0 0.0
    %1150 = vmatprep.subr.mxu0 0.0
    %1151 = vmatpush1.msra.mxu0 0.0
    %1152 = vmatprep.subr.mxu0 0.0
    %1153 = vmatpush1.msra.mxu0 0.0
    %1154 = vmatprep.mubr.f32.mxu0 0.0
    %1155 = vmatmul.mubr.f32.gmra.mrb[0].mxu0 %v1085
    %v1156 = vpop.f32.mrb[0].mxu0
    %v1157 = vadd.f32 0.0, %v1156
    %v1158 = vpop.f32.mrb[0].mxu0
    %1159 = vmatprep.mubr.f32.mxu0 0.0
    %1160 = vmatmul.mubr.f32.gmra.mrb[0].mxu0 %v1088
    %v1161 = vpop.f32.mrb[0].mxu0
    %v1162 = vadd.f32 0.0, %v1161
    %v1163 = vpop.f32.mrb[0].mxu0
    %1164 = vdwg.mxu0
    %1167 = vrot.lane.b32.xlu0 %v757, 8
    %v1168 = vpop.permute.xlu0 %1167
    %1169 = vrot.lane.b32.xlu0 %v762, 8
    %v1170 = vpop.permute.xlu0 %1169
    %1175 = vrot.lane.b32.xlu0 %v957, 16
    %v1176 = vpop.permute.xlu0 %1175
    %1177 = vrot.lane.b32.xlu0 %v962, 16
    %v1178 = vpop.permute.xlu0 %1177
    %1183 = vrot.lane.b32.xlu0 %v1157, 24
    %v1184 = vpop.permute.xlu0 %1183
    %1185 = vrot.lane.b32.xlu0 %v1162, 24
    %v1186 = vpop.permute.xlu0 %1185
    %v1189 = vsel %vm371, %v557, %v1168
    %v1190 = vsel %vm371, %v562, %v1170
    %v1191 = vsel %vm455, %v1189, %v1176
    %v1192 = vsel %vm455, %v1190, %v1178
    %vm1193 = vcmask 195584
    %v1194 = vsel %vm1193, %v1191, %v1184
    %v1195 = vsel %vm1193, %v1192, %v1186
    %v1196 = vld [vmem:[%s10] sm:$0xff]
    %v1197 = vld [vmem:[%s10 + $0x8] sm:$0xff]
    %v1198 = vld [vmem:[%s10 + $0x10] sm:$0xff]
    %v1199 = vld [vmem:[%s10 + $0x18] sm:$0xff]
    %v1201 = vsel %vm183, %v1194, 0
    %v1204 = vsel %vm183, %v1195, 0
    %1206 = vmatprep.subr.mxu0 0.0
    %1207 = vmatpush1.msra.mxu0 %v1196
    %1208 = vmatprep.subr.mxu0 0.0
    %1209 = vmatpush1.msra.mxu0 %v1197
    %1210 = vmatprep.subr.mxu0 0.0
    %1211 = vmatpush1.msra.mxu0 %v1198
    %1212 = vmatprep.subr.mxu0 0.0
    %1213 = vmatpush1.msra.mxu0 %v1199
    %1214 = vmatprep.subr.mxu0 0.0
    %1215 = vmatpush1.msra.mxu0 0.0
    %1216 = vmatprep.subr.mxu0 0.0
    %1217 = vmatpush1.msra.mxu0 0.0
    %1218 = vmatprep.subr.mxu0 0.0
    %1219 = vmatpush1.msra.mxu0 0.0
    %1220 = vmatprep.subr.mxu0 0.0
    %1221 = vmatpush1.msra.mxu0 0.0
    %1222 = vmatprep.subr.mxu0 0.0
    %1223 = vmatpush1.msra.mxu0 0.0
    %1224 = vmatprep.subr.mxu0 0.0
    %1225 = vmatpush1.msra.mxu0 0.0
    %1226 = vmatprep.subr.mxu0 0.0
    %1227 = vmatpush1.msra.mxu0 0.0
    %1228 = vmatprep.subr.mxu0 0.0
    %1229 = vmatpush1.msra.mxu0 0.0
    %1230 = vmatprep.subr.mxu0 0.0
    %1231 = vmatpush1.msra.mxu0 0.0
    %1232 = vmatprep.subr.mxu0 0.0
    %1233 = vmatpush1.msra.mxu0 0.0
    %1234 = vmatprep.subr.mxu0 0.0
    %1235 = vmatpush1.msra.mxu0 0.0
    %1236 = vmatprep.subr.mxu0 0.0
    %1237 = vmatpush1.msra.mxu0 0.0
    %1238 = vmatprep.subr.mxu0 0.0
    %1239 = vmatpush1.msra.mxu0 0.0
    %1240 = vmatprep.subr.mxu0 0.0
    %1241 = vmatpush1.msra.mxu0 0.0
    %1242 = vmatprep.subr.mxu0 0.0
    %1243 = vmatpush1.msra.mxu0 0.0
    %1244 = vmatprep.subr.mxu0 0.0
    %1245 = vmatpush1.msra.mxu0 0.0
    %1246 = vmatprep.subr.mxu0 0.0
    %1247 = vmatpush1.msra.mxu0 0.0
    %1248 = vmatprep.subr.mxu0 0.0
    %1249 = vmatpush1.msra.mxu0 0.0
    %1250 = vmatprep.subr.mxu0 0.0
    %1251 = vmatpush1.msra.mxu0 0.0
    %1252 = vmatprep.subr.mxu0 0.0
    %1253 = vmatpush1.msra.mxu0 0.0
    %1254 = vmatprep.subr.mxu0 0.0
    %1255 = vmatpush1.msra.mxu0 0.0
    %1256 = vmatprep.subr.mxu0 0.0
    %1257 = vmatpush1.msra.mxu0 0.0
    %1258 = vmatprep.subr.mxu0 0.0
    %1259 = vmatpush1.msra.mxu0 0.0
    %1260 = vmatprep.subr.mxu0 0.0
    %1261 = vmatpush1.msra.mxu0 0.0
    %1262 = vmatprep.subr.mxu0 0.0
    %1263 = vmatpush1.msra.mxu0 0.0
    %1264 = vmatprep.subr.mxu0 0.0
    %1265 = vmatpush1.msra.mxu0 0.0
    %1266 = vmatprep.subr.mxu0 0.0
    %1267 = vmatpush1.msra.mxu0 0.0
    %1268 = vmatprep.subr.mxu0 0.0
    %1269 = vmatpush1.msra.mxu0 0.0
    %1270 = vmatprep.mubr.f32.mxu0 0.0
    %1271 = vmatmul.mubr.f32.gmra.mrb[0].mxu0 %v1201
    %v1272 = vpop.f32.mrb[0].mxu0
    %v1273 = vadd.f32 0.0, %v1272
    %v1274 = vpop.f32.mrb[0].mxu0
    %1275 = vmatprep.mubr.f32.mxu0 0.0
    %1276 = vmatmul.mubr.f32.gmra.mrb[0].mxu0 %v1204
    %v1277 = vpop.f32.mrb[0].mxu0
    %v1278 = vadd.f32 0.0, %v1277
    %v1279 = vpop.f32.mrb[0].mxu0
    %1280 = vdwg.mxu0
    %v1281 = vadd.f32 %v225, %v1273
    %v1282 = vadd.f32 %v226, %v1278
    %v1283 = vld [vmem:[%s11] sm:$0x1]
    %v1285 = vlaneseq
    %v1286 = vshrl.u32 %v1285, 7
    %v1287 = vsub.s32 0, %v1286
    %v1288 = vrot.slane %v1283, %v1287
    %v1290 = vadd.f32 %v1281, %v1288
    %v1291 = vadd.f32 %v1282, %v1288
    %v1292 = vld [vmem:[%s12] sm:$0x1]
    %v1293 = vld [vmem:[%s13] sm:$0x1]
    %v1294 = vsel %vm183, %v1290, 0.0
    %1295 = vadd.xlane.f32.xlu0 %v1294
    %v1296 = vpop.xlane.xlu0 %1295
    %v1297 = vsel %vm183, %v1291, 0.0
    %1298 = vadd.xlane.f32.xlu0 %v1297
    %v1299 = vpop.xlane.xlu0 %1298
    %v1300 = vmul.f32 %v1296, %v190
    %v1301 = vmul.f32 %v1299, %v190
    %v1302 = vsub.f32 %v1290, %v1300
    %v1303 = vsub.f32 %v1291, %v1301
    %v1304 = vmul.f32 %v1302, %v1302
    %v1305 = vmul.f32 %v1303, %v1303
    %v1306 = vsel %vm183, %v1304, 0.0
    %1307 = vadd.xlane.f32.xlu0 %v1306
    %v1308 = vpop.xlane.xlu0 %1307
    %v1309 = vsel %vm183, %v1305, 0.0
    %1310 = vadd.xlane.f32.xlu0 %v1309
    %v1311 = vpop.xlane.xlu0 %1310
    %v1312 = vmul.f32 %v1308, %v190
    %v1313 = vmul.f32 %v1311, %v190
    %v1314 = vadd.f32 %v1312, 1e-05
    %v1315 = vadd.f32 %v1313, 1e-05
    %v1316 = vrsqrt.pop %v1314
    %v1317 = vrsqrt.pop %v1315
    %v1318 = vmul.f32 %v1302, %v1316
    %v1319 = vmul.f32 %v1303, %v1317
    %v1321 = vlaneseq
    %v1322 = vshrl.u32 %v1321, 7
    %v1323 = vsub.s32 0, %v1322
    %v1324 = vrot.slane %v1292, %v1323
    %v1326 = vmul.f32 %v1318, %v1324
    %v1327 = vmul.f32 %v1319, %v1324
    %v1329 = vlaneseq
    %v1330 = vshrl.u32 %v1329, 7
    %v1331 = vsub.s32 0, %v1330
    %v1332 = vrot.slane %v1293, %v1331
    %v1334 = vadd.f32 %v1326, %v1332
    %v1335 = vadd.f32 %v1327, %v1332
    %v1336 = vld [vmem:[%s14] sm:$0xff]
    %v1337 = vld [vmem:[%s14 + $0x8] sm:$0xff]
    %v1338 = vld [vmem:[%s14 + $0x10] sm:$0xff]
    %v1339 = vld [vmem:[%s14 + $0x18] sm:$0xff]
    %v1340 = vld [vmem:[%s15] sm:$0x1]
    %v1342 = vlaneseq
    %v1343 = vshrl.u32 %v1342, 7
    %v1344 = vsub.s32 0, %v1343
    %v1345 = vrot.slane %v1340, %v1344
    %v1348 = vsel %vm183, %v1334, 0
    %v1351 = vsel %vm183, %v1335, 0
    %1353 = vmatprep.subr.mxu0 0.0
    %1354 = vmatpush1.msra.mxu0 %v1336
    %1355 = vmatprep.subr.mxu0 0.0
    %1356 = vmatpush1.msra.mxu0 %v1337
    %1357 = vmatprep.subr.mxu0 0.0
    %1358 = vmatpush1.msra.mxu0 %v1338
    %1359 = vmatprep.subr.mxu0 0.0
    %1360 = vmatpush1.msra.mxu0 %v1339
    %1361 = vmatprep.subr.mxu0 0.0
    %1362 = vmatpush1.msra.mxu0 0.0
    %1363 = vmatprep.subr.mxu0 0.0
    %1364 = vmatpush1.msra.mxu0 0.0
    %1365 = vmatprep.subr.mxu0 0.0
    %1366 = vmatpush1.msra.mxu0 0.0
    %1367 = vmatprep.subr.mxu0 0.0
    %1368 = vmatpush1.msra.mxu0 0.0
    %1369 = vmatprep.subr.mxu0 0.0
    %1370 = vmatpush1.msra.mxu0 0.0
    %1371 = vmatprep.subr.mxu0 0.0
    %1372 = vmatpush1.msra.mxu0 0.0
    %1373 = vmatprep.subr.mxu0 0.0
    %1374 = vmatpush1.msra.mxu0 0.0
    %1375 = vmatprep.subr.mxu0 0.0
    %1376 = vmatpush1.msra.mxu0 0.0
    %1377 = vmatprep.subr.mxu0 0.0
    %1378 = vmatpush1.msra.mxu0 0.0
    %1379 = vmatprep.subr.mxu0 0.0
    %1380 = vmatpush1.msra.mxu0 0.0
    %1381 = vmatprep.subr.mxu0 0.0
    %1382 = vmatpush1.msra.mxu0 0.0
    %1383 = vmatprep.subr.mxu0 0.0
    %1384 = vmatpush1.msra.mxu0 0.0
    %1385 = vmatprep.subr.mxu0 0.0
    %1386 = vmatpush1.msra.mxu0 0.0
    %1387 = vmatprep.subr.mxu0 0.0
    %1388 = vmatpush1.msra.mxu0 0.0
    %1389 = vmatprep.subr.mxu0 0.0
    %1390 = vmatpush1.msra.mxu0 0.0
    %1391 = vmatprep.subr.mxu0 0.0
    %1392 = vmatpush1.msra.mxu0 0.0
    %1393 = vmatprep.subr.mxu0 0.0
    %1394 = vmatpush1.msra.mxu0 0.0
    %1395 = vmatprep.subr.mxu0 0.0
    %1396 = vmatpush1.msra.mxu0 0.0
    %1397 = vmatprep.subr.mxu0 0.0
    %1398 = vmatpush1.msra.mxu0 0.0
    %1399 = vmatprep.subr.mxu0 0.0
    %1400 = vmatpush1.msra.mxu0 0.0
    %1401 = vmatprep.subr.mxu0 0.0
    %1402 = vmatpush1.msra.mxu0 0.0
    %1403 = vmatprep.subr.mxu0 0.0
    %1404 = vmatpush1.msra.mxu0 0.0
    %1405 = vmatprep.subr.mxu0 0.0
    %1406 = vmatpush1.msra.mxu0 0.0
    %1407 = vmatprep.subr.mxu0 0.0
    %1408 = vmatpush1.msra.mxu0 0.0
    %1409 = vmatprep.subr.mxu0 0.0
    %1410 = vmatpush1.msra.mxu0 0.0
    %1411 = vmatprep.subr.mxu0 0.0
    %1412 = vmatpush1.msra.mxu0 0.0
    %1413 = vmatprep.subr.mxu0 0.0
    %1414 = vmatpush1.msra.mxu0 0.0
    %1415 = vmatprep.subr.mxu0 0.0
    %1416 = vmatpush1.msra.mxu0 0.0
    %1417 = vmatprep.mubr.f32.mxu0 0.0
    %1418 = vmatmul.mubr.f32.gmra.mrb[0].mxu0 %v1348
    %v1419 = vpop.f32.mrb[0].mxu0
    %v1420 = vadd.f32 %v1345, %v1419
    %v1421 = vpop.f32.mrb[0].mxu0
    %1422 = vmatprep.mubr.f32.mxu0 0.0
    %1423 = vmatmul.mubr.f32.gmra.mrb[0].mxu0 %v1351
    %v1424 = vpop.f32.mrb[0].mxu0
    %v1425 = vadd.f32 %v1345, %v1424
    %v1426 = vpop.f32.mrb[0].mxu0
    %1427 = vdwg.mxu0
    %v1428 = vmul.f32 %v1420, 1.702
    %v1429 = vmul.f32 %v1425, 1.702
    %v1430 = vxor.u32 %v1428, 2147483648
    %v1431 = vxor.u32 %v1429, 2147483648
    %v1432 = vmul.f32 %v1430, 1.442695
    %v1433 = vpow.pop %v1432
    %v1434 = vmul.f32 %v1431, 1.442695
    %v1435 = vpow.pop %v1434
    %v1436 = vadd.f32 %v1433, 1.0
    %v1437 = vadd.f32 %v1435, 1.0
    %v1438 = vrcp.pop %v1436
    %v1439 = vmul.f32 1.0, %v1438
    %v1440 = vrcp.pop %v1437
    %v1441 = vmul.f32 1.0, %v1440
    %v1442 = vmul.f32 %v1420, %v1439
    %v1443 = vmul.f32 %v1425, %v1441
    %v1444 = vld [vmem:[%s16] sm:$0xff]
    %v1445 = vld [vmem:[%s16 + $0x8] sm:$0xff]
    %v1446 = vld [vmem:[%s16 + $0x10] sm:$0xff]
    %v1447 = vld [vmem:[%s16 + $0x18] sm:$0xff]
    %v1448 = vld [vmem:[%s16 + $0x20] sm:$0xff]
    %v1449 = vld [vmem:[%s16 + $0x28] sm:$0xff]
    %v1450 = vld [vmem:[%s16 + $0x30] sm:$0xff]
    %v1451 = vld [vmem:[%s16 + $0x38] sm:$0xff]
    %v1452 = vld [vmem:[%s16 + $0x40] sm:$0xff]
    %v1453 = vld [vmem:[%s16 + $0x48] sm:$0xff]
    %v1454 = vld [vmem:[%s16 + $0x50] sm:$0xff]
    %v1455 = vld [vmem:[%s16 + $0x58] sm:$0xff]
    %v1456 = vld [vmem:[%s16 + $0x60] sm:$0xff]
    %v1457 = vld [vmem:[%s16 + $0x68] sm:$0xff]
    %v1458 = vld [vmem:[%s16 + $0x70] sm:$0xff]
    %v1459 = vld [vmem:[%s16 + $0x78] sm:$0xff]
    %1460 = vmatprep.subr.mxu0 0.0
    %1461 = vmatpush1.msra.mxu0 %v1444
    %1462 = vmatprep.subr.mxu0 0.0
    %1463 = vmatpush1.msra.mxu0 %v1445
    %1464 = vmatprep.subr.mxu0 0.0
    %1465 = vmatpush1.msra.mxu0 %v1446
    %1466 = vmatprep.subr.mxu0 0.0
    %1467 = vmatpush1.msra.mxu0 %v1447
    %1468 = vmatprep.subr.mxu0 0.0
    %1469 = vmatpush1.msra.mxu0 %v1448
    %1470 = vmatprep.subr.mxu0 0.0
    %1471 = vmatpush1.msra.mxu0 %v1449
    %1472 = vmatprep.subr.mxu0 0.0
    %1473 = vmatpush1.msra.mxu0 %v1450
    %1474 = vmatprep.subr.mxu0 0.0
    %1475 = vmatpush1.msra.mxu0 %v1451
    %1476 = vmatprep.subr.mxu0 0.0
    %1477 = vmatpush1.msra.mxu0 %v1452
    %1478 = vmatprep.subr.mxu0 0.0
    %1479 = vmatpush1.msra.mxu0 %v1453
    %1480 = vmatprep.subr.mxu0 0.0
    %1481 = vmatpush1.msra.mxu0 %v1454
    %1482 = vmatprep.subr.mxu0 0.0
    %1483 = vmatpush1.msra.mxu0 %v1455
    %1484 = vmatprep.subr.mxu0 0.0
    %1485 = vmatpush1.msra.mxu0 %v1456
    %1486 = vmatprep.subr.mxu0 0.0
    %1487 = vmatpush1.msra.mxu0 %v1457
    %1488 = vmatprep.subr.mxu0 0.0
    %1489 = vmatpush1.msra.mxu0 %v1458
    %1490 = vmatprep.subr.mxu0 0.0
    %1491 = vmatpush1.msra.mxu0 %v1459
    %1492 = vmatprep.subr.mxu0 0.0
    %1493 = vmatpush1.msra.mxu0 0.0
    %1494 = vmatprep.subr.mxu0 0.0
    %1495 = vmatpush1.msra.mxu0 0.0
    %1496 = vmatprep.subr.mxu0 0.0
    %1497 = vmatpush1.msra.mxu0 0.0
    %1498 = vmatprep.subr.mxu0 0.0
    %1499 = vmatpush1.msra.mxu0 0.0
    %1500 = vmatprep.subr.mxu0 0.0
    %1501 = vmatpush1.msra.mxu0 0.0
    %1502 = vmatprep.subr.mxu0 0.0
    %1503 = vmatpush1.msra.mxu0 0.0
    %1504 = vmatprep.subr.mxu0 0.0
    %1505 = vmatpush1.msra.mxu0 0.0
    %1506 = vmatprep.subr.mxu0 0.0
    %1507 = vmatpush1.msra.mxu0 0.0
    %1508 = vmatprep.subr.mxu0 0.0
    %1509 = vmatpush1.msra.mxu0 0.0
    %1510 = vmatprep.subr.mxu0 0.0
    %1511 = vmatpush1.msra.mxu0 0.0
    %1512 = vmatprep.subr.mxu0 0.0
    %1513 = vmatpush1.msra.mxu0 0.0
    %1514 = vmatprep.subr.mxu0 0.0
    %1515 = vmatpush1.msra.mxu0 0.0
    %1516 = vmatprep.subr.mxu0 0.0
    %1517 = vmatpush1.msra.mxu0 0.0
    %1518 = vmatprep.subr.mxu0 0.0
    %1519 = vmatpush1.msra.mxu0 0.0
    %1520 = vmatprep.subr.mxu0 0.0
    %1521 = vmatpush1.msra.mxu0 0.0
    %1522 = vmatprep.subr.mxu0 0.0
    %1523 = vmatpush1.msra.mxu0 0.0
    %1524 = vmatprep.mubr.f32.mxu0 0.0
    %1525 = vmatmul.mubr.f32.gmra.mrb[0].mxu0 %v1442
    %v1526 = vpop.f32.mrb[0].mxu0
    %v1527 = vadd.f32 0.0, %v1526
    %v1528 = vpop.f32.mrb[0].mxu0
    %1529 = vmatprep.mubr.f32.mxu0 0.0
    %1530 = vmatmul.mubr.f32.gmra.mrb[0].mxu0 %v1443
    %v1531 = vpop.f32.mrb[0].mxu0
    %v1532 = vadd.f32 0.0, %v1531
    %v1533 = vpop.f32.mrb[0].mxu0
    %1534 = vdwg.mxu0
    %v1535 = vadd.f32 %v1290, %v1527
    %v1536 = vadd.f32 %v1291, %v1532
    %v1537 = vld [vmem:[%s17] sm:$0x1]
    %v1539 = vlaneseq
    %v1540 = vshrl.u32 %v1539, 7
    %v1541 = vsub.s32 0, %v1540
    %v1542 = vrot.slane %v1537, %v1541
    %v1544 = vadd.f32 %v1535, %v1542
    %v1545 = vadd.f32 %v1536, %v1542
    %s1546 = scalar_lea.vmem %s6, 1
    %v1547 = vld [vmem:[%s1546] sm:$0x1]
    %s1548 = scalar_lea.vmem %s7, 1
    %v1549 = vld [vmem:[%s1548] sm:$0x1]
    %v1550 = vsel %vm183, %v1544, 0.0
    %1551 = vadd.xlane.f32.xlu0 %v1550
    %v1552 = vpop.xlane.xlu0 %1551
    %v1553 = vsel %vm183, %v1545, 0.0
    %1554 = vadd.xlane.f32.xlu0 %v1553
    %v1555 = vpop.xlane.xlu0 %1554
    %v1556 = vmul.f32 %v1552, %v190
    %v1557 = vmul.f32 %v1555, %v190
    %v1558 = vsub.f32 %v1544, %v1556
    %v1559 = vsub.f32 %v1545, %v1557
    %v1560 = vmul.f32 %v1558, %v1558
    %v1561 = vmul.f32 %v1559, %v1559
    %v1562 = vsel %vm183, %v1560, 0.0
    %1563 = vadd.xlane.f32.xlu0 %v1562
    %v1564 = vpop.xlane.xlu0 %1563
    %v1565 = vsel %vm183, %v1561, 0.0
    %1566 = vadd.xlane.f32.xlu0 %v1565
    %v1567 = vpop.xlane.xlu0 %1566
    %v1568 = vmul.f32 %v1564, %v190
    %v1569 = vmul.f32 %v1567, %v190
    %v1570 = vadd.f32 %v1568, 1e-05
    %v1571 = vadd.f32 %v1569, 1e-05
    %v1572 = vrsqrt.pop %v1570
    %v1573 = vrsqrt.pop %v1571
    %v1574 = vmul.f32 %v1558, %v1572
    %v1575 = vmul.f32 %v1559, %v1573
    %v1577 = vlaneseq
    %v1578 = vshrl.u32 %v1577, 7
    %v1579 = vsub.s32 0, %v1578
    %v1580 = vrot.slane %v1547, %v1579
    %v1582 = vmul.f32 %v1574, %v1580
    %v1583 = vmul.f32 %v1575, %v1580
    %v1585 = vlaneseq
    %v1586 = vshrl.u32 %v1585, 7
    %v1587 = vsub.s32 0, %v1586
    %v1588 = vrot.slane %v1549, %v1587
    %v1590 = vadd.f32 %v1582, %v1588
    %v1591 = vadd.f32 %v1583, %v1588
    %s1592 = scalar_lea.vmem %s8, 32
    %v1593 = vld [vmem:[%s1592] sm:$0xff]
    %v1594 = vld [vmem:[%s1592 + $0x8] sm:$0xff]
    %v1595 = vld [vmem:[%s1592 + $0x10] sm:$0xff]
    %v1596 = vld [vmem:[%s1592 + $0x18] sm:$0xff]
    %s1597 = scalar_lea.vmem %s9, 1
    %v1598 = vld [vmem:[%s1597] sm:$0x1]
    %v1600 = vlaneseq
    %v1601 = vshrl.u32 %v1600, 7
    %v1602 = vsub.s32 0, %v1601
    %v1603 = vrot.slane %v1598, %v1602
    %v1606 = vsel %vm183, %v1590, 0
    %v1609 = vsel %vm183, %v1591, 0
    %1611 = vmatprep.subr.mxu0 0.0
    %1612 = vmatpush1.msra.mxu0 %v1593
    %1613 = vmatprep.subr.mxu0 0.0
    %1614 = vmatpush1.msra.mxu0 %v1594
    %1615 = vmatprep.subr.mxu0 0.0
    %1616 = vmatpush1.msra.mxu0 %v1595
    %1617 = vmatprep.subr.mxu0 0.0
    %1618 = vmatpush1.msra.mxu0 %v1596
    %1619 = vmatprep.subr.mxu0 0.0
    %1620 = vmatpush1.msra.mxu0 0.0
    %1621 = vmatprep.subr.mxu0 0.0
    %1622 = vmatpush1.msra.mxu0 0.0
    %1623 = vmatprep.subr.mxu0 0.0
    %1624 = vmatpush1.msra.mxu0 0.0
    %1625 = vmatprep.subr.mxu0 0.0
    %1626 = vmatpush1.msra.mxu0 0.0
    %1627 = vmatprep.subr.mxu0 0.0
    %1628 = vmatpush1.msra.mxu0 0.0
    %1629 = vmatprep.subr.mxu0 0.0
    %1630 = vmatpush1.msra.mxu0 0.0
    %1631 = vmatprep.subr.mxu0 0.0
    %1632 = vmatpush1.msra.mxu0 0.0
    %1633 = vmatprep.subr.mxu0 0.0
    %1634 = vmatpush1.msra.mxu0 0.0
    %1635 = vmatprep.subr.mxu0 0.0
    %1636 = vmatpush1.msra.mxu0 0.0
    %1637 = vmatprep.subr.mxu0 0.0
    %1638 = vmatpush1.msra.mxu0 0.0
    %1639 = vmatprep.subr.mxu0 0.0
    %1640 = vmatpush1.msra.mxu0 0.0
    %1641 = vmatprep.subr.mxu0 0.0
    %1642 = vmatpush1.msra.mxu0 0.0
    %1643 = vmatprep.subr.mxu0 0.0
    %1644 = vmatpush1.msra.mxu0 0.0
    %1645 = vmatprep.subr.mxu0 0.0
    %1646 = vmatpush1.msra.mxu0 0.0
    %1647 = vmatprep.subr.mxu0 0.0
    %1648 = vmatpush1.msra.mxu0 0.0
    %1649 = vmatprep.subr.mxu0 0.0
    %1650 = vmatpush1.msra.mxu0 0.0
    %1651 = vmatprep.subr.mxu0 0.0
    %1652 = vmatpush1.msra.mxu0 0.0
    %1653 = vmatprep.subr.mxu0 0.0
    %1654 = vmatpush1.msra.mxu0 0.0
    %1655 = vmatprep.subr.mxu0 0.0
    %1656 = vmatpush1.msra.mxu0 0.0
    %1657 = vmatprep.subr.mxu0 0.0
    %1658 = vmatpush1.msra.mxu0 0.0
    %1659 = vmatprep.subr.mxu0 0.0
    %1660 = vmatpush1.msra.mxu0 0.0
    %1661 = vmatprep.subr.mxu0 0.0
    %1662 = vmatpush1.msra.mxu0 0.0
    %1663 = vmatprep.subr.mxu0 0.0
    %1664 = vmatpush1.msra.mxu0 0.0
    %1665 = vmatprep.subr.mxu0 0.0
    %1666 = vmatpush1.msra.mxu0 0.0
    %1667 = vmatprep.subr.mxu0 0.0
    %1668 = vmatpush1.msra.mxu0 0.0
    %1669 = vmatprep.subr.mxu0 0.0
    %1670 = vmatpush1.msra.mxu0 0.0
    %1671 = vmatprep.subr.mxu0 0.0
    %1672 = vmatpush1.msra.mxu0 0.0
    %1673 = vmatprep.subr.mxu0 0.0
    %1674 = vmatpush1.msra.mxu0 0.0
    %1675 = vmatprep.mubr.f32.mxu0 0.0
    %1676 = vmatmul.mubr.f32.gmra.mrb[0].mxu0 %v1606
    %v1677 = vpop.f32.mrb[0].mxu0
    %v1678 = vadd.f32 %v1603, %v1677
    %v1679 = vpop.f32.mrb[0].mxu0
    %1680 = vmatprep.mubr.f32.mxu0 0.0
    %1681 = vmatmul.mubr.f32.gmra.mrb[0].mxu0 %v1609
    %v1682 = vpop.f32.mrb[0].mxu0
    %v1683 = vadd.f32 %v1603, %v1682
    %v1684 = vpop.f32.mrb[0].mxu0
    %1685 = vdwg.mxu0
    %1688 = vrot.lane.b32.xlu0 %v1678, 96
    %v1689 = vpop.permute.xlu0 %1688
    %1690 = vrot.lane.b32.xlu0 %v1683, 96
    %v1691 = vpop.permute.xlu0 %1690
    %v1692 = vsel %vm371, %v1678, 0
    %v1694 = vsel %vm371, %v1683, 0
    %v1696 = vsel %vm371, %v1689, 0
    %v1698 = vsel %vm371, %v1691, 0
    %1700 = vmatprep.subr.mxu0 0.0
    %1701 = vmatpush1.xpose.msra.mxu0 %v1696
    %1702 = vmatprep.subr.mxu0 0.0
    %1703 = vmatpush1.xpose.msra.mxu0 %v1698
    %1704 = vmatprep.subr.mxu0 0.0
    %1705 = vmatpush1.xpose.msra.mxu0 0.0
    %1706 = vmatprep.subr.mxu0 0.0
    %1707 = vmatpush1.xpose.msra.mxu0 0.0
    %1708 = vmatprep.subr.mxu0 0.0
    %1709 = vmatpush1.xpose.msra.mxu0 0.0
    %1710 = vmatprep.subr.mxu0 0.0
    %1711 = vmatpush1.xpose.msra.mxu0 0.0
    %1712 = vmatprep.subr.mxu0 0.0
    %1713 = vmatpush1.xpose.msra.mxu0 0.0
    %1714 = vmatprep.subr.mxu0 0.0
    %1715 = vmatpush1.xpose.msra.mxu0 0.0
    %1716 = vmatprep.subr.mxu0 0.0
    %1717 = vmatpush1.xpose.msra.mxu0 0.0
    %1718 = vmatprep.subr.mxu0 0.0
    %1719 = vmatpush1.xpose.msra.mxu0 0.0
    %1720 = vmatprep.subr.mxu0 0.0
    %1721 = vmatpush1.xpose.msra.mxu0 0.0
    %1722 = vmatprep.subr.mxu0 0.0
    %1723 = vmatpush1.xpose.msra.mxu0 0.0
    %1724 = vmatprep.subr.mxu0 0.0
    %1725 = vmatpush1.xpose.msra.mxu0 0.0
    %1726 = vmatprep.subr.mxu0 0.0
    %1727 = vmatpush1.xpose.msra.mxu0 0.0
    %1728 = vmatprep.subr.mxu0 0.0
    %1729 = vmatpush1.xpose.msra.mxu0 0.0
    %1730 = vmatprep.subr.mxu0 0.0
    %1731 = vmatpush1.xpose.msra.mxu0 0.0
    %1732 = vmatprep.subr.mxu0 0.0
    %1733 = vmatpush1.xpose.msra.mxu0 0.0
    %1734 = vmatprep.subr.mxu0 0.0
    %1735 = vmatpush1.xpose.msra.mxu0 0.0
    %1736 = vmatprep.subr.mxu0 0.0
    %1737 = vmatpush1.xpose.msra.mxu0 0.0
    %1738 = vmatprep.subr.mxu0 0.0
    %1739 = vmatpush1.xpose.msra.mxu0 0.0
    %1740 = vmatprep.subr.mxu0 0.0
    %1741 = vmatpush1.xpose.msra.mxu0 0.0
    %1742 = vmatprep.subr.mxu0 0.0
    %1743 = vmatpush1.xpose.msra.mxu0 0.0
    %1744 = vmatprep.subr.mxu0 0.0
    %1745 = vmatpush1.xpose.msra.mxu0 0.0
    %1746 = vmatprep.subr.mxu0 0.0
    %1747 = vmatpush1.xpose.msra.mxu0 0.0
    %1748 = vmatprep.subr.mxu0 0.0
    %1749 = vmatpush1.xpose.msra.mxu0 0.0
    %1750 = vmatprep.subr.mxu0 0.0
    %1751 = vmatpush1.xpose.msra.mxu0 0.0
    %1752 = vmatprep.subr.mxu0 0.0
    %1753 = vmatpush1.xpose.msra.mxu0 0.0
    %1754 = vmatprep.subr.mxu0 0.0
    %1755 = vmatpush1.xpose.msra.mxu0 0.0
    %1756 = vmatprep.subr.mxu0 0.0
    %1757 = vmatpush1.xpose.msra.mxu0 0.0
    %1758 = vmatprep.subr.mxu0 0.0
    %1759 = vmatpush1.xpose.msra.mxu0 0.0
    %1760 = vmatprep.subr.mxu0 0.0
    %1761 = vmatpush1.xpose.msra.mxu0 0.0
    %1762 = vmatprep.subr.mxu0 0.0
    %1763 = vmatpush1.xpose.msra.mxu0 0.0
    %1764 = vmatprep.mubr.f32.mxu0 0.0
    %1765 = vmatmul.mubr.f32.gmra.mrb[0].mxu0 %v1692
    %v1766 = vpop.f32.mrb[0].mxu0
    %v1767 = vadd.f32 %v227, %v1766
    %v1768 = vpop.f32.mrb[0].mxu0
    %1769 = vmatprep.mubr.f32.mxu0 0.0
    %1770 = vmatmul.mubr.f32.gmra.mrb[0].mxu0 %v1694
    %v1771 = vpop.f32.mrb[0].mxu0
    %v1772 = vadd.f32 %v228, %v1771
    %v1773 = vpop.f32.mrb[0].mxu0
    %1774 = vdwg.mxu0
    %v1775 = vsel %vm455, %v1767, -inf
    %1776 = vmax.xlane.f32.xlu0 %v1775
    %v1777 = vpop.xlane.xlu0 %1776
    %v1778 = vsel %vm455, %v1772, -inf
    %1779 = vmax.xlane.f32.xlu0 %v1778
    %v1780 = vpop.xlane.xlu0 %1779
    %v1781 = vsub.f32 %v1767, %v1777
    %v1782 = vsub.f32 %v1772, %v1780
    %v1783 = vmul.f32 %v1781, 1.442695
    %v1784 = vpow.pop %v1783
    %v1785 = vmul.f32 %v1782, 1.442695
    %v1786 = vpow.pop %v1785
    %v1787 = vsel %vm455, %v1784, 0.0
    %1788 = vadd.xlane.f32.xlu0 %v1787
    %v1789 = vpop.xlane.xlu0 %1788
    %v1790 = vsel %vm455, %v1786, 0.0
    %1791 = vadd.xlane.f32.xlu0 %v1790
    %v1792 = vpop.xlane.xlu0 %1791
    %v1793 = vrcp.pop %v1789
    %v1794 = vrcp.pop %v1792
    %v1795 = vmul.f32 %v1784, %v1793
    %v1796 = vmul.f32 %v1786, %v1794
    %1797 = vrot.lane.b32.xlu0 %v1678, 64
    %v1798 = vpop.permute.xlu0 %1797
    %1799 = vrot.lane.b32.xlu0 %v1683, 64
    %v1800 = vpop.permute.xlu0 %1799
    %v1804 = vsel %vm455, %v1795, 0
    %v1807 = vsel %vm455, %v1796, 0
    %1809 = vmatprep.subr.mxu0 0.0
    %1810 = vmatpush1.msra.mxu0 %v1798
    %1811 = vmatprep.subr.mxu0 0.0
    %1812 = vmatpush1.msra.mxu0 %v1800
    %1813 = vmatprep.subr.mxu0 0.0
    %1814 = vmatpush1.msra.mxu0 0.0
    %1815 = vmatprep.subr.mxu0 0.0
    %1816 = vmatpush1.msra.mxu0 0.0
    %1817 = vmatprep.subr.mxu0 0.0
    %1818 = vmatpush1.msra.mxu0 0.0
    %1819 = vmatprep.subr.mxu0 0.0
    %1820 = vmatpush1.msra.mxu0 0.0
    %1821 = vmatprep.subr.mxu0 0.0
    %1822 = vmatpush1.msra.mxu0 0.0
    %1823 = vmatprep.subr.mxu0 0.0
    %1824 = vmatpush1.msra.mxu0 0.0
    %1825 = vmatprep.subr.mxu0 0.0
    %1826 = vmatpush1.msra.mxu0 0.0
    %1827 = vmatprep.subr.mxu0 0.0
    %1828 = vmatpush1.msra.mxu0 0.0
    %1829 = vmatprep.subr.mxu0 0.0
    %1830 = vmatpush1.msra.mxu0 0.0
    %1831 = vmatprep.subr.mxu0 0.0
    %1832 = vmatpush1.msra.mxu0 0.0
    %1833 = vmatprep.subr.mxu0 0.0
    %1834 = vmatpush1.msra.mxu0 0.0
    %1835 = vmatprep.subr.mxu0 0.0
    %1836 = vmatpush1.msra.mxu0 0.0
    %1837 = vmatprep.subr.mxu0 0.0
    %1838 = vmatpush1.msra.mxu0 0.0
    %1839 = vmatprep.subr.mxu0 0.0
    %1840 = vmatpush1.msra.mxu0 0.0
    %1841 = vmatprep.subr.mxu0 0.0
    %1842 = vmatpush1.msra.mxu0 0.0
    %1843 = vmatprep.subr.mxu0 0.0
    %1844 = vmatpush1.msra.mxu0 0.0
    %1845 = vmatprep.subr.mxu0 0.0
    %1846 = vmatpush1.msra.mxu0 0.0
    %1847 = vmatprep.subr.mxu0 0.0
    %1848 = vmatpush1.msra.mxu0 0.0
    %1849 = vmatprep.subr.mxu0 0.0
    %1850 = vmatpush1.msra.mxu0 0.0
    %1851 = vmatprep.subr.mxu0 0.0
    %1852 = vmatpush1.msra.mxu0 0.0
    %1853 = vmatprep.subr.mxu0 0.0
    %1854 = vmatpush1.msra.mxu0 0.0
    %1855 = vmatprep.subr.mxu0 0.0
    %1856 = vmatpush1.msra.mxu0 0.0
    %1857 = vmatprep.subr.mxu0 0.0
    %1858 = vmatpush1.msra.mxu0 0.0
    %1859 = vmatprep.subr.mxu0 0.0
    %1860 = vmatpush1.msra.mxu0 0.0
    %1861 = vmatprep.subr.mxu0 0.0
    %1862 = vmatpush1.msra.mxu0 0.0
    %1863 = vmatprep.subr.mxu0 0.0
    %1864 = vmatpush1.msra.mxu0 0.0
    %1865 = vmatprep.subr.mxu0 0.0
    %1866 = vmatpush1.msra.mxu0 0.0
    %1867 = vmatprep.subr.mxu0 0.0
    %1868 = vmatpush1.msra.mxu0 0.0
    %1869 = vmatprep.subr.mxu0 0.0
    %1870 = vmatpush1.msra.mxu0 0.0
    %1871 = vmatprep.subr.mxu0 0.0
    %1872 = vmatpush1.msra.mxu0 0.0
    %1873 = vmatprep.mubr.f32.mxu0 0.0
    %1874 = vmatmul.mubr.f32.gmra.mrb[0].mxu0 %v1804
    %v1875 = vpop.f32.mrb[0].mxu0
    %v1876 = vadd.f32 0.0, %v1875
    %v1877 = vpop.f32.mrb[0].mxu0
    %1878 = vmatprep.mubr.f32.mxu0 0.0
    %1879 = vmatmul.mubr.f32.gmra.mrb[0].mxu0 %v1807
    %v1880 = vpop.f32.mrb[0].mxu0
    %v1881 = vadd.f32 0.0, %v1880
    %v1882 = vpop.f32.mrb[0].mxu0
    %1883 = vdwg.mxu0
    %1884 = vrot.lane.b32.xlu0 %v1678, 120
    %v1885 = vpop.permute.xlu0 %1884
    %1886 = vrot.lane.b32.xlu0 %v1683, 120
    %v1887 = vpop.permute.xlu0 %1886
    %1888 = vrot.lane.b32.xlu0 %v1678, 88
    %v1889 = vpop.permute.xlu0 %1888
    %1890 = vrot.lane.b32.xlu0 %v1683, 88
    %v1891 = vpop.permute.xlu0 %1890
    %v1892 = vsel %vm371, %v1885, 0
    %v1894 = vsel %vm371, %v1887, 0
    %v1896 = vsel %vm371, %v1889, 0
    %v1898 = vsel %vm371, %v1891, 0
    %1900 = vmatprep.subr.mxu0 0.0
    %1901 = vmatpush1.xpose.msra.mxu0 %v1896
    %1902 = vmatprep.subr.mxu0 0.0
    %1903 = vmatpush1.xpose.msra.mxu0 %v1898
    %1904 = vmatprep.subr.mxu0 0.0
    %1905 = vmatpush1.xpose.msra.mxu0 0.0
    %1906 = vmatprep.subr.mxu0 0.0
    %1907 = vmatpush1.xpose.msra.mxu0 0.0
    %1908 = vmatprep.subr.mxu0 0.0
    %1909 = vmatpush1.xpose.msra.mxu0 0.0
    %1910 = vmatprep.subr.mxu0 0.0
    %1911 = vmatpush1.xpose.msra.mxu0 0.0
    %1912 = vmatprep.subr.mxu0 0.0
    %1913 = vmatpush1.xpose.msra.mxu0 0.0
    %1914 = vmatprep.subr.mxu0 0.0
    %1915 = vmatpush1.xpose.msra.mxu0 0.0
    %1916 = vmatprep.subr.mxu0 0.0
    %1917 = vmatpush1.xpose.msra.mxu0 0.0
    %1918 = vmatprep.subr.mxu0 0.0
    %1919 = vmatpush1.xpose.msra.mxu0 0.0
    %1920 = vmatprep.subr.mxu0 0.0
    %1921 = vmatpush1.xpose.msra.mxu0 0.0
    %1922 = vmatprep.subr.mxu0 0.0
    %1923 = vmatpush1.xpose.msra.mxu0 0.0
    %1924 = vmatprep.subr.mxu0 0.0
    %1925 = vmatpush1.xpose.msra.mxu0 0.0
    %1926 = vmatprep.subr.mxu0 0.0
    %1927 = vmatpush1.xpose.msra.mxu0 0.0
    %1928 = vmatprep.subr.mxu0 0.0
    %1929 = vmatpush1.xpose.msra.mxu0 0.0
    %1930 = vmatprep.subr.mxu0 0.0
    %1931 = vmatpush1.xpose.msra.mxu0 0.0
    %1932 = vmatprep.subr.mxu0 0.0
    %1933 = vmatpush1.xpose.msra.mxu0 0.0
    %1934 = vmatprep.subr.mxu0 0.0
    %1935 = vmatpush1.xpose.msra.mxu0 0.0
    %1936 = vmatprep.subr.mxu0 0.0
    %1937 = vmatpush1.xpose.msra.mxu0 0.0
    %1938 = vmatprep.subr.mxu0 0.0
    %1939 = vmatpush1.xpose.msra.mxu0 0.0
    %1940 = vmatprep.subr.mxu0 0.0
    %1941 = vmatpush1.xpose.msra.mxu0 0.0
    %1942 = vmatprep.subr.mxu0 0.0
    %1943 = vmatpush1.xpose.msra.mxu0 0.0
    %1944 = vmatprep.subr.mxu0 0.0
    %1945 = vmatpush1.xpose.msra.mxu0 0.0
    %1946 = vmatprep.subr.mxu0 0.0
    %1947 = vmatpush1.xpose.msra.mxu0 0.0
    %1948 = vmatprep.subr.mxu0 0.0
    %1949 = vmatpush1.xpose.msra.mxu0 0.0
    %1950 = vmatprep.subr.mxu0 0.0
    %1951 = vmatpush1.xpose.msra.mxu0 0.0
    %1952 = vmatprep.subr.mxu0 0.0
    %1953 = vmatpush1.xpose.msra.mxu0 0.0
    %1954 = vmatprep.subr.mxu0 0.0
    %1955 = vmatpush1.xpose.msra.mxu0 0.0
    %1956 = vmatprep.subr.mxu0 0.0
    %1957 = vmatpush1.xpose.msra.mxu0 0.0
    %1958 = vmatprep.subr.mxu0 0.0
    %1959 = vmatpush1.xpose.msra.mxu0 0.0
    %1960 = vmatprep.subr.mxu0 0.0
    %1961 = vmatpush1.xpose.msra.mxu0 0.0
    %1962 = vmatprep.subr.mxu0 0.0
    %1963 = vmatpush1.xpose.msra.mxu0 0.0
    %1964 = vmatprep.mubr.f32.mxu0 0.0
    %1965 = vmatmul.mubr.f32.gmra.mrb[0].mxu0 %v1892
    %v1966 = vpop.f32.mrb[0].mxu0
    %v1967 = vadd.f32 %v227, %v1966
    %v1968 = vpop.f32.mrb[0].mxu0
    %1969 = vmatprep.mubr.f32.mxu0 0.0
    %1970 = vmatmul.mubr.f32.gmra.mrb[0].mxu0 %v1894
    %v1971 = vpop.f32.mrb[0].mxu0
    %v1972 = vadd.f32 %v228, %v1971
    %v1973 = vpop.f32.mrb[0].mxu0
    %1974 = vdwg.mxu0
    %v1975 = vsel %vm455, %v1967, -inf
    %1976 = vmax.xlane.f32.xlu0 %v1975
    %v1977 = vpop.xlane.xlu0 %1976
    %v1978 = vsel %vm455, %v1972, -inf
    %1979 = vmax.xlane.f32.xlu0 %v1978
    %v1980 = vpop.xlane.xlu0 %1979
    %v1981 = vsub.f32 %v1967, %v1977
    %v1982 = vsub.f32 %v1972, %v1980
    %v1983 = vmul.f32 %v1981, 1.442695
    %v1984 = vpow.pop %v1983
    %v1985 = vmul.f32 %v1982, 1.442695
    %v1986 = vpow.pop %v1985
    %v1987 = vsel %vm455, %v1984, 0.0
    %1988 = vadd.xlane.f32.xlu0 %v1987
    %v1989 = vpop.xlane.xlu0 %1988
    %v1990 = vsel %vm455, %v1986, 0.0
    %1991 = vadd.xlane.f32.xlu0 %v1990
    %v1992 = vpop.xlane.xlu0 %1991
    %v1993 = vrcp.pop %v1989
    %v1994 = vrcp.pop %v1992
    %v1995 = vmul.f32 %v1984, %v1993
    %v1996 = vmul.f32 %v1986, %v1994
    %1997 = vrot.lane.b32.xlu0 %v1678, 56
    %v1998 = vpop.permute.xlu0 %1997
    %1999 = vrot.lane.b32.xlu0 %v1683, 56
    %v2000 = vpop.permute.xlu0 %1999
    %v2004 = vsel %vm455, %v1995, 0
    %v2007 = vsel %vm455, %v1996, 0
    %2009 = vmatprep.subr.mxu0 0.0
    %2010 = vmatpush1.msra.mxu0 %v1998
    %2011 = vmatprep.subr.mxu0 0.0
    %2012 = vmatpush1.msra.mxu0 %v2000
    %2013 = vmatprep.subr.mxu0 0.0
    %2014 = vmatpush1.msra.mxu0 0.0
    %2015 = vmatprep.subr.mxu0 0.0
    %2016 = vmatpush1.msra.mxu0 0.0
    %2017 = vmatprep.subr.mxu0 0.0
    %2018 = vmatpush1.msra.mxu0 0.0
    %2019 = vmatprep.subr.mxu0 0.0
    %2020 = vmatpush1.msra.mxu0 0.0
    %2021 = vmatprep.subr.mxu0 0.0
    %2022 = vmatpush1.msra.mxu0 0.0
    %2023 = vmatprep.subr.mxu0 0.0
    %2024 = vmatpush1.msra.mxu0 0.0
    %2025 = vmatprep.subr.mxu0 0.0
    %2026 = vmatpush1.msra.mxu0 0.0
    %2027 = vmatprep.subr.mxu0 0.0
    %2028 = vmatpush1.msra.mxu0 0.0
    %2029 = vmatprep.subr.mxu0 0.0
    %2030 = vmatpush1.msra.mxu0 0.0
    %2031 = vmatprep.subr.mxu0 0.0
    %2032 = vmatpush1.msra.mxu0 0.0
    %2033 = vmatprep.subr.mxu0 0.0
    %2034 = vmatpush1.msra.mxu0 0.0
    %2035 = vmatprep.subr.mxu0 0.0
    %2036 = vmatpush1.msra.mxu0 0.0
    %2037 = vmatprep.subr.mxu0 0.0
    %2038 = vmatpush1.msra.mxu0 0.0
    %2039 = vmatprep.subr.mxu0 0.0
    %2040 = vmatpush1.msra.mxu0 0.0
    %2041 = vmatprep.subr.mxu0 0.0
    %2042 = vmatpush1.msra.mxu0 0.0
    %2043 = vmatprep.subr.mxu0 0.0
    %2044 = vmatpush1.msra.mxu0 0.0
    %2045 = vmatprep.subr.mxu0 0.0
    %2046 = vmatpush1.msra.mxu0 0.0
    %2047 = vmatprep.subr.mxu0 0.0
    %2048 = vmatpush1.msra.mxu0 0.0
    %2049 = vmatprep.subr.mxu0 0.0
    %2050 = vmatpush1.msra.mxu0 0.0
    %2051 = vmatprep.subr.mxu0 0.0
    %2052 = vmatpush1.msra.mxu0 0.0
    %2053 = vmatprep.subr.mxu0 0.0
    %2054 = vmatpush1.msra.mxu0 0.0
    %2055 = vmatprep.subr.mxu0 0.0
    %2056 = vmatpush1.msra.mxu0 0.0
    %2057 = vmatprep.subr.mxu0 0.0
    %2058 = vmatpush1.msra.mxu0 0.0
    %2059 = vmatprep.subr.mxu0 0.0
    %2060 = vmatpush1.msra.mxu0 0.0
    %2061 = vmatprep.subr.mxu0 0.0
    %2062 = vmatpush1.msra.mxu0 0.0
    %2063 = vmatprep.subr.mxu0 0.0
    %2064 = vmatpush1.msra.mxu0 0.0
    %2065 = vmatprep.subr.mxu0 0.0
    %2066 = vmatpush1.msra.mxu0 0.0
    %2067 = vmatprep.subr.mxu0 0.0
    %2068 = vmatpush1.msra.mxu0 0.0
    %2069 = vmatprep.subr.mxu0 0.0
    %2070 = vmatpush1.msra.mxu0 0.0
    %2071 = vmatprep.subr.mxu0 0.0
    %2072 = vmatpush1.msra.mxu0 0.0
    %2073 = vmatprep.mubr.f32.mxu0 0.0
    %2074 = vmatmul.mubr.f32.gmra.mrb[0].mxu0 %v2004
    %v2075 = vpop.f32.mrb[0].mxu0
    %v2076 = vadd.f32 0.0, %v2075
    %v2077 = vpop.f32.mrb[0].mxu0
    %2078 = vmatprep.mubr.f32.mxu0 0.0
    %2079 = vmatmul.mubr.f32.gmra.mrb[0].mxu0 %v2007
    %v2080 = vpop.f32.mrb[0].mxu0
    %v2081 = vadd.f32 0.0, %v2080
    %v2082 = vpop.f32.mrb[0].mxu0
    %2083 = vdwg.mxu0
    %2084 = vrot.lane.b32.xlu0 %v1678, 112
    %v2085 = vpop.permute.xlu0 %2084
    %2086 = vrot.lane.b32.xlu0 %v1683, 112
    %v2087 = vpop.permute.xlu0 %2086
    %2088 = vrot.lane.b32.xlu0 %v1678, 80
    %v2089 = vpop.permute.xlu0 %2088
    %2090 = vrot.lane.b32.xlu0 %v1683, 80
    %v2091 = vpop.permute.xlu0 %2090
    %v2092 = vsel %vm371, %v2085, 0
    %v2094 = vsel %vm371, %v2087, 0
    %v2096 = vsel %vm371, %v2089, 0
    %v2098 = vsel %vm371, %v2091, 0
    %2100 = vmatprep.subr.mxu0 0.0
    %2101 = vmatpush1.xpose.msra.mxu0 %v2096
    %2102 = vmatprep.subr.mxu0 0.0
    %2103 = vmatpush1.xpose.msra.mxu0 %v2098
    %2104 = vmatprep.subr.mxu0 0.0
    %2105 = vmatpush1.xpose.msra.mxu0 0.0
    %2106 = vmatprep.subr.mxu0 0.0
    %2107 = vmatpush1.xpose.msra.mxu0 0.0
    %2108 = vmatprep.subr.mxu0 0.0
    %2109 = vmatpush1.xpose.msra.mxu0 0.0
    %2110 = vmatprep.subr.mxu0 0.0
    %2111 = vmatpush1.xpose.msra.mxu0 0.0
    %2112 = vmatprep.subr.mxu0 0.0
    %2113 = vmatpush1.xpose.msra.mxu0 0.0
    %2114 = vmatprep.subr.mxu0 0.0
    %2115 = vmatpush1.xpose.msra.mxu0 0.0
    %2116 = vmatprep.subr.mxu0 0.0
    %2117 = vmatpush1.xpose.msra.mxu0 0.0
    %2118 = vmatprep.subr.mxu0 0.0
    %2119 = vmatpush1.xpose.msra.mxu0 0.0
    %2120 = vmatprep.subr.mxu0 0.0
    %2121 = vmatpush1.xpose.msra.mxu0 0.0
    %2122 = vmatprep.subr.mxu0 0.0
    %2123 = vmatpush1.xpose.msra.mxu0 0.0
    %2124 = vmatprep.subr.mxu0 0.0
    %2125 = vmatpush1.xpose.msra.mxu0 0.0
    %2126 = vmatprep.subr.mxu0 0.0
    %2127 = vmatpush1.xpose.msra.mxu0 0.0
    %2128 = vmatprep.subr.mxu0 0.0
    %2129 = vmatpush1.xpose.msra.mxu0 0.0
    %2130 = vmatprep.subr.mxu0 0.0
    %2131 = vmatpush1.xpose.msra.mxu0 0.0
    %2132 = vmatprep.subr.mxu0 0.0
    %2133 = vmatpush1.xpose.msra.mxu0 0.0
    %2134 = vmatprep.subr.mxu0 0.0
    %2135 = vmatpush1.xpose.msra.mxu0 0.0
    %2136 = vmatprep.subr.mxu0 0.0
    %2137 = vmatpush1.xpose.msra.mxu0 0.0
    %2138 = vmatprep.subr.mxu0 0.0
    %2139 = vmatpush1.xpose.msra.mxu0 0.0
    %2140 = vmatprep.subr.mxu0 0.0
    %2141 = vmatpush1.xpose.msra.mxu0 0.0
    %2142 = vmatprep.subr.mxu0 0.0
    %2143 = vmatpush1.xpose.msra.mxu0 0.0
    %2144 = vmatprep.subr.mxu0 0.0
    %2145 = vmatpush1.xpose.msra.mxu0 0.0
    %2146 = vmatprep.subr.mxu0 0.0
    %2147 = vmatpush1.xpose.msra.mxu0 0.0
    %2148 = vmatprep.subr.mxu0 0.0
    %2149 = vmatpush1.xpose.msra.mxu0 0.0
    %2150 = vmatprep.subr.mxu0 0.0
    %2151 = vmatpush1.xpose.msra.mxu0 0.0
    %2152 = vmatprep.subr.mxu0 0.0
    %2153 = vmatpush1.xpose.msra.mxu0 0.0
    %2154 = vmatprep.subr.mxu0 0.0
    %2155 = vmatpush1.xpose.msra.mxu0 0.0
    %2156 = vmatprep.subr.mxu0 0.0
    %2157 = vmatpush1.xpose.msra.mxu0 0.0
    %2158 = vmatprep.subr.mxu0 0.0
    %2159 = vmatpush1.xpose.msra.mxu0 0.0
    %2160 = vmatprep.subr.mxu0 0.0
    %2161 = vmatpush1.xpose.msra.mxu0 0.0
    %2162 = vmatprep.subr.mxu0 0.0
    %2163 = vmatpush1.xpose.msra.mxu0 0.0
    %2164 = vmatprep.mubr.f32.mxu0 0.0
    %2165 = vmatmul.mubr.f32.gmra.mrb[0].mxu0 %v2092
    %v2166 = vpop.f32.mrb[0].mxu0
    %v2167 = vadd.f32 %v227, %v2166
    %v2168 = vpop.f32.mrb[0].mxu0
    %2169 = vmatprep.mubr.f32.mxu0 0.0
    %2170 = vmatmul.mubr.f32.gmra.mrb[0].mxu0 %v2094
    %v2171 = vpop.f32.mrb[0].mxu0
    %v2172 = vadd.f32 %v228, %v2171
    %v2173 = vpop.f32.mrb[0].mxu0
    %2174 = vdwg.mxu0
    %v2175 = vsel %vm455, %v2167, -inf
    %2176 = vmax.xlane.f32.xlu0 %v2175
    %v2177 = vpop.xlane.xlu0 %2176
    %v2178 = vsel %vm455, %v2172, -inf
    %2179 = vmax.xlane.f32.xlu0 %v2178
    %v2180 = vpop.xlane.xlu0 %2179
    %v2181 = vsub.f32 %v2167, %v2177
    %v2182 = vsub.f32 %v2172, %v2180
    %v2183 = vmul.f32 %v2181, 1.442695
    %v2184 = vpow.pop %v2183
    %v2185 = vmul.f32 %v2182, 1.442695
    %v2186 = vpow.pop %v2185
    %v2187 = vsel %vm455, %v2184, 0.0
    %2188 = vadd.xlane.f32.xlu0 %v2187
    %v2189 = vpop.xlane.xlu0 %2188
    %v2190 = vsel %vm455, %v2186, 0.0
    %2191 = vadd.xlane.f32.xlu0 %v2190
    %v2192 = vpop.xlane.xlu0 %2191
    %v2193 = vrcp.pop %v2189
    %v2194 = vrcp.pop %v2192
    %v2195 = vmul.f32 %v2184, %v2193
    %v2196 = vmul.f32 %v2186, %v2194
    %2197 = vrot.lane.b32.xlu0 %v1678, 48
    %v2198 = vpop.permute.xlu0 %2197
    %2199 = vrot.lane.b32.xlu0 %v1683, 48
    %v2200 = vpop.permute.xlu0 %2199
    %v2204 = vsel %vm455, %v2195, 0
    %v2207 = vsel %vm455, %v2196, 0
    %2209 = vmatprep.subr.mxu0 0.0
    %2210 = vmatpush1.msra.mxu0 %v2198
    %2211 = vmatprep.subr.mxu0 0.0
    %2212 = vmatpush1.msra.mxu0 %v2200
    %2213 = vmatprep.subr.mxu0 0.0
    %2214 = vmatpush1.msra.mxu0 0.0
    %2215 = vmatprep.subr.mxu0 0.0
    %2216 = vmatpush1.msra.mxu0 0.0
    %2217 = vmatprep.subr.mxu0 0.0
    %2218 = vmatpush1.msra.mxu0 0.0
    %2219 = vmatprep.subr.mxu0 0.0
    %2220 = vmatpush1.msra.mxu0 0.0
    %2221 = vmatprep.subr.mxu0 0.0
    %2222 = vmatpush1.msra.mxu0 0.0
    %2223 = vmatprep.subr.mxu0 0.0
    %2224 = vmatpush1.msra.mxu0 0.0
    %2225 = vmatprep.subr.mxu0 0.0
    %2226 = vmatpush1.msra.mxu0 0.0
    %2227 = vmatprep.subr.mxu0 0.0
    %2228 = vmatpush1.msra.mxu0 0.0
    %2229 = vmatprep.subr.mxu0 0.0
    %2230 = vmatpush1.msra.mxu0 0.0
    %2231 = vmatprep.subr.mxu0 0.0
    %2232 = vmatpush1.msra.mxu0 0.0
    %2233 = vmatprep.subr.mxu0 0.0
    %2234 = vmatpush1.msra.mxu0 0.0
    %2235 = vmatprep.subr.mxu0 0.0
    %2236 = vmatpush1.msra.mxu0 0.0
    %2237 = vmatprep.subr.mxu0 0.0
    %2238 = vmatpush1.msra.mxu0 0.0
    %2239 = vmatprep.subr.mxu0 0.0
    %2240 = vmatpush1.msra.mxu0 0.0
    %2241 = vmatprep.subr.mxu0 0.0
    %2242 = vmatpush1.msra.mxu0 0.0
    %2243 = vmatprep.subr.mxu0 0.0
    %2244 = vmatpush1.msra.mxu0 0.0
    %2245 = vmatprep.subr.mxu0 0.0
    %2246 = vmatpush1.msra.mxu0 0.0
    %2247 = vmatprep.subr.mxu0 0.0
    %2248 = vmatpush1.msra.mxu0 0.0
    %2249 = vmatprep.subr.mxu0 0.0
    %2250 = vmatpush1.msra.mxu0 0.0
    %2251 = vmatprep.subr.mxu0 0.0
    %2252 = vmatpush1.msra.mxu0 0.0
    %2253 = vmatprep.subr.mxu0 0.0
    %2254 = vmatpush1.msra.mxu0 0.0
    %2255 = vmatprep.subr.mxu0 0.0
    %2256 = vmatpush1.msra.mxu0 0.0
    %2257 = vmatprep.subr.mxu0 0.0
    %2258 = vmatpush1.msra.mxu0 0.0
    %2259 = vmatprep.subr.mxu0 0.0
    %2260 = vmatpush1.msra.mxu0 0.0
    %2261 = vmatprep.subr.mxu0 0.0
    %2262 = vmatpush1.msra.mxu0 0.0
    %2263 = vmatprep.subr.mxu0 0.0
    %2264 = vmatpush1.msra.mxu0 0.0
    %2265 = vmatprep.subr.mxu0 0.0
    %2266 = vmatpush1.msra.mxu0 0.0
    %2267 = vmatprep.subr.mxu0 0.0
    %2268 = vmatpush1.msra.mxu0 0.0
    %2269 = vmatprep.subr.mxu0 0.0
    %2270 = vmatpush1.msra.mxu0 0.0
    %2271 = vmatprep.subr.mxu0 0.0
    %2272 = vmatpush1.msra.mxu0 0.0
    %2273 = vmatprep.mubr.f32.mxu0 0.0
    %2274 = vmatmul.mubr.f32.gmra.mrb[0].mxu0 %v2204
    %v2275 = vpop.f32.mrb[0].mxu0
    %v2276 = vadd.f32 0.0, %v2275
    %v2277 = vpop.f32.mrb[0].mxu0
    %2278 = vmatprep.mubr.f32.mxu0 0.0
    %2279 = vmatmul.mubr.f32.gmra.mrb[0].mxu0 %v2207
    %v2280 = vpop.f32.mrb[0].mxu0
    %v2281 = vadd.f32 0.0, %v2280
    %v2282 = vpop.f32.mrb[0].mxu0
    %2283 = vdwg.mxu0
    %2284 = vrot.lane.b32.xlu0 %v1678, 104
    %v2285 = vpop.permute.xlu0 %2284
    %2286 = vrot.lane.b32.xlu0 %v1683, 104
    %v2287 = vpop.permute.xlu0 %2286
    %2288 = vrot.lane.b32.xlu0 %v1678, 72
    %v2289 = vpop.permute.xlu0 %2288
    %2290 = vrot.lane.b32.xlu0 %v1683, 72
    %v2291 = vpop.permute.xlu0 %2290
    %v2292 = vsel %vm371, %v2285, 0
    %v2294 = vsel %vm371, %v2287, 0
    %v2296 = vsel %vm371, %v2289, 0
    %v2298 = vsel %vm371, %v2291, 0
    %2300 = vmatprep.subr.mxu0 0.0
    %2301 = vmatpush1.xpose.msra.mxu0 %v2296
    %2302 = vmatprep.subr.mxu0 0.0
    %2303 = vmatpush1.xpose.msra.mxu0 %v2298
    %2304 = vmatprep.subr.mxu0 0.0
    %2305 = vmatpush1.xpose.msra.mxu0 0.0
    %2306 = vmatprep.subr.mxu0 0.0
    %2307 = vmatpush1.xpose.msra.mxu0 0.0
    %2308 = vmatprep.subr.mxu0 0.0
    %2309 = vmatpush1.xpose.msra.mxu0 0.0
    %2310 = vmatprep.subr.mxu0 0.0
    %2311 = vmatpush1.xpose.msra.mxu0 0.0
    %2312 = vmatprep.subr.mxu0 0.0
    %2313 = vmatpush1.xpose.msra.mxu0 0.0
    %2314 = vmatprep.subr.mxu0 0.0
    %2315 = vmatpush1.xpose.msra.mxu0 0.0
    %2316 = vmatprep.subr.mxu0 0.0
    %2317 = vmatpush1.xpose.msra.mxu0 0.0
    %2318 = vmatprep.subr.mxu0 0.0
    %2319 = vmatpush1.xpose.msra.mxu0 0.0
    %2320 = vmatprep.subr.mxu0 0.0
    %2321 = vmatpush1.xpose.msra.mxu0 0.0
    %2322 = vmatprep.subr.mxu0 0.0
    %2323 = vmatpush1.xpose.msra.mxu0 0.0
    %2324 = vmatprep.subr.mxu0 0.0
    %2325 = vmatpush1.xpose.msra.mxu0 0.0
    %2326 = vmatprep.subr.mxu0 0.0
    %2327 = vmatpush1.xpose.msra.mxu0 0.0
    %2328 = vmatprep.subr.mxu0 0.0
    %2329 = vmatpush1.xpose.msra.mxu0 0.0
    %2330 = vmatprep.subr.mxu0 0.0
    %2331 = vmatpush1.xpose.msra.mxu0 0.0
    %2332 = vmatprep.subr.mxu0 0.0
    %2333 = vmatpush1.xpose.msra.mxu0 0.0
    %2334 = vmatprep.subr.mxu0 0.0
    %2335 = vmatpush1.xpose.msra.mxu0 0.0
    %2336 = vmatprep.subr.mxu0 0.0
    %2337 = vmatpush1.xpose.msra.mxu0 0.0
    %2338 = vmatprep.subr.mxu0 0.0
    %2339 = vmatpush1.xpose.msra.mxu0 0.0
    %2340 = vmatprep.subr.mxu0 0.0
    %2341 = vmatpush1.xpose.msra.mxu0 0.0
    %2342 = vmatprep.subr.mxu0 0.0
    %2343 = vmatpush1.xpose.msra.mxu0 0.0
    %2344 = vmatprep.subr.mxu0 0.0
    %2345 = vmatpush1.xpose.msra.mxu0 0.0
    %2346 = vmatprep.subr.mxu0 0.0
    %2347 = vmatpush1.xpose.msra.mxu0 0.0
    %2348 = vmatprep.subr.mxu0 0.0
    %2349 = vmatpush1.xpose.msra.mxu0 0.0
    %2350 = vmatprep.subr.mxu0 0.0
    %2351 = vmatpush1.xpose.msra.mxu0 0.0
    %2352 = vmatprep.subr.mxu0 0.0
    %2353 = vmatpush1.xpose.msra.mxu0 0.0
    %2354 = vmatprep.subr.mxu0 0.0
    %2355 = vmatpush1.xpose.msra.mxu0 0.0
    %2356 = vmatprep.subr.mxu0 0.0
    %2357 = vmatpush1.xpose.msra.mxu0 0.0
    %2358 = vmatprep.subr.mxu0 0.0
    %2359 = vmatpush1.xpose.msra.mxu0 0.0
    %2360 = vmatprep.subr.mxu0 0.0
    %2361 = vmatpush1.xpose.msra.mxu0 0.0
    %2362 = vmatprep.subr.mxu0 0.0
    %2363 = vmatpush1.xpose.msra.mxu0 0.0
    %2364 = vmatprep.mubr.f32.mxu0 0.0
    %2365 = vmatmul.mubr.f32.gmra.mrb[0].mxu0 %v2292
    %v2366 = vpop.f32.mrb[0].mxu0
    %v2367 = vadd.f32 %v227, %v2366
    %v2368 = vpop.f32.mrb[0].mxu0
    %2369 = vmatprep.mubr.f32.mxu0 0.0
    %2370 = vmatmul.mubr.f32.gmra.mrb[0].mxu0 %v2294
    %v2371 = vpop.f32.mrb[0].mxu0
    %v2372 = vadd.f32 %v228, %v2371
    %v2373 = vpop.f32.mrb[0].mxu0
    %2374 = vdwg.mxu0
    %v2375 = vsel %vm455, %v2367, -inf
    %2376 = vmax.xlane.f32.xlu0 %v2375
    %v2377 = vpop.xlane.xlu0 %2376
    %v2378 = vsel %vm455, %v2372, -inf
    %2379 = vmax.xlane.f32.xlu0 %v2378
    %v2380 = vpop.xlane.xlu0 %2379
    %v2381 = vsub.f32 %v2367, %v2377
    %v2382 = vsub.f32 %v2372, %v2380
    %v2383 = vmul.f32 %v2381, 1.442695
    %v2384 = vpow.pop %v2383
    %v2385 = vmul.f32 %v2382, 1.442695
    %v2386 = vpow.pop %v2385
    %v2387 = vsel %vm455, %v2384, 0.0
    %2388 = vadd.xlane.f32.xlu0 %v2387
    %v2389 = vpop.xlane.xlu0 %2388
    %v2390 = vsel %vm455, %v2386, 0.0
    %2391 = vadd.xlane.f32.xlu0 %v2390
    %v2392 = vpop.xlane.xlu0 %2391
    %v2393 = vrcp.pop %v2389
    %v2394 = vrcp.pop %v2392
    %v2395 = vmul.f32 %v2384, %v2393
    %v2396 = vmul.f32 %v2386, %v2394
    %2397 = vrot.lane.b32.xlu0 %v1678, 40
    %v2398 = vpop.permute.xlu0 %2397
    %2399 = vrot.lane.b32.xlu0 %v1683, 40
    %v2400 = vpop.permute.xlu0 %2399
    %v2404 = vsel %vm455, %v2395, 0
    %v2407 = vsel %vm455, %v2396, 0
    %2409 = vmatprep.subr.mxu0 0.0
    %2410 = vmatpush1.msra.mxu0 %v2398
    %2411 = vmatprep.subr.mxu0 0.0
    %2412 = vmatpush1.msra.mxu0 %v2400
    %2413 = vmatprep.subr.mxu0 0.0
    %2414 = vmatpush1.msra.mxu0 0.0
    %2415 = vmatprep.subr.mxu0 0.0
    %2416 = vmatpush1.msra.mxu0 0.0
    %2417 = vmatprep.subr.mxu0 0.0
    %2418 = vmatpush1.msra.mxu0 0.0
    %2419 = vmatprep.subr.mxu0 0.0
    %2420 = vmatpush1.msra.mxu0 0.0
    %2421 = vmatprep.subr.mxu0 0.0
    %2422 = vmatpush1.msra.mxu0 0.0
    %2423 = vmatprep.subr.mxu0 0.0
    %2424 = vmatpush1.msra.mxu0 0.0
    %2425 = vmatprep.subr.mxu0 0.0
    %2426 = vmatpush1.msra.mxu0 0.0
    %2427 = vmatprep.subr.mxu0 0.0
    %2428 = vmatpush1.msra.mxu0 0.0
    %2429 = vmatprep.subr.mxu0 0.0
    %2430 = vmatpush1.msra.mxu0 0.0
    %2431 = vmatprep.subr.mxu0 0.0
    %2432 = vmatpush1.msra.mxu0 0.0
    %2433 = vmatprep.subr.mxu0 0.0
    %2434 = vmatpush1.msra.mxu0 0.0
    %2435 = vmatprep.subr.mxu0 0.0
    %2436 = vmatpush1.msra.mxu0 0.0
    %2437 = vmatprep.subr.mxu0 0.0
    %2438 = vmatpush1.msra.mxu0 0.0
    %2439 = vmatprep.subr.mxu0 0.0
    %2440 = vmatpush1.msra.mxu0 0.0
    %2441 = vmatprep.subr.mxu0 0.0
    %2442 = vmatpush1.msra.mxu0 0.0
    %2443 = vmatprep.subr.mxu0 0.0
    %2444 = vmatpush1.msra.mxu0 0.0
    %2445 = vmatprep.subr.mxu0 0.0
    %2446 = vmatpush1.msra.mxu0 0.0
    %2447 = vmatprep.subr.mxu0 0.0
    %2448 = vmatpush1.msra.mxu0 0.0
    %2449 = vmatprep.subr.mxu0 0.0
    %2450 = vmatpush1.msra.mxu0 0.0
    %2451 = vmatprep.subr.mxu0 0.0
    %2452 = vmatpush1.msra.mxu0 0.0
    %2453 = vmatprep.subr.mxu0 0.0
    %2454 = vmatpush1.msra.mxu0 0.0
    %2455 = vmatprep.subr.mxu0 0.0
    %2456 = vmatpush1.msra.mxu0 0.0
    %2457 = vmatprep.subr.mxu0 0.0
    %2458 = vmatpush1.msra.mxu0 0.0
    %2459 = vmatprep.subr.mxu0 0.0
    %2460 = vmatpush1.msra.mxu0 0.0
    %2461 = vmatprep.subr.mxu0 0.0
    %2462 = vmatpush1.msra.mxu0 0.0
    %2463 = vmatprep.subr.mxu0 0.0
    %2464 = vmatpush1.msra.mxu0 0.0
    %2465 = vmatprep.subr.mxu0 0.0
    %2466 = vmatpush1.msra.mxu0 0.0
    %2467 = vmatprep.subr.mxu0 0.0
    %2468 = vmatpush1.msra.mxu0 0.0
    %2469 = vmatprep.subr.mxu0 0.0
    %2470 = vmatpush1.msra.mxu0 0.0
    %2471 = vmatprep.subr.mxu0 0.0
    %2472 = vmatpush1.msra.mxu0 0.0
    %2473 = vmatprep.mubr.f32.mxu0 0.0
    %2474 = vmatmul.mubr.f32.gmra.mrb[0].mxu0 %v2404
    %v2475 = vpop.f32.mrb[0].mxu0
    %v2476 = vadd.f32 0.0, %v2475
    %v2477 = vpop.f32.mrb[0].mxu0
    %2478 = vmatprep.mubr.f32.mxu0 0.0
    %2479 = vmatmul.mubr.f32.gmra.mrb[0].mxu0 %v2407
    %v2480 = vpop.f32.mrb[0].mxu0
    %v2481 = vadd.f32 0.0, %v2480
    %v2482 = vpop.f32.mrb[0].mxu0
    %2483 = vdwg.mxu0
    %2486 = vrot.lane.b32.xlu0 %v2076, 8
    %v2487 = vpop.permute.xlu0 %2486
    %2488 = vrot.lane.b32.xlu0 %v2081, 8
    %v2489 = vpop.permute.xlu0 %2488
    %2494 = vrot.lane.b32.xlu0 %v2276, 16
    %v2495 = vpop.permute.xlu0 %2494
    %2496 = vrot.lane.b32.xlu0 %v2281, 16
    %v2497 = vpop.permute.xlu0 %2496
    %2502 = vrot.lane.b32.xlu0 %v2476, 24
    %v2503 = vpop.permute.xlu0 %2502
    %2504 = vrot.lane.b32.xlu0 %v2481, 24
    %v2505 = vpop.permute.xlu0 %2504
    %v2508 = vsel %vm371, %v1876, %v2487
    %v2509 = vsel %vm371, %v1881, %v2489
    %v2510 = vsel %vm455, %v2508, %v2495
    %v2511 = vsel %vm455, %v2509, %v2497
    %v2512 = vsel %vm1193, %v2510, %v2503
    %v2513 = vsel %vm1193, %v2511, %v2505
    %s2514 = scalar_lea.vmem %s10, 32
    %v2515 = vld [vmem:[%s2514] sm:$0xff]
    %v2516 = vld [vmem:[%s2514 + $0x8] sm:$0xff]
    %v2517 = vld [vmem:[%s2514 + $0x10] sm:$0xff]
    %v2518 = vld [vmem:[%s2514 + $0x18] sm:$0xff]
    %v2520 = vsel %vm183, %v2512, 0
    %v2523 = vsel %vm183, %v2513, 0
    %2525 = vmatprep.subr.mxu0 0.0
    %2526 = vmatpush1.msra.mxu0 %v2515
    %2527 = vmatprep.subr.mxu0 0.0
    %2528 = vmatpush1.msra.mxu0 %v2516
    %2529 = vmatprep.subr.mxu0 0.0
    %2530 = vmatpush1.msra.mxu0 %v2517
    %2531 = vmatprep.subr.mxu0 0.0
    %2532 = vmatpush1.msra.mxu0 %v2518
    %2533 = vmatprep.subr.mxu0 0.0
    %2534 = vmatpush1.msra.mxu0 0.0
    %2535 = vmatprep.subr.mxu0 0.0
    %2536 = vmatpush1.msra.mxu0 0.0
    %2537 = vmatprep.subr.mxu0 0.0
    %2538 = vmatpush1.msra.mxu0 0.0
    %2539 = vmatprep.subr.mxu0 0.0
    %2540 = vmatpush1.msra.mxu0 0.0
    %2541 = vmatprep.subr.mxu0 0.0
    %2542 = vmatpush1.msra.mxu0 0.0
    %2543 = vmatprep.subr.mxu0 0.0
    %2544 = vmatpush1.msra.mxu0 0.0
    %2545 = vmatprep.subr.mxu0 0.0
    %2546 = vmatpush1.msra.mxu0 0.0
    %2547 = vmatprep.subr.mxu0 0.0
    %2548 = vmatpush1.msra.mxu0 0.0
    %2549 = vmatprep.subr.mxu0 0.0
    %2550 = vmatpush1.msra.mxu0 0.0
    %2551 = vmatprep.subr.mxu0 0.0
    %2552 = vmatpush1.msra.mxu0 0.0
    %2553 = vmatprep.subr.mxu0 0.0
    %2554 = vmatpush1.msra.mxu0 0.0
    %2555 = vmatprep.subr.mxu0 0.0
    %2556 = vmatpush1.msra.mxu0 0.0
    %2557 = vmatprep.subr.mxu0 0.0
    %2558 = vmatpush1.msra.mxu0 0.0
    %2559 = vmatprep.subr.mxu0 0.0
    %2560 = vmatpush1.msra.mxu0 0.0
    %2561 = vmatprep.subr.mxu0 0.0
    %2562 = vmatpush1.msra.mxu0 0.0
    %2563 = vmatprep.subr.mxu0 0.0
    %2564 = vmatpush1.msra.mxu0 0.0
    %2565 = vmatprep.subr.mxu0 0.0
    %2566 = vmatpush1.msra.mxu0 0.0
    %2567 = vmatprep.subr.mxu0 0.0
    %2568 = vmatpush1.msra.mxu0 0.0
    %2569 = vmatprep.subr.mxu0 0.0
    %2570 = vmatpush1.msra.mxu0 0.0
    %2571 = vmatprep.subr.mxu0 0.0
    %2572 = vmatpush1.msra.mxu0 0.0
    %2573 = vmatprep.subr.mxu0 0.0
    %2574 = vmatpush1.msra.mxu0 0.0
    %2575 = vmatprep.subr.mxu0 0.0
    %2576 = vmatpush1.msra.mxu0 0.0
    %2577 = vmatprep.subr.mxu0 0.0
    %2578 = vmatpush1.msra.mxu0 0.0
    %2579 = vmatprep.subr.mxu0 0.0
    %2580 = vmatpush1.msra.mxu0 0.0
    %2581 = vmatprep.subr.mxu0 0.0
    %2582 = vmatpush1.msra.mxu0 0.0
    %2583 = vmatprep.subr.mxu0 0.0
    %2584 = vmatpush1.msra.mxu0 0.0
    %2585 = vmatprep.subr.mxu0 0.0
    %2586 = vmatpush1.msra.mxu0 0.0
    %2587 = vmatprep.subr.mxu0 0.0
    %2588 = vmatpush1.msra.mxu0 0.0
    %2589 = vmatprep.mubr.f32.mxu0 0.0
    %2590 = vmatmul.mubr.f32.gmra.mrb[0].mxu0 %v2520
    %v2591 = vpop.f32.mrb[0].mxu0
    %v2592 = vadd.f32 0.0, %v2591
    %v2593 = vpop.f32.mrb[0].mxu0
    %2594 = vmatprep.mubr.f32.mxu0 0.0
    %2595 = vmatmul.mubr.f32.gmra.mrb[0].mxu0 %v2523
    %v2596 = vpop.f32.mrb[0].mxu0
    %v2597 = vadd.f32 0.0, %v2596
    %v2598 = vpop.f32.mrb[0].mxu0
    %2599 = vdwg.mxu0
    %v2600 = vadd.f32 %v1544, %v2592
    %v2601 = vadd.f32 %v1545, %v2597
    %s2602 = scalar_lea.vmem %s11, 1
    %v2603 = vld [vmem:[%s2602] sm:$0x1]
    %v2605 = vlaneseq
    %v2606 = vshrl.u32 %v2605, 7
    %v2607 = vsub.s32 0, %v2606
    %v2608 = vrot.slane %v2603, %v2607
    %v2610 = vadd.f32 %v2600, %v2608
    %v2611 = vadd.f32 %v2601, %v2608
    %s2612 = scalar_lea.vmem %s12, 1
    %v2613 = vld [vmem:[%s2612] sm:$0x1]
    %s2614 = scalar_lea.vmem %s13, 1
    %v2615 = vld [vmem:[%s2614] sm:$0x1]
    %v2616 = vsel %vm183, %v2610, 0.0
    %2617 = vadd.xlane.f32.xlu0 %v2616
    %v2618 = vpop.xlane.xlu0 %2617
    %v2619 = vsel %vm183, %v2611, 0.0
    %2620 = vadd.xlane.f32.xlu0 %v2619
    %v2621 = vpop.xlane.xlu0 %2620
    %v2622 = vmul.f32 %v2618, %v190
    %v2623 = vmul.f32 %v2621, %v190
    %v2624 = vsub.f32 %v2610, %v2622
    %v2625 = vsub.f32 %v2611, %v2623
    %v2626 = vmul.f32 %v2624, %v2624
    %v2627 = vmul.f32 %v2625, %v2625
    %v2628 = vsel %vm183, %v2626, 0.0
    %2629 = vadd.xlane.f32.xlu0 %v2628
    %v2630 = vpop.xlane.xlu0 %2629
    %v2631 = vsel %vm183, %v2627, 0.0
    %2632 = vadd.xlane.f32.xlu0 %v2631
    %v2633 = vpop.xlane.xlu0 %2632
    %v2634 = vmul.f32 %v2630, %v190
    %v2635 = vmul.f32 %v2633, %v190
    %v2636 = vadd.f32 %v2634, 1e-05
    %v2637 = vadd.f32 %v2635, 1e-05
    %v2638 = vrsqrt.pop %v2636
    %v2639 = vrsqrt.pop %v2637
    %v2640 = vmul.f32 %v2624, %v2638
    %v2641 = vmul.f32 %v2625, %v2639
    %v2643 = vlaneseq
    %v2644 = vshrl.u32 %v2643, 7
    %v2645 = vsub.s32 0, %v2644
    %v2646 = vrot.slane %v2613, %v2645
    %v2648 = vmul.f32 %v2640, %v2646
    %v2649 = vmul.f32 %v2641, %v2646
    %v2651 = vlaneseq
    %v2652 = vshrl.u32 %v2651, 7
    %v2653 = vsub.s32 0, %v2652
    %v2654 = vrot.slane %v2615, %v2653
    %v2656 = vadd.f32 %v2648, %v2654
    %v2657 = vadd.f32 %v2649, %v2654
    %s2658 = scalar_lea.vmem %s14, 32
    %v2659 = vld [vmem:[%s2658] sm:$0xff]
    %v2660 = vld [vmem:[%s2658 + $0x8] sm:$0xff]
    %v2661 = vld [vmem:[%s2658 + $0x10] sm:$0xff]
    %v2662 = vld [vmem:[%s2658 + $0x18] sm:$0xff]
    %s2663 = scalar_lea.vmem %s15, 1
    %v2664 = vld [vmem:[%s2663] sm:$0x1]
    %v2666 = vlaneseq
    %v2667 = vshrl.u32 %v2666, 7
    %v2668 = vsub.s32 0, %v2667
    %v2669 = vrot.slane %v2664, %v2668
    %v2672 = vsel %vm183, %v2656, 0
    %v2675 = vsel %vm183, %v2657, 0
    %2677 = vmatprep.subr.mxu0 0.0
    %2678 = vmatpush1.msra.mxu0 %v2659
    %2679 = vmatprep.subr.mxu0 0.0
    %2680 = vmatpush1.msra.mxu0 %v2660
    %2681 = vmatprep.subr.mxu0 0.0
    %2682 = vmatpush1.msra.mxu0 %v2661
    %2683 = vmatprep.subr.mxu0 0.0
    %2684 = vmatpush1.msra.mxu0 %v2662
    %2685 = vmatprep.subr.mxu0 0.0
    %2686 = vmatpush1.msra.mxu0 0.0
    %2687 = vmatprep.subr.mxu0 0.0
    %2688 = vmatpush1.msra.mxu0 0.0
    %2689 = vmatprep.subr.mxu0 0.0
    %2690 = vmatpush1.msra.mxu0 0.0
    %2691 = vmatprep.subr.mxu0 0.0
    %2692 = vmatpush1.msra.mxu0 0.0
    %2693 = vmatprep.subr.mxu0 0.0
    %2694 = vmatpush1.msra.mxu0 0.0
    %2695 = vmatprep.subr.mxu0 0.0
    %2696 = vmatpush1.msra.mxu0 0.0
    %2697 = vmatprep.subr.mxu0 0.0
    %2698 = vmatpush1.msra.mxu0 0.0
    %2699 = vmatprep.subr.mxu0 0.0
    %2700 = vmatpush1.msra.mxu0 0.0
    %2701 = vmatprep.subr.mxu0 0.0
    %2702 = vmatpush1.msra.mxu0 0.0
    %2703 = vmatprep.subr.mxu0 0.0
    %2704 = vmatpush1.msra.mxu0 0.0
    %2705 = vmatprep.subr.mxu0 0.0
    %2706 = vmatpush1.msra.mxu0 0.0
    %2707 = vmatprep.subr.mxu0 0.0
    %2708 = vmatpush1.msra.mxu0 0.0
    %2709 = vmatprep.subr.mxu0 0.0
    %2710 = vmatpush1.msra.mxu0 0.0
    %2711 = vmatprep.subr.mxu0 0.0
    %2712 = vmatpush1.msra.mxu0 0.0
    %2713 = vmatprep.subr.mxu0 0.0
    %2714 = vmatpush1.msra.mxu0 0.0
    %2715 = vmatprep.subr.mxu0 0.0
    %2716 = vmatpush1.msra.mxu0 0.0
    %2717 = vmatprep.subr.mxu0 0.0
    %2718 = vmatpush1.msra.mxu0 0.0
    %2719 = vmatprep.subr.mxu0 0.0
    %2720 = vmatpush1.msra.mxu0 0.0
    %2721 = vmatprep.subr.mxu0 0.0
    %2722 = vmatpush1.msra.mxu0 0.0
    %2723 = vmatprep.subr.mxu0 0.0
    %2724 = vmatpush1.msra.mxu0 0.0
    %2725 = vmatprep.subr.mxu0 0.0
    %2726 = vmatpush1.msra.mxu0 0.0
    %2727 = vmatprep.subr.mxu0 0.0
    %2728 = vmatpush1.msra.mxu0 0.0
    %2729 = vmatprep.subr.mxu0 0.0
    %2730 = vmatpush1.msra.mxu0 0.0
    %2731 = vmatprep.subr.mxu0 0.0
    %2732 = vmatpush1.msra.mxu0 0.0
    %2733 = vmatprep.subr.mxu0 0.0
    %2734 = vmatpush1.msra.mxu0 0.0
    %2735 = vmatprep.subr.mxu0 0.0
    %2736 = vmatpush1.msra.mxu0 0.0
    %2737 = vmatprep.subr.mxu0 0.0
    %2738 = vmatpush1.msra.mxu0 0.0
    %2739 = vmatprep.subr.mxu0 0.0
    %2740 = vmatpush1.msra.mxu0 0.0
    %2741 = vmatprep.mubr.f32.mxu0 0.0
    %2742 = vmatmul.mubr.f32.gmra.mrb[0].mxu0 %v2672
    %v2743 = vpop.f32.mrb[0].mxu0
    %v2744 = vadd.f32 %v2669, %v2743
    %v2745 = vpop.f32.mrb[0].mxu0
    %2746 = vmatprep.mubr.f32.mxu0 0.0
    %2747 = vmatmul.mubr.f32.gmra.mrb[0].mxu0 %v2675
    %v2748 = vpop.f32.mrb[0].mxu0
    %v2749 = vadd.f32 %v2669, %v2748
    %v2750 = vpop.f32.mrb[0].mxu0
    %2751 = vdwg.mxu0
    %v2752 = vmul.f32 %v2744, 1.702
    %v2753 = vmul.f32 %v2749, 1.702
    %v2754 = vxor.u32 %v2752, 2147483648
    %v2755 = vxor.u32 %v2753, 2147483648
    %v2756 = vmul.f32 %v2754, 1.442695
    %v2757 = vpow.pop %v2756
    %v2758 = vmul.f32 %v2755, 1.442695
    %v2759 = vpow.pop %v2758
    %v2760 = vadd.f32 %v2757, 1.0
    %v2761 = vadd.f32 %v2759, 1.0
    %v2762 = vrcp.pop %v2760
    %v2763 = vmul.f32 1.0, %v2762
    %v2764 = vrcp.pop %v2761
    %v2765 = vmul.f32 1.0, %v2764
    %v2766 = vmul.f32 %v2744, %v2763
    %v2767 = vmul.f32 %v2749, %v2765
    %s2768 = scalar_lea.vmem %s16, 128
    %v2769 = vld [vmem:[%s2768] sm:$0xff]
    %v2770 = vld [vmem:[%s2768 + $0x8] sm:$0xff]
    %v2771 = vld [vmem:[%s2768 + $0x10] sm:$0xff]
    %v2772 = vld [vmem:[%s2768 + $0x18] sm:$0xff]
    %v2773 = vld [vmem:[%s2768 + $0x20] sm:$0xff]
    %v2774 = vld [vmem:[%s2768 + $0x28] sm:$0xff]
    %v2775 = vld [vmem:[%s2768 + $0x30] sm:$0xff]
    %v2776 = vld [vmem:[%s2768 + $0x38] sm:$0xff]
    %v2777 = vld [vmem:[%s2768 + $0x40] sm:$0xff]
    %v2778 = vld [vmem:[%s2768 + $0x48] sm:$0xff]
    %v2779 = vld [vmem:[%s2768 + $0x50] sm:$0xff]
    %v2780 = vld [vmem:[%s2768 + $0x58] sm:$0xff]
    %v2781 = vld [vmem:[%s2768 + $0x60] sm:$0xff]
    %v2782 = vld [vmem:[%s2768 + $0x68] sm:$0xff]
    %v2783 = vld [vmem:[%s2768 + $0x70] sm:$0xff]
    %v2784 = vld [vmem:[%s2768 + $0x78] sm:$0xff]
    %2785 = vmatprep.subr.mxu0 0.0
    %2786 = vmatpush1.msra.mxu0 %v2769
    %2787 = vmatprep.subr.mxu0 0.0
    %2788 = vmatpush1.msra.mxu0 %v2770
    %2789 = vmatprep.subr.mxu0 0.0
    %2790 = vmatpush1.msra.mxu0 %v2771
    %2791 = vmatprep.subr.mxu0 0.0
    %2792 = vmatpush1.msra.mxu0 %v2772
    %2793 = vmatprep.subr.mxu0 0.0
    %2794 = vmatpush1.msra.mxu0 %v2773
    %2795 = vmatprep.subr.mxu0 0.0
    %2796 = vmatpush1.msra.mxu0 %v2774
    %2797 = vmatprep.subr.mxu0 0.0
    %2798 = vmatpush1.msra.mxu0 %v2775
    %2799 = vmatprep.subr.mxu0 0.0
    %2800 = vmatpush1.msra.mxu0 %v2776
    %2801 = vmatprep.subr.mxu0 0.0
    %2802 = vmatpush1.msra.mxu0 %v2777
    %2803 = vmatprep.subr.mxu0 0.0
    %2804 = vmatpush1.msra.mxu0 %v2778
    %2805 = vmatprep.subr.mxu0 0.0
    %2806 = vmatpush1.msra.mxu0 %v2779
    %2807 = vmatprep.subr.mxu0 0.0
    %2808 = vmatpush1.msra.mxu0 %v2780
    %2809 = vmatprep.subr.mxu0 0.0
    %2810 = vmatpush1.msra.mxu0 %v2781
    %2811 = vmatprep.subr.mxu0 0.0
    %2812 = vmatpush1.msra.mxu0 %v2782
    %2813 = vmatprep.subr.mxu0 0.0
    %2814 = vmatpush1.msra.mxu0 %v2783
    %2815 = vmatprep.subr.mxu0 0.0
    %2816 = vmatpush1.msra.mxu0 %v2784
    %2817 = vmatprep.subr.mxu0 0.0
    %2818 = vmatpush1.msra.mxu0 0.0
    %2819 = vmatprep.subr.mxu0 0.0
    %2820 = vmatpush1.msra.mxu0 0.0
    %2821 = vmatprep.subr.mxu0 0.0
    %2822 = vmatpush1.msra.mxu0 0.0
    %2823 = vmatprep.subr.mxu0 0.0
    %2824 = vmatpush1.msra.mxu0 0.0
    %2825 = vmatprep.subr.mxu0 0.0
    %2826 = vmatpush1.msra.mxu0 0.0
    %2827 = vmatprep.subr.mxu0 0.0
    %2828 = vmatpush1.msra.mxu0 0.0
    %2829 = vmatprep.subr.mxu0 0.0
    %2830 = vmatpush1.msra.mxu0 0.0
    %2831 = vmatprep.subr.mxu0 0.0
    %2832 = vmatpush1.msra.mxu0 0.0
    %2833 = vmatprep.subr.mxu0 0.0
    %2834 = vmatpush1.msra.mxu0 0.0
    %2835 = vmatprep.subr.mxu0 0.0
    %2836 = vmatpush1.msra.mxu0 0.0
    %2837 = vmatprep.subr.mxu0 0.0
    %2838 = vmatpush1.msra.mxu0 0.0
    %2839 = vmatprep.subr.mxu0 0.0
    %2840 = vmatpush1.msra.mxu0 0.0
    %2841 = vmatprep.subr.mxu0 0.0
    %2842 = vmatpush1.msra.mxu0 0.0
    %2843 = vmatprep.subr.mxu0 0.0
    %2844 = vmatpush1.msra.mxu0 0.0
    %2845 = vmatprep.subr.mxu0 0.0
    %2846 = vmatpush1.msra.mxu0 0.0
    %2847 = vmatprep.subr.mxu0 0.0
    %2848 = vmatpush1.msra.mxu0 0.0
    %2849 = vmatprep.mubr.f32.mxu0 0.0
    %2850 = vmatmul.mubr.f32.gmra.mrb[0].mxu0 %v2766
    %v2851 = vpop.f32.mrb[0].mxu0
    %v2852 = vadd.f32 0.0, %v2851
    %v2853 = vpop.f32.mrb[0].mxu0
    %2854 = vmatprep.mubr.f32.mxu0 0.0
    %2855 = vmatmul.mubr.f32.gmra.mrb[0].mxu0 %v2767
    %v2856 = vpop.f32.mrb[0].mxu0
    %v2857 = vadd.f32 0.0, %v2856
    %v2858 = vpop.f32.mrb[0].mxu0
    %2859 = vdwg.mxu0
    %v2860 = vadd.f32 %v2610, %v2852
    %v2861 = vadd.f32 %v2611, %v2857
    %s2862 = scalar_lea.vmem %s17, 1
    %v2863 = vld [vmem:[%s2862] sm:$0x1]
    %v2865 = vlaneseq
    %v2866 = vshrl.u32 %v2865, 7
    %v2867 = vsub.s32 0, %v2866
    %v2868 = vrot.slane %v2863, %v2867
    %v2870 = vadd.f32 %v2860, %v2868
    %v2871 = vadd.f32 %v2861, %v2868
    %v2873 = vrot.slane %v2871, 7
    %vm2875 = vcmask 1040384
    %v2876 = vsel %vm2875, %v2870, %v2873
    %v2877 = vld [vmem:[%s18] sm:$0x1]
    %v2878 = vld [vmem:[%s19] sm:$0x1]
    %vm2879 = vcmask 254976
    %v2880 = vsel %vm2879, %v2876, 0.0
    %2881 = vadd.xlane.f32.xlu0 %v2880
    %v2882 = vpop.xlane.xlu0 %2881
    %v2883 = vmul.f32 %v2882, %v190
    %v2884 = vsub.f32 %v2876, %v2883
    %v2885 = vmul.f32 %v2884, %v2884
    %v2886 = vsel %vm2879, %v2885, 0.0
    %2887 = vadd.xlane.f32.xlu0 %v2886
    %v2888 = vpop.xlane.xlu0 %2887
    %v2889 = vmul.f32 %v2888, %v190
    %v2890 = vadd.f32 %v2889, 1e-05
    %v2891 = vrsqrt.pop %v2890
    %v2892 = vmul.f32 %v2884, %v2891
    %v2894 = vlaneseq
    %v2895 = vshrl.u32 %v2894, 7
    %v2896 = vsub.s32 0, %v2895
    %v2897 = vrot.slane %v2877, %v2896
    %v2899 = vmul.f32 %v2892, %v2897
    %v2901 = vlaneseq
    %v2902 = vshrl.u32 %v2901, 7
    %v2903 = vsub.s32 0, %v2902
    %v2904 = vrot.slane %v2878, %v2903
    %v2906 = vadd.f32 %v2899, %v2904
    %v2907 = vld [vmem:[%s20] sm:$0xff]
    %v2908 = vld [vmem:[%s20 + $0x8] sm:$0xff]
    %v2909 = vld [vmem:[%s20 + $0x10] sm:$0xff]
    %v2910 = vld [vmem:[%s20 + $0x18] sm:$0xff]
    %v2912 = vsel %vm183, %v2906, 0
    %2914 = vmatprep.subr.mxu0 0.0
    %2915 = vmatpush1.msra.mxu0 %v2907
    %2916 = vmatprep.subr.mxu0 0.0
    %2917 = vmatpush1.msra.mxu0 %v2908
    %2918 = vmatprep.subr.mxu0 0.0
    %2919 = vmatpush1.msra.mxu0 %v2909
    %2920 = vmatprep.subr.mxu0 0.0
    %2921 = vmatpush1.msra.mxu0 %v2910
    %2922 = vmatprep.subr.mxu0 0.0
    %2923 = vmatpush1.msra.mxu0 0.0
    %2924 = vmatprep.subr.mxu0 0.0
    %2925 = vmatpush1.msra.mxu0 0.0
    %2926 = vmatprep.subr.mxu0 0.0
    %2927 = vmatpush1.msra.mxu0 0.0
    %2928 = vmatprep.subr.mxu0 0.0
    %2929 = vmatpush1.msra.mxu0 0.0
    %2930 = vmatprep.subr.mxu0 0.0
    %2931 = vmatpush1.msra.mxu0 0.0
    %2932 = vmatprep.subr.mxu0 0.0
    %2933 = vmatpush1.msra.mxu0 0.0
    %2934 = vmatprep.subr.mxu0 0.0
    %2935 = vmatpush1.msra.mxu0 0.0
    %2936 = vmatprep.subr.mxu0 0.0
    %2937 = vmatpush1.msra.mxu0 0.0
    %2938 = vmatprep.subr.mxu0 0.0
    %2939 = vmatpush1.msra.mxu0 0.0
    %2940 = vmatprep.subr.mxu0 0.0
    %2941 = vmatpush1.msra.mxu0 0.0
    %2942 = vmatprep.subr.mxu0 0.0
    %2943 = vmatpush1.msra.mxu0 0.0
    %2944 = vmatprep.subr.mxu0 0.0
    %2945 = vmatpush1.msra.mxu0 0.0
    %2946 = vmatprep.subr.mxu0 0.0
    %2947 = vmatpush1.msra.mxu0 0.0
    %2948 = vmatprep.subr.mxu0 0.0
    %2949 = vmatpush1.msra.mxu0 0.0
    %2950 = vmatprep.subr.mxu0 0.0
    %2951 = vmatpush1.msra.mxu0 0.0
    %2952 = vmatprep.subr.mxu0 0.0
    %2953 = vmatpush1.msra.mxu0 0.0
    %2954 = vmatprep.subr.mxu0 0.0
    %2955 = vmatpush1.msra.mxu0 0.0
    %2956 = vmatprep.subr.mxu0 0.0
    %2957 = vmatpush1.msra.mxu0 0.0
    %2958 = vmatprep.subr.mxu0 0.0
    %2959 = vmatpush1.msra.mxu0 0.0
    %2960 = vmatprep.subr.mxu0 0.0
    %2961 = vmatpush1.msra.mxu0 0.0
    %2962 = vmatprep.subr.mxu0 0.0
    %2963 = vmatpush1.msra.mxu0 0.0
    %2964 = vmatprep.subr.mxu0 0.0
    %2965 = vmatpush1.msra.mxu0 0.0
    %2966 = vmatprep.subr.mxu0 0.0
    %2967 = vmatpush1.msra.mxu0 0.0
    %2968 = vmatprep.subr.mxu0 0.0
    %2969 = vmatpush1.msra.mxu0 0.0
    %2970 = vmatprep.subr.mxu0 0.0
    %2971 = vmatpush1.msra.mxu0 0.0
    %2972 = vmatprep.subr.mxu0 0.0
    %2973 = vmatpush1.msra.mxu0 0.0
    %2974 = vmatprep.subr.mxu0 0.0
    %2975 = vmatpush1.msra.mxu0 0.0
    %2976 = vmatprep.subr.mxu0 0.0
    %2977 = vmatpush1.msra.mxu0 0.0
    %2978 = vmatprep.mubr.f32.mxu0 0.0
    %2979 = vmatmul.mubr.f32.gmra.mrb[0].mxu0 %v2912
    %v2980 = vpop.f32.mrb[0].mxu0
    %v2981 = vadd.f32 0.0, %v2980
    %v2982 = vpop.f32.mrb[0].mxu0
    %2983 = vdwg.mxu0
    %vm2984 = vcmask 123904
    %2985 = vst.msk [vmem:[#allocation2] sm:$0x3] %vm2984, %v2981
    // Predicated region
    $region86: #{clip_featurizer_forward.1} parent=1 // pred_check
      _
    $region87: #{clip_featurizer_forward.1} parent=1 // pred_check_branch
      %2987 = sbr.rel (0) target = $region89
    $region88: #{clip_featurizer_forward.1} parent=1 // pred_region
      %s2989 = ssub.s32 32, 32
      %2990 = vsyncadd [#allocation3], %s2989
      %s2992 = sshll.u32 [#allocation2], 4
      %s2993 = int_to_ptr.vmem [resolvable:$true] %s2992
      %2995 = dma.vmem_to_hbm [thread:$0]  %s2993, 32, %s21, [#allocation3]
    $region89: #{clip_featurizer_forward.1} parent=1 // pred_fallthru
      _
    // Predicated region
    $region90: #{clip_featurizer_forward.1} parent=1 // pred_check
      _
    $region91: #{clip_featurizer_forward.1} parent=1 // pred_check_branch
      %2997 = sbr.rel (0) target = $region93
    $region92: #{clip_featurizer_forward.1} parent=1 // pred_region
      %2998 = dma.done [#allocation3], 32
    $region93: #{clip_featurizer_forward.1} parent=1 // pred_fallthru
      _
    %2999 = vsyncpa [#allocation3], 1

</llo_original>
